<compile_context>
chip_gen: v7x
topology: tpu7x:2x2x1
jax: 0.10.0
libtpu: 0.0.40
codegen_flags: <defaults>
</compile_context>

<pallas_src>
import functools

import jax
import jax.numpy as jnp
import numpy as np
from jax.experimental import pallas as pl
from jax.experimental.pallas import tpu as pltpu


def _pad_to(c, m=128):
    return ((c + m - 1) // m) * m


# ----------------------------------------------------------------------------
# Fused bottleneck kernel: one grid step == one batch image.
# Refs: x (1, H*W, Cinp) f32 | w1 (Cinp, C0p) bf16 | b1 (1, C0p) f32
#       w2 (9, C0p, C1p) bf16 (tap-major kh*3+kw) | b2 (1, C1p) f32
#       w3 (C1p, C2p) bf16 | b3 (1, C2p) f32 | out (1, H*W, C2p) f32
# Scratch: pad_ref (H+2, W+2, C0p) f32, acc_ref (H*W, C1p) f32
# ----------------------------------------------------------------------------
def _bottleneck_kernel(x_ref, w1_ref, b1_ref, w2_ref, b2_ref, w3_ref, b3_ref,
                       o_ref, pad_ref, acc_ref, *, H, W):
    HW = H * W
    C0p = w1_ref.shape[1]

    # ---- conv1 (1x1) + bn1 + relu  (bf16 MXU, f32 accumulate) ----
    xb = x_ref[0].astype(jnp.bfloat16)                       # (HW, Cinp)
    a1 = jnp.dot(xb, w1_ref[...], preferred_element_type=jnp.float32)
    a1 = jnp.maximum(a1 + b1_ref[...], 0.0)                  # (HW, C0p) f32

    # ---- scatter conv1 output into a zero-padded spatial buffer (pad=1) ----
    pad_ref[...] = jnp.zeros_like(pad_ref)
    pad_ref[1:H + 1, 1:W + 1, :] = a1.reshape(H, W, C0p)

    # ---- conv2 (3x3, stride=1, pad=1): 9 accumulated MXU matmuls ----
    for kh in range(3):
        for kw in range(3):
            tap = pad_ref[kh:kh + H, kw:kw + W, :]           # (H, W, C0p)
            tap = tap.reshape(HW, C0p).astype(jnp.bfloat16)
            contrib = jnp.dot(tap, w2_ref[kh * 3 + kw],
                              preferred_element_type=jnp.float32)
            if kh == 0 and kw == 0:
                acc_ref[...] = contrib
            else:
                acc_ref[...] += contrib
    a2 = jnp.maximum(acc_ref[...] + b2_ref[...], 0.0).astype(jnp.bfloat16)

    # ---- conv3 (1x1) + bn3 + residual + relu ----
    a3 = jnp.dot(a2, w3_ref[...], preferred_element_type=jnp.float32)
    a3 = a3 + b3_ref[...] + x_ref[0]                         # identity in f32
    o_ref[0] = jnp.maximum(a3, 0.0).astype(o_ref.dtype)


def _bottleneck_pallas(x_flat, packed, H, W):
    N, HW, cinp = x_flat.shape
    w1, b1 = packed["w1"], packed["b1"]
    w2, b2 = packed["w2"], packed["b2"]
    w3, b3 = packed["w3"], packed["b3"]
    c0p, c1p, c2p = w1.shape[1], w2.shape[2], w3.shape[1]

    kernel = functools.partial(_bottleneck_kernel, H=H, W=W)
    return pl.pallas_call(
        kernel,
        out_shape=jax.ShapeDtypeStruct((N, HW, c2p), x_flat.dtype),
        grid_spec=pltpu.PrefetchScalarGridSpec(
            num_scalar_prefetch=0,
            grid=(N,),
            in_specs=[
                pl.BlockSpec((1, HW, cinp), lambda n: (n, 0, 0)),
                pl.BlockSpec((cinp, c0p), lambda n: (0, 0)),
                pl.BlockSpec((1, c0p), lambda n: (0, 0)),
                pl.BlockSpec((9, c0p, c1p), lambda n: (0, 0, 0)),
                pl.BlockSpec((1, c1p), lambda n: (0, 0)),
                pl.BlockSpec((c1p, c2p), lambda n: (0, 0)),
                pl.BlockSpec((1, c2p), lambda n: (0, 0)),
            ],
            out_specs=pl.BlockSpec((1, HW, c2p), lambda n: (n, 0, 0)),
            scratch_shapes=[
                pltpu.VMEM((H + 2, W + 2, c0p), jnp.float32),   # padded conv1 out
                pltpu.VMEM((HW, c1p), jnp.float32),             # conv2 accumulator
            ],
        ),
        compiler_params=pltpu.CompilerParams(
            dimension_semantics=("parallel",),        # 2 TCs on v7x
            vmem_limit_bytes=48 * 1024 * 1024,        # headroom for v7x 64 MiB
        ),
    )(x_flat, w1, b1, w2, b2, w3, b3)


# ----------------------------------------------------------------------------
# One-time parameter packing (hoisted out of the forward pass):
# fold BN scale into the weights, pad channels to 128, cast weights to bf16.
# ----------------------------------------------------------------------------
def fold_bn(gamma, beta, running_mean, running_var, eps=1e-5):
    scale = gamma / jnp.sqrt(running_var + eps)
    bias = beta - running_mean * scale
    return scale, bias


def pack_params(params):
    w1, w2, w3 = params["w1"], params["w2"], params["w3"]
    c0, cin = w1.shape[0], w1.shape[1]
    c1, c2 = w2.shape[0], w3.shape[0]
    s1, b1 = fold_bn(*params["bn1"])
    s2, b2 = fold_bn(*params["bn2"])
    s3, b3 = fold_bn(*params["bn3"])
    cinp, c0p, c1p, c2p = (_pad_to(c) for c in (cin, c0, c1, c2))

    w1m = jnp.transpose(w1[:, :, 0, 0]) * s1[None, :]                 # (cin, c0)
    w2m = jnp.transpose(w2, (2, 3, 1, 0)).reshape(9, c0, c1) * s2[None, None, :]
    w3m = jnp.transpose(w3[:, :, 0, 0]) * s3[None, :]                 # (c1, c2)

    def pad2(a, r, c):
        return jnp.pad(a, ((0, r - a.shape[0]), (0, c - a.shape[1])))

    return {
        "w1": pad2(w1m, cinp, c0p).astype(jnp.bfloat16),
        "w2": jnp.pad(w2m, ((0, 0), (0, c0p - c0), (0, c1p - c1))).astype(jnp.bfloat16),
        "w3": pad2(w3m, c1p, c2p).astype(jnp.bfloat16),
        "b1": jnp.pad(b1, (0, c0p - c0)).reshape(1, c0p).astype(jnp.float32),
        "b2": jnp.pad(b2, (0, c1p - c1)).reshape(1, c1p).astype(jnp.float32),
        "b3": jnp.pad(b3, (0, c2p - c2)).reshape(1, c2p).astype(jnp.float32),
    }


# ----------------------------------------------------------------------------
# Forward (NCHW in / NCHW out, like the PyTorch module).
# ----------------------------------------------------------------------------
def bottleneck_forward(x_nchw, packed, stride=1, c_out=None):
    assert stride == 1, "downsample=None requires stride=1"
    N, Cin, H, W = x_nchw.shape
    assert c_out == Cin, "downsample=None requires infeat == outfeat[2]"
    assert W % 8 == 0, "in-kernel spatial reshapes need W % 8 == 0"
    cinp = packed["w1"].shape[0]

    # NCHW -> NHWC only at the block boundary; flatten spatial, pad channels.
    x = jnp.transpose(x_nchw, (0, 2, 3, 1)).reshape(N, H * W, Cin)
    x = jnp.pad(x, ((0, 0), (0, 0), (0, cinp - Cin)))

    out = _bottleneck_pallas(x, packed, H, W)                  # (N, H*W, c2p)

    out = out[:, :, :c_out].reshape(N, H, W, c_out)
    return jnp.transpose(out, (0, 3, 1, 2))


# ----------------------------------------------------------------------------
# Pure-JAX reference (matches the PyTorch module in eval mode).
# ----------------------------------------------------------------------------
def bottleneck_reference(x, params, stride=1, eps=1e-5):
    def conv(x, w, s, pad):
        return jax.lax.conv_general_dilated(
            x, w, window_strides=(s, s), padding=pad,
            dimension_numbers=("NCHW", "OIHW", "NCHW"))

    def bn(x, g, b, m, v):
        g, b, m, v = (t.reshape(1, -1, 1, 1) for t in (g, b, m, v))
        return (x - m) / jnp.sqrt(v + eps) * g + b

    identity = x
    out = jax.nn.relu(bn(conv(x, params["w1"], 1, "VALID"), *params["bn1"]))
    out = jax.nn.relu(bn(conv(out, params["w2"], stride, ((1, 1), (1, 1))),
                         *params["bn2"]))
    out = bn(conv(out, params["w3"], 1, "VALID"), *params["bn3"])
    return jax.nn.relu(out + identity)


# ----------------------------------------------------------------------------
# Deterministic parameter construction (shapes per Bottleneck.__init__).
# ----------------------------------------------------------------------------
def make_params(key, infeat, outfeat):
    c0, c1, c2 = outfeat
    ks = jax.random.split(key, 6)

    def bn(k, c):
        kg, kb, km, kv = jax.random.split(k, 4)
        gamma = 1.0 + 0.1 * jax.random.normal(kg, (c,), jnp.float32)
        beta = 0.1 * jax.random.normal(kb, (c,), jnp.float32)
        rmean = 0.05 * jax.random.normal(km, (c,), jnp.float32)
        rvar = 0.5 + jnp.abs(jax.random.normal(kv, (c,), jnp.float32))
        return (gamma, beta, rmean, rvar)

    return {
        "w1": 0.1 * jax.random.normal(ks[0], (c0, infeat, 1, 1), jnp.float32),
        "w2": 0.1 * jax.random.normal(ks[1], (c1, c0, 3, 3), jnp.float32),
        "w3": 0.1 * jax.random.normal(ks[2], (c2, c1, 1, 1), jnp.float32),
        "bn1": bn(ks[3], c0),
        "bn2": bn(ks[4], c1),
        "bn3": bn(ks[5], c2),
    }


if __name__ == "__main__":
    key = jax.random.PRNGKey(0)
    kx, kp = jax.random.split(key)

    # Small shapes: batch=2, infeat=16, outfeat=[4, 4, 16], spatial=16x16
    # (downsample=None requires infeat == outfeat[2] and stride=1).
    N, Cin, H, W = 2, 16, 16, 16
    outfeat = [4, 4, 16]

    x = jax.random.normal(kx, (N, Cin, H, W), jnp.float32)   # NCHW like PyTorch
    params = make_params(kp, Cin, outfeat)

    packed = pack_params(params)    # one-time weight packing (hoisted)
    fwd = jax.jit(functools.partial(bottleneck_forward, stride=1,
                                    c_out=outfeat[2]))

    y = fwd(x, packed)
    jax.block_until_ready(y)
    assert y.shape == (N, outfeat[2], H, W)

    # Correctness check against a pure-JAX reference (bf16 MXU -> loose tol).
    y_ref = bottleneck_reference(x, params, stride=1)
    np.testing.assert_allclose(np.asarray(y), np.asarray(y_ref),
                               rtol=5e-2, atol=5e-2)
    print("KERNEL_OK")
</pallas_src>

<mosaic_0001>
module attributes {stable_mosaic.version = 11 : i64} {
  func.func @_bottleneck_kernel(%arg0: i32, %arg1: memref<1x256x128xf32, #tpu.memory_space<vmem>>, %arg2: memref<128x128xbf16, #tpu.memory_space<vmem>>, %arg3: memref<1x128xf32, #tpu.memory_space<vmem>>, %arg4: memref<9x128x128xbf16, #tpu.memory_space<vmem>>, %arg5: memref<1x128xf32, #tpu.memory_space<vmem>>, %arg6: memref<128x128xbf16, #tpu.memory_space<vmem>>, %arg7: memref<1x128xf32, #tpu.memory_space<vmem>>, %arg8: memref<1x256x128xf32, #tpu.memory_space<vmem>>, %arg9: memref<18x18x128xf32, #tpu.memory_space<vmem>>, %arg10: memref<256x128xf32, #tpu.memory_space<vmem>>) attributes {dimension_semantics = [#tpu.dimension_semantics<parallel>], iteration_bounds = array<i64: 2>, scalar_prefetch = 0 : i64, scratch_operands = 2 : i64, tpu.core_type = #tpu.core_type<tc>, window_params = [{transform_indices = @transform_0, window_bounds = array<i64: 1, 256, 128>}, {pipeline_mode = #tpu.pipeline_mode<synchronous>, transform_indices = @transform_1, window_bounds = array<i64: 128, 128>}, {pipeline_mode = #tpu.pipeline_mode<synchronous>, transform_indices = @transform_2, window_bounds = array<i64: 1, 128>}, {pipeline_mode = #tpu.pipeline_mode<synchronous>, transform_indices = @transform_3, window_bounds = array<i64: 9, 128, 128>}, {pipeline_mode = #tpu.pipeline_mode<synchronous>, transform_indices = @transform_4, window_bounds = array<i64: 1, 128>}, {pipeline_mode = #tpu.pipeline_mode<synchronous>, transform_indices = @transform_5, window_bounds = array<i64: 128, 128>}, {pipeline_mode = #tpu.pipeline_mode<synchronous>, transform_indices = @transform_6, window_bounds = array<i64: 1, 128>}, {transform_indices = @transform_7, window_bounds = array<i64: 1, 256, 128>}]} {
    %c0 = arith.constant 0 : index
    %c0_0 = arith.constant 0 : index
    %c0_1 = arith.constant 0 : index
    %0 = vector.load %arg1[%c0, %c0_0, %c0_1] : memref<1x256x128xf32, #tpu.memory_space<vmem>>, vector<1x256x128xf32>
    %1 = vector.shape_cast %0 : vector<1x256x128xf32> to vector<256x128xf32>
    %2 = arith.truncf %1 : vector<256x128xf32> to vector<256x128xbf16>
    %c0_2 = arith.constant 0 : index
    %c0_3 = arith.constant 0 : index
    %3 = vector.load %arg2[%c0_2, %c0_3] : memref<128x128xbf16, #tpu.memory_space<vmem>>, vector<128x128xbf16>
    %cst = arith.constant dense<0.000000e+00> : vector<256x128xf32>
    %4 = tpu.matmul %2, %3, %cst {dimension_numbers = #tpu.dot_dimension_numbers<[1], [0], [0], [1], [0, 0, 1, 1], [], []>} : vector<256x128xbf16>, vector<128x128xbf16>, vector<256x128xf32> -> vector<256x128xf32>
    %c0_4 = arith.constant 0 : index
    %c0_5 = arith.constant 0 : index
    %5 = vector.load %arg3[%c0_4, %c0_5] : memref<1x128xf32, #tpu.memory_space<vmem>>, vector<1x128xf32>
    %6 = vector.broadcast %5 : vector<1x128xf32> to vector<256x128xf32>
    %7 = arith.addf %4, %6 : vector<256x128xf32>
    %cst_6 = arith.constant 0.000000e+00 : f32
    %8 = vector.broadcast %cst_6 : f32 to vector<256x128xf32>
    %9 = arith.maximumf %7, %8 : vector<256x128xf32>
    %cst_7 = arith.constant 0.000000e+00 : f32
    %10 = vector.broadcast %cst_7 : f32 to vector<18x18x128xf32>
    %c0_8 = arith.constant 0 : index
    %c0_9 = arith.constant 0 : index
    %c0_10 = arith.constant 0 : index
    %11 = vector.load %arg9[%c0_8, %c0_9, %c0_10] : memref<18x18x128xf32, #tpu.memory_space<vmem>>, vector<18x18x128xf32>
    tpu.vector_store %arg9[%c0_8, %c0_9, %c0_10], %10 {strides = array<i32>} : memref<18x18x128xf32, #tpu.memory_space<vmem>>, vector<18x18x128xf32>,
    %12 = vector.shape_cast %9 : vector<256x128xf32> to vector<16x16x128xf32>
    %c1 = arith.constant 1 : index
    %c1_11 = arith.constant 1 : index
    %c0_12 = arith.constant 0 : index
    %13 = vector.load %arg9[%c1, %c1_11, %c0_12] : memref<18x18x128xf32, #tpu.memory_space<vmem>>, vector<16x16x128xf32>
    tpu.vector_store %arg9[%c1, %c1_11, %c0_12], %12 {strides = array<i32>} : memref<18x18x128xf32, #tpu.memory_space<vmem>>, vector<16x16x128xf32>,
    %c0_13 = arith.constant 0 : index
    %c0_14 = arith.constant 0 : index
    %c0_15 = arith.constant 0 : index
    %14 = vector.load %arg9[%c0_13, %c0_14, %c0_15] : memref<18x18x128xf32, #tpu.memory_space<vmem>>, vector<16x16x128xf32>
    %15 = vector.shape_cast %14 : vector<16x16x128xf32> to vector<256x128xf32>
    %16 = arith.truncf %15 : vector<256x128xf32> to vector<256x128xbf16>
    %c0_16 = arith.constant 0 : index
    %c0_17 = arith.constant 0 : index
    %c0_18 = arith.constant 0 : index
    %17 = vector.load %arg4[%c0_16, %c0_17, %c0_18] : memref<9x128x128xbf16, #tpu.memory_space<vmem>>, vector<1x128x128xbf16>
    %18 = vector.shape_cast %17 : vector<1x128x128xbf16> to vector<128x128xbf16>
    %cst_19 = arith.constant dense<0.000000e+00> : vector<256x128xf32>
    %19 = tpu.matmul %16, %18, %cst_19 {dimension_numbers = #tpu.dot_dimension_numbers<[1], [0], [0], [1], [0, 0, 1, 1], [], []>} : vector<256x128xbf16>, vector<128x128xbf16>, vector<256x128xf32> -> vector<256x128xf32>
    %c0_20 = arith.constant 0 : index
    %c0_21 = arith.constant 0 : index
    %20 = vector.load %arg10[%c0_20, %c0_21] : memref<256x128xf32, #tpu.memory_space<vmem>>, vector<256x128xf32>
    tpu.vector_store %arg10[%c0_20, %c0_21], %19 {strides = array<i32>} : memref<256x128xf32, #tpu.memory_space<vmem>>, vector<256x128xf32>,
    %c0_22 = arith.constant 0 : index
    %c1_23 = arith.constant 1 : index
    %c0_24 = arith.constant 0 : index
    %21 = vector.load %arg9[%c0_22, %c1_23, %c0_24] : memref<18x18x128xf32, #tpu.memory_space<vmem>>, vector<16x16x128xf32>
    %22 = vector.shape_cast %21 : vector<16x16x128xf32> to vector<256x128xf32>
    %23 = arith.truncf %22 : vector<256x128xf32> to vector<256x128xbf16>
    %c1_25 = arith.constant 1 : index
    %c0_26 = arith.constant 0 : index
    %c0_27 = arith.constant 0 : index
    %24 = vector.load %arg4[%c1_25, %c0_26, %c0_27] : memref<9x128x128xbf16, #tpu.memory_space<vmem>>, vector<1x128x128xbf16>
    %25 = vector.shape_cast %24 : vector<1x128x128xbf16> to vector<128x128xbf16>
    %cst_28 = arith.constant dense<0.000000e+00> : vector<256x128xf32>
    %26 = tpu.matmul %23, %25, %cst_28 {dimension_numbers = #tpu.dot_dimension_numbers<[1], [0], [0], [1], [0, 0, 1, 1], [], []>} : vector<256x128xbf16>, vector<128x128xbf16>, vector<256x128xf32> -> vector<256x128xf32>
    %c0_29 = arith.constant 0 : index
    %c0_30 = arith.constant 0 : index
    %27 = vector.load %arg10[%c0_29, %c0_30] : memref<256x128xf32, #tpu.memory_space<vmem>>, vector<256x128xf32>
    %28 = arith.addf %27, %26 : vector<256x128xf32>
    %c0_31 = arith.constant 0 : index
    %c0_32 = arith.constant 0 : index
    %29 = vector.load %arg10[%c0_31, %c0_32] : memref<256x128xf32, #tpu.memory_space<vmem>>, vector<256x128xf32>
    tpu.vector_store %arg10[%c0_31, %c0_32], %28 {strides = array<i32>} : memref<256x128xf32, #tpu.memory_space<vmem>>, vector<256x128xf32>,
    %c0_33 = arith.constant 0 : index
    %c2 = arith.constant 2 : index
    %c0_34 = arith.constant 0 : index
    %30 = vector.load %arg9[%c0_33, %c2, %c0_34] : memref<18x18x128xf32, #tpu.memory_space<vmem>>, vector<16x16x128xf32>
    %31 = vector.shape_cast %30 : vector<16x16x128xf32> to vector<256x128xf32>
    %32 = arith.truncf %31 : vector<256x128xf32> to vector<256x128xbf16>
    %c2_35 = arith.constant 2 : index
    %c0_36 = arith.constant 0 : index
    %c0_37 = arith.constant 0 : index
    %33 = vector.load %arg4[%c2_35, %c0_36, %c0_37] : memref<9x128x128xbf16, #tpu.memory_space<vmem>>, vector<1x128x128xbf16>
    %34 = vector.shape_cast %33 : vector<1x128x128xbf16> to vector<128x128xbf16>
    %cst_38 = arith.constant dense<0.000000e+00> : vector<256x128xf32>
    %35 = tpu.matmul %32, %34, %cst_38 {dimension_numbers = #tpu.dot_dimension_numbers<[1], [0], [0], [1], [0, 0, 1, 1], [], []>} : vector<256x128xbf16>, vector<128x128xbf16>, vector<256x128xf32> -> vector<256x128xf32>
    %c0_39 = arith.constant 0 : index
    %c0_40 = arith.constant 0 : index
    %36 = vector.load %arg10[%c0_39, %c0_40] : memref<256x128xf32, #tpu.memory_space<vmem>>, vector<256x128xf32>
    %37 = arith.addf %36, %35 : vector<256x128xf32>
    %c0_41 = arith.constant 0 : index
    %c0_42 = arith.constant 0 : index
    %38 = vector.load %arg10[%c0_41, %c0_42] : memref<256x128xf32, #tpu.memory_space<vmem>>, vector<256x128xf32>
    tpu.vector_store %arg10[%c0_41, %c0_42], %37 {strides = array<i32>} : memref<256x128xf32, #tpu.memory_space<vmem>>, vector<256x128xf32>,
    %c1_43 = arith.constant 1 : index
    %c0_44 = arith.constant 0 : index
    %c0_45 = arith.constant 0 : index
    %39 = vector.load %arg9[%c1_43, %c0_44, %c0_45] : memref<18x18x128xf32, #tpu.memory_space<vmem>>, vector<16x16x128xf32>
    %40 = vector.shape_cast %39 : vector<16x16x128xf32> to vector<256x128xf32>
    %41 = arith.truncf %40 : vector<256x128xf32> to vector<256x128xbf16>
    %c3 = arith.constant 3 : index
    %c0_46 = arith.constant 0 : index
    %c0_47 = arith.constant 0 : index
    %42 = vector.load %arg4[%c3, %c0_46, %c0_47] : memref<9x128x128xbf16, #tpu.memory_space<vmem>>, vector<1x128x128xbf16>
    %43 = vector.shape_cast %42 : vector<1x128x128xbf16> to vector<128x128xbf16>
    %cst_48 = arith.constant dense<0.000000e+00> : vector<256x128xf32>
    %44 = tpu.matmul %41, %43, %cst_48 {dimension_numbers = #tpu.dot_dimension_numbers<[1], [0], [0], [1], [0, 0, 1, 1], [], []>} : vector<256x128xbf16>, vector<128x128xbf16>, vector<256x128xf32> -> vector<256x128xf32>
    %c0_49 = arith.constant 0 : index
    %c0_50 = arith.constant 0 : index
    %45 = vector.load %arg10[%c0_49, %c0_50] : memref<256x128xf32, #tpu.memory_space<vmem>>, vector<256x128xf32>
    %46 = arith.addf %45, %44 : vector<256x128xf32>
    %c0_51 = arith.constant 0 : index
    %c0_52 = arith.constant 0 : index
    %47 = vector.load %arg10[%c0_51, %c0_52] : memref<256x128xf32, #tpu.memory_space<vmem>>, vector<256x128xf32>
    tpu.vector_store %arg10[%c0_51, %c0_52], %46 {strides = array<i32>} : memref<256x128xf32, #tpu.memory_space<vmem>>, vector<256x128xf32>,
    %c1_53 = arith.constant 1 : index
    %c1_54 = arith.constant 1 : index
    %c0_55 = arith.constant 0 : index
    %48 = vector.load %arg9[%c1_53, %c1_54, %c0_55] : memref<18x18x128xf32, #tpu.memory_space<vmem>>, vector<16x16x128xf32>
    %49 = vector.shape_cast %48 : vector<16x16x128xf32> to vector<256x128xf32>
    %50 = arith.truncf %49 : vector<256x128xf32> to vector<256x128xbf16>
    %c4 = arith.constant 4 : index
    %c0_56 = arith.constant 0 : index
    %c0_57 = arith.constant 0 : index
    %51 = vector.load %arg4[%c4, %c0_56, %c0_57] : memref<9x128x128xbf16, #tpu.memory_space<vmem>>, vector<1x128x128xbf16>
    %52 = vector.shape_cast %51 : vector<1x128x128xbf16> to vector<128x128xbf16>
    %cst_58 = arith.constant dense<0.000000e+00> : vector<256x128xf32>
    %53 = tpu.matmul %50, %52, %cst_58 {dimension_numbers = #tpu.dot_dimension_numbers<[1], [0], [0], [1], [0, 0, 1, 1], [], []>} : vector<256x128xbf16>, vector<128x128xbf16>, vector<256x128xf32> -> vector<256x128xf32>
    %c0_59 = arith.constant 0 : index
    %c0_60 = arith.constant 0 : index
    %54 = vector.load %arg10[%c0_59, %c0_60] : memref<256x128xf32, #tpu.memory_space<vmem>>, vector<256x128xf32>
    %55 = arith.addf %54, %53 : vector<256x128xf32>
    %c0_61 = arith.constant 0 : index
    %c0_62 = arith.constant 0 : index
    %56 = vector.load %arg10[%c0_61, %c0_62] : memref<256x128xf32, #tpu.memory_space<vmem>>, vector<256x128xf32>
    tpu.vector_store %arg10[%c0_61, %c0_62], %55 {strides = array<i32>} : memref<256x128xf32, #tpu.memory_space<vmem>>, vector<256x128xf32>,
    %c1_63 = arith.constant 1 : index
    %c2_64 = arith.constant 2 : index
    %c0_65 = arith.constant 0 : index
    %57 = vector.load %arg9[%c1_63, %c2_64, %c0_65] : memref<18x18x128xf32, #tpu.memory_space<vmem>>, vector<16x16x128xf32>
    %58 = vector.shape_cast %57 : vector<16x16x128xf32> to vector<256x128xf32>
    %59 = arith.truncf %58 : vector<256x128xf32> to vector<256x128xbf16>
    %c5 = arith.constant 5 : index
    %c0_66 = arith.constant 0 : index
    %c0_67 = arith.constant 0 : index
    %60 = vector.load %arg4[%c5, %c0_66, %c0_67] : memref<9x128x128xbf16, #tpu.memory_space<vmem>>, vector<1x128x128xbf16>
    %61 = vector.shape_cast %60 : vector<1x128x128xbf16> to vector<128x128xbf16>
    %cst_68 = arith.constant dense<0.000000e+00> : vector<256x128xf32>
    %62 = tpu.matmul %59, %61, %cst_68 {dimension_numbers = #tpu.dot_dimension_numbers<[1], [0], [0], [1], [0, 0, 1, 1], [], []>} : vector<256x128xbf16>, vector<128x128xbf16>, vector<256x128xf32> -> vector<256x128xf32>
    %c0_69 = arith.constant 0 : index
    %c0_70 = arith.constant 0 : index
    %63 = vector.load %arg10[%c0_69, %c0_70] : memref<256x128xf32, #tpu.memory_space<vmem>>, vector<256x128xf32>
    %64 = arith.addf %63, %62 : vector<256x128xf32>
    %c0_71 = arith.constant 0 : index
    %c0_72 = arith.constant 0 : index
    %65 = vector.load %arg10[%c0_71, %c0_72] : memref<256x128xf32, #tpu.memory_space<vmem>>, vector<256x128xf32>
    tpu.vector_store %arg10[%c0_71, %c0_72], %64 {strides = array<i32>} : memref<256x128xf32, #tpu.memory_space<vmem>>, vector<256x128xf32>,
    %c2_73 = arith.constant 2 : index
    %c0_74 = arith.constant 0 : index
    %c0_75 = arith.constant 0 : index
    %66 = vector.load %arg9[%c2_73, %c0_74, %c0_75] : memref<18x18x128xf32, #tpu.memory_space<vmem>>, vector<16x16x128xf32>
    %67 = vector.shape_cast %66 : vector<16x16x128xf32> to vector<256x128xf32>
    %68 = arith.truncf %67 : vector<256x128xf32> to vector<256x128xbf16>
    %c6 = arith.constant 6 : index
    %c0_76 = arith.constant 0 : index
    %c0_77 = arith.constant 0 : index
    %69 = vector.load %arg4[%c6, %c0_76, %c0_77] : memref<9x128x128xbf16, #tpu.memory_space<vmem>>, vector<1x128x128xbf16>
    %70 = vector.shape_cast %69 : vector<1x128x128xbf16> to vector<128x128xbf16>
    %cst_78 = arith.constant dense<0.000000e+00> : vector<256x128xf32>
    %71 = tpu.matmul %68, %70, %cst_78 {dimension_numbers = #tpu.dot_dimension_numbers<[1], [0], [0], [1], [0, 0, 1, 1], [], []>} : vector<256x128xbf16>, vector<128x128xbf16>, vector<256x128xf32> -> vector<256x128xf32>
    %c0_79 = arith.constant 0 : index
    %c0_80 = arith.constant 0 : index
    %72 = vector.load %arg10[%c0_79, %c0_80] : memref<256x128xf32, #tpu.memory_space<vmem>>, vector<256x128xf32>
    %73 = arith.addf %72, %71 : vector<256x128xf32>
    %c0_81 = arith.constant 0 : index
    %c0_82 = arith.constant 0 : index
    %74 = vector.load %arg10[%c0_81, %c0_82] : memref<256x128xf32, #tpu.memory_space<vmem>>, vector<256x128xf32>
    tpu.vector_store %arg10[%c0_81, %c0_82], %73 {strides = array<i32>} : memref<256x128xf32, #tpu.memory_space<vmem>>, vector<256x128xf32>,
    %c2_83 = arith.constant 2 : index
    %c1_84 = arith.constant 1 : index
    %c0_85 = arith.constant 0 : index
    %75 = vector.load %arg9[%c2_83, %c1_84, %c0_85] : memref<18x18x128xf32, #tpu.memory_space<vmem>>, vector<16x16x128xf32>
    %76 = vector.shape_cast %75 : vector<16x16x128xf32> to vector<256x128xf32>
    %77 = arith.truncf %76 : vector<256x128xf32> to vector<256x128xbf16>
    %c7 = arith.constant 7 : index
    %c0_86 = arith.constant 0 : index
    %c0_87 = arith.constant 0 : index
    %78 = vector.load %arg4[%c7, %c0_86, %c0_87] : memref<9x128x128xbf16, #tpu.memory_space<vmem>>, vector<1x128x128xbf16>
    %79 = vector.shape_cast %78 : vector<1x128x128xbf16> to vector<128x128xbf16>
    %cst_88 = arith.constant dense<0.000000e+00> : vector<256x128xf32>
    %80 = tpu.matmul %77, %79, %cst_88 {dimension_numbers = #tpu.dot_dimension_numbers<[1], [0], [0], [1], [0, 0, 1, 1], [], []>} : vector<256x128xbf16>, vector<128x128xbf16>, vector<256x128xf32> -> vector<256x128xf32>
    %c0_89 = arith.constant 0 : index
    %c0_90 = arith.constant 0 : index
    %81 = vector.load %arg10[%c0_89, %c0_90] : memref<256x128xf32, #tpu.memory_space<vmem>>, vector<256x128xf32>
    %82 = arith.addf %81, %80 : vector<256x128xf32>
    %c0_91 = arith.constant 0 : index
    %c0_92 = arith.constant 0 : index
    %83 = vector.load %arg10[%c0_91, %c0_92] : memref<256x128xf32, #tpu.memory_space<vmem>>, vector<256x128xf32>
    tpu.vector_store %arg10[%c0_91, %c0_92], %82 {strides = array<i32>} : memref<256x128xf32, #tpu.memory_space<vmem>>, vector<256x128xf32>,
    %c2_93 = arith.constant 2 : index
    %c2_94 = arith.constant 2 : index
    %c0_95 = arith.constant 0 : index
    %84 = vector.load %arg9[%c2_93, %c2_94, %c0_95] : memref<18x18x128xf32, #tpu.memory_space<vmem>>, vector<16x16x128xf32>
    %85 = vector.shape_cast %84 : vector<16x16x128xf32> to vector<256x128xf32>
    %86 = arith.truncf %85 : vector<256x128xf32> to vector<256x128xbf16>
    %c8 = arith.constant 8 : index
    %c0_96 = arith.constant 0 : index
    %c0_97 = arith.constant 0 : index
    %87 = vector.load %arg4[%c8, %c0_96, %c0_97] : memref<9x128x128xbf16, #tpu.memory_space<vmem>>, vector<1x128x128xbf16>
    %88 = vector.shape_cast %87 : vector<1x128x128xbf16> to vector<128x128xbf16>
    %cst_98 = arith.constant dense<0.000000e+00> : vector<256x128xf32>
    %89 = tpu.matmul %86, %88, %cst_98 {dimension_numbers = #tpu.dot_dimension_numbers<[1], [0], [0], [1], [0, 0, 1, 1], [], []>} : vector<256x128xbf16>, vector<128x128xbf16>, vector<256x128xf32> -> vector<256x128xf32>
    %c0_99 = arith.constant 0 : index
    %c0_100 = arith.constant 0 : index
    %90 = vector.load %arg10[%c0_99, %c0_100] : memref<256x128xf32, #tpu.memory_space<vmem>>, vector<256x128xf32>
    %91 = arith.addf %90, %89 : vector<256x128xf32>
    %c0_101 = arith.constant 0 : index
    %c0_102 = arith.constant 0 : index
    %92 = vector.load %arg10[%c0_101, %c0_102] : memref<256x128xf32, #tpu.memory_space<vmem>>, vector<256x128xf32>
    tpu.vector_store %arg10[%c0_101, %c0_102], %91 {strides = array<i32>} : memref<256x128xf32, #tpu.memory_space<vmem>>, vector<256x128xf32>,
    %c0_103 = arith.constant 0 : index
    %c0_104 = arith.constant 0 : index
    %93 = vector.load %arg10[%c0_103, %c0_104] : memref<256x128xf32, #tpu.memory_space<vmem>>, vector<256x128xf32>
    %c0_105 = arith.constant 0 : index
    %c0_106 = arith.constant 0 : index
    %94 = vector.load %arg5[%c0_105, %c0_106] : memref<1x128xf32, #tpu.memory_space<vmem>>, vector<1x128xf32>
    %95 = vector.broadcast %94 : vector<1x128xf32> to vector<256x128xf32>
    %96 = arith.addf %93, %95 : vector<256x128xf32>
    %cst_107 = arith.constant 0.000000e+00 : f32
    %97 = vector.broadcast %cst_107 : f32 to vector<256x128xf32>
    %98 = arith.maximumf %96, %97 : vector<256x128xf32>
    %99 = arith.truncf %98 : vector<256x128xf32> to vector<256x128xbf16>
    %c0_108 = arith.constant 0 : index
    %c0_109 = arith.constant 0 : index
    %100 = vector.load %arg6[%c0_108, %c0_109] : memref<128x128xbf16, #tpu.memory_space<vmem>>, vector<128x128xbf16>
    %cst_110 = arith.constant dense<0.000000e+00> : vector<256x128xf32>
    %101 = tpu.matmul %99, %100, %cst_110 {dimension_numbers = #tpu.dot_dimension_numbers<[1], [0], [0], [1], [0, 0, 1, 1], [], []>} : vector<256x128xbf16>, vector<128x128xbf16>, vector<256x128xf32> -> vector<256x128xf32>
    %c0_111 = arith.constant 0 : index
    %c0_112 = arith.constant 0 : index
    %102 = vector.load %arg7[%c0_111, %c0_112] : memref<1x128xf32, #tpu.memory_space<vmem>>, vector<1x128xf32>
    %103 = vector.broadcast %102 : vector<1x128xf32> to vector<256x128xf32>
    %104 = arith.addf %101, %103 : vector<256x128xf32>
    %c0_113 = arith.constant 0 : index
    %c0_114 = arith.constant 0 : index
    %c0_115 = arith.constant 0 : index
    %105 = vector.load %arg1[%c0_113, %c0_114, %c0_115] : memref<1x256x128xf32, #tpu.memory_space<vmem>>, vector<1x256x128xf32>
    %106 = vector.shape_cast %105 : vector<1x256x128xf32> to vector<256x128xf32>
    %107 = arith.addf %104, %106 : vector<256x128xf32>
    %cst_116 = arith.constant 0.000000e+00 : f32
    %108 = vector.broadcast %cst_116 : f32 to vector<256x128xf32>
    %109 = arith.maximumf %107, %108 : vector<256x128xf32>
    %c0_117 = arith.constant 0 : index
    %c0_118 = arith.constant 0 : index
    %c0_119 = arith.constant 0 : index
    %110 = vector.load %arg8[%c0_117, %c0_118, %c0_119] : memref<1x256x128xf32, #tpu.memory_space<vmem>>, vector<1x256x128xf32>
    %111 = vector.shape_cast %110 : vector<1x256x128xf32> to vector<256x128xf32>
    %112 = vector.shape_cast %109 : vector<256x128xf32> to vector<1x256x128xf32>
    tpu.vector_store %arg8[%c0_117, %c0_118, %c0_119], %112 {strides = array<i32>} : memref<1x256x128xf32, #tpu.memory_space<vmem>>, vector<1x256x128xf32>,
    return
  }
  func.func @transform_0(%arg0: i32) -> (i32, i32, i32) {
    %c0_i32 = arith.constant 0 : i32
    %c0_i32_0 = arith.constant 0 : i32
    %c0_i32_1 = arith.constant 0 : i32
    return %arg0, %c0_i32, %c0_i32_0 : i32, i32, i32
  }
  func.func @transform_1(%arg0: i32) -> (i32, i32) {
    %c0_i32 = arith.constant 0 : i32
    %c0_i32_0 = arith.constant 0 : i32
    %c0_i32_1 = arith.constant 0 : i32
    return %c0_i32, %c0_i32_0 : i32, i32
  }
  func.func @transform_2(%arg0: i32) -> (i32, i32) {
    %c0_i32 = arith.constant 0 : i32
    %c0_i32_0 = arith.constant 0 : i32
    %c0_i32_1 = arith.constant 0 : i32
    return %c0_i32, %c0_i32_0 : i32, i32
  }
  func.func @transform_3(%arg0: i32) -> (i32, i32, i32) {
    %c0_i32 = arith.constant 0 : i32
    %c0_i32_0 = arith.constant 0 : i32
    %c0_i32_1 = arith.constant 0 : i32
    %c0_i32_2 = arith.constant 0 : i32
    return %c0_i32, %c0_i32_0, %c0_i32_1 : i32, i32, i32
  }
  func.func @transform_4(%arg0: i32) -> (i32, i32) {
    %c0_i32 = arith.constant 0 : i32
    %c0_i32_0 = arith.constant 0 : i32
    %c0_i32_1 = arith.constant 0 : i32
    return %c0_i32, %c0_i32_0 : i32, i32
  }
  func.func @transform_5(%arg0: i32) -> (i32, i32) {
    %c0_i32 = arith.constant 0 : i32
    %c0_i32_0 = arith.constant 0 : i32
    %c0_i32_1 = arith.constant 0 : i32
    return %c0_i32, %c0_i32_0 : i32, i32
  }
  func.func @transform_6(%arg0: i32) -> (i32, i32) {
    %c0_i32 = arith.constant 0 : i32
    %c0_i32_0 = arith.constant 0 : i32
    %c0_i32_1 = arith.constant 0 : i32
    return %c0_i32, %c0_i32_0 : i32, i32
  }
  func.func @transform_7(%arg0: i32) -> (i32, i32, i32) {
    %c0_i32 = arith.constant 0 : i32
    %c0_i32_0 = arith.constant 0 : i32
    %c0_i32_1 = arith.constant 0 : i32
    return %arg0, %c0_i32, %c0_i32_0 : i32, i32, i32
  }
}

</mosaic_0001>

<llo_original>
// kernel: bottleneck_forward.1
$region0: #{bottleneck_forward.1}
  #allocation0 [shape = 'u32[]', space=smem, size = 0x4, offset = 0x4, fixed_abs, tag = 'smem constant byte address 0x4 - core index']
  #allocation1 [shape = 'u32[144,128]{1,0:T(1,128)}', space=vmem, size = 0x12000, scoped, tag = 'internal scratch']
  #allocation2 [shape = 'f32[18,18,128]{2,1,0:T(8,128)}', space=vmem, size = 0x36000, scoped, tag = 'scratch operand']
  #allocation3 [shape = 'f32[256,128]{1,0:T(8,128)}', space=vmem, size = 0x20000, scoped, tag = 'scratch operand']
  %s0 = inlined_call_operand.vmem [shape: f32[2,256,128], index: 0, kind: input, shape index: {}]
  %s1 = inlined_call_operand.vmem [shape: bf16[128,128], index: 1, kind: input, shape index: {}]
  %s2 = inlined_call_operand.vmem [shape: f32[1,128], index: 2, kind: input, shape index: {}]
  %s3 = inlined_call_operand.vmem [shape: bf16[9,128,128], index: 3, kind: input, shape index: {}]
  %s4 = inlined_call_operand.vmem [shape: f32[1,128], index: 4, kind: input, shape index: {}]
  %s5 = inlined_call_operand.vmem [shape: bf16[128,128], index: 5, kind: input, shape index: {}]
  %s6 = inlined_call_operand.vmem [shape: f32[1,128], index: 6, kind: input, shape index: {}]
  %s7 = inlined_call_operand.vmem [shape: f32[2,256,128], index: 7, kind: output, shape index: {}]
  %s8 = sld [smem:[#allocation0]]
  $region61: #{bottleneck_forward.1} parent=0
    _
  %s10 = ssub.s32 1, %s8
  %s11 = scalar_select 0, %s10, %s8
  loop: start=0, step=1, limit=4
  $region2: #{bottleneck_forward.1} parent=0 // loop_pre_header
    _
  $region3: #{bottleneck_forward.1} parent=0 // loop_header
    %s13 = sphi 0, %s17
    %p14 = scmp.ge.s32.totalorder %s13, 4
    %s23 = sphi 0, %s25
    %s26 = sphi 0, %s23
    %s27 = sphi 0, %s26
    %s43 = sphi 0, %s27
    %s47 = sphi 0, %s47
    %s49 = sphi 0, %s47
    %s50 = sphi 0, %s49
    %s64 = sphi 0, %s50
    %s68 = sphi 0, %s68
    %s70 = sphi 0, %s68
    %s71 = sphi 0, %s70
    %s85 = sphi 0, %s71
    %s89 = sphi 0, %s89
    %s91 = sphi 0, %s89
    %s92 = sphi 0, %s91
    %s106 = sphi 0, %s92
    %s110 = sphi 0, %s110
    %s112 = sphi 0, %s110
    %s113 = sphi 0, %s112
    %s127 = sphi 0, %s113
    %s131 = sphi 0, %s131
    %s133 = sphi 0, %s131
    %s134 = sphi 0, %s133
    %s148 = sphi 0, %s134
    %s152 = sphi 0, %s152
    %s154 = sphi 0, %s152
    %s155 = sphi 0, %s154
    %s169 = sphi 0, %s155
    %s175 = sphi 0, %s177
    %s178 = sphi 0, %s175
    %s179 = sphi 0, %s178
    %s195 = sphi 0, %s179
  $region4: #{bottleneck_forward.1} parent=0 // loop_header_branch
    %16 = sbr.rel (%p14) target = $region8
  $region5: #{bottleneck_forward.1} parent=0 // loop_body
    %s18 = ssub.s32 %s13, 1
    %s19 = ssub.s32 %s13, 2
    %s20 = sadd.s32 %s13, 1
    %s21 = ssub.s32 %s13, %s20
    %p22 = scmp.eq.s32.totalorder %s21, 0
    %s24 = sadd.s32 %s23, 1
    %s25 = scalar_select %p22, %s23, %s24
    %p28 = pneg %p22
    %p29 = scmp.eq.s32.totalorder %s13, 1
    %p30 = por %p28, %p29
    %p31 = scmp.ne.s32.totalorder %s23, %s26
    %p32 = scmp.eq.s32.totalorder %s13, 0
    %p33 = por %p31, %p32
    %p34 = scmp.ne.s32.totalorder %s23, %s26
    %p35 = scmp.eq.s32.totalorder %s18, 1
    %p36 = por %p34, %p35
    %p37 = scmp.ne.s32.totalorder %s26, %s27
    %p38 = scmp.eq.s32.totalorder %s18, 0
    %p39 = por %p37, %p38
    %p40 = scmp.ne.s32.totalorder %s26, %s27
    %p41 = scmp.eq.s32.totalorder %s19, 1
    %p42 = por %p40, %p41
    %p44 = scmp.ne.s32.totalorder %s27, %s43
    %p45 = scmp.eq.s32.totalorder %s19, 0
    %p46 = por %p44, %p45
    %s48 = sadd.s32 %s47, 1
    %p51 = scmp.eq.s32.totalorder %s13, 1
    %p52 = scmp.ne.s32.totalorder %s47, %s49
    %p53 = scmp.eq.s32.totalorder %s13, 0
    %p54 = por %p52, %p53
    %p55 = scmp.ne.s32.totalorder %s47, %s49
    %p56 = scmp.eq.s32.totalorder %s18, 1
    %p57 = por %p55, %p56
    %p58 = scmp.ne.s32.totalorder %s49, %s50
    %p59 = scmp.eq.s32.totalorder %s18, 0
    %p60 = por %p58, %p59
    %p61 = scmp.ne.s32.totalorder %s49, %s50
    %p62 = scmp.eq.s32.totalorder %s19, 1
    %p63 = por %p61, %p62
    %p65 = scmp.ne.s32.totalorder %s50, %s64
    %p66 = scmp.eq.s32.totalorder %s19, 0
    %p67 = por %p65, %p66
    %s69 = sadd.s32 %s68, 1
    %p72 = scmp.eq.s32.totalorder %s13, 1
    %p73 = scmp.ne.s32.totalorder %s68, %s70
    %p74 = scmp.eq.s32.totalorder %s13, 0
    %p75 = por %p73, %p74
    %p76 = scmp.ne.s32.totalorder %s68, %s70
    %p77 = scmp.eq.s32.totalorder %s18, 1
    %p78 = por %p76, %p77
    %p79 = scmp.ne.s32.totalorder %s70, %s71
    %p80 = scmp.eq.s32.totalorder %s18, 0
    %p81 = por %p79, %p80
    %p82 = scmp.ne.s32.totalorder %s70, %s71
    %p83 = scmp.eq.s32.totalorder %s19, 1
    %p84 = por %p82, %p83
    %p86 = scmp.ne.s32.totalorder %s71, %s85
    %p87 = scmp.eq.s32.totalorder %s19, 0
    %p88 = por %p86, %p87
    %s90 = sadd.s32 %s89, 1
    %p93 = scmp.eq.s32.totalorder %s13, 1
    %p94 = scmp.ne.s32.totalorder %s89, %s91
    %p95 = scmp.eq.s32.totalorder %s13, 0
    %p96 = por %p94, %p95
    %p97 = scmp.ne.s32.totalorder %s89, %s91
    %p98 = scmp.eq.s32.totalorder %s18, 1
    %p99 = por %p97, %p98
    %p100 = scmp.ne.s32.totalorder %s91, %s92
    %p101 = scmp.eq.s32.totalorder %s18, 0
    %p102 = por %p100, %p101
    %p103 = scmp.ne.s32.totalorder %s91, %s92
    %p104 = scmp.eq.s32.totalorder %s19, 1
    %p105 = por %p103, %p104
    %p107 = scmp.ne.s32.totalorder %s92, %s106
    %p108 = scmp.eq.s32.totalorder %s19, 0
    %p109 = por %p107, %p108
    %s111 = sadd.s32 %s110, 1
    %p114 = scmp.eq.s32.totalorder %s13, 1
    %p115 = scmp.ne.s32.totalorder %s110, %s112
    %p116 = scmp.eq.s32.totalorder %s13, 0
    %p117 = por %p115, %p116
    %p118 = scmp.ne.s32.totalorder %s110, %s112
    %p119 = scmp.eq.s32.totalorder %s18, 1
    %p120 = por %p118, %p119
    %p121 = scmp.ne.s32.totalorder %s112, %s113
    %p122 = scmp.eq.s32.totalorder %s18, 0
    %p123 = por %p121, %p122
    %p124 = scmp.ne.s32.totalorder %s112, %s113
    %p125 = scmp.eq.s32.totalorder %s19, 1
    %p126 = por %p124, %p125
    %p128 = scmp.ne.s32.totalorder %s113, %s127
    %p129 = scmp.eq.s32.totalorder %s19, 0
    %p130 = por %p128, %p129
    %s132 = sadd.s32 %s131, 1
    %p135 = scmp.eq.s32.totalorder %s13, 1
    %p136 = scmp.ne.s32.totalorder %s131, %s133
    %p137 = scmp.eq.s32.totalorder %s13, 0
    %p138 = por %p136, %p137
    %p139 = scmp.ne.s32.totalorder %s131, %s133
    %p140 = scmp.eq.s32.totalorder %s18, 1
    %p141 = por %p139, %p140
    %p142 = scmp.ne.s32.totalorder %s133, %s134
    %p143 = scmp.eq.s32.totalorder %s18, 0
    %p144 = por %p142, %p143
    %p145 = scmp.ne.s32.totalorder %s133, %s134
    %p146 = scmp.eq.s32.totalorder %s19, 1
    %p147 = por %p145, %p146
    %p149 = scmp.ne.s32.totalorder %s134, %s148
    %p150 = scmp.eq.s32.totalorder %s19, 0
    %p151 = por %p149, %p150
    %s153 = sadd.s32 %s152, 1
    %p156 = scmp.eq.s32.totalorder %s13, 1
    %p157 = scmp.ne.s32.totalorder %s152, %s154
    %p158 = scmp.eq.s32.totalorder %s13, 0
    %p159 = por %p157, %p158
    %p160 = scmp.ne.s32.totalorder %s152, %s154
    %p161 = scmp.eq.s32.totalorder %s18, 1
    %p162 = por %p160, %p161
    %p163 = scmp.ne.s32.totalorder %s154, %s155
    %p164 = scmp.eq.s32.totalorder %s18, 0
    %p165 = por %p163, %p164
    %p166 = scmp.ne.s32.totalorder %s154, %s155
    %p167 = scmp.eq.s32.totalorder %s19, 1
    %p168 = por %p166, %p167
    %p170 = scmp.ne.s32.totalorder %s155, %s169
    %p171 = scmp.eq.s32.totalorder %s19, 0
    %p172 = por %p170, %p171
    %s173 = ssub.s32 %s13, %s20
    %p174 = scmp.eq.s32.totalorder %s173, 0
    %s176 = sadd.s32 %s175, 1
    %s177 = scalar_select %p174, %s175, %s176
    %p180 = pneg %p174
    %p181 = scmp.eq.s32.totalorder %s13, 1
    %p182 = por %p180, %p181
    %p183 = scmp.ne.s32.totalorder %s175, %s178
    %p184 = scmp.eq.s32.totalorder %s13, 0
    %p185 = por %p183, %p184
    %p186 = scmp.ne.s32.totalorder %s175, %s178
    %p187 = scmp.eq.s32.totalorder %s18, 1
    %p188 = por %p186, %p187
    %p189 = scmp.ne.s32.totalorder %s178, %s179
    %p190 = scmp.eq.s32.totalorder %s18, 0
    %p191 = por %p189, %p190
    %p192 = scmp.ne.s32.totalorder %s178, %s179
    %p193 = scmp.eq.s32.totalorder %s19, 1
    %p194 = por %p192, %p193
    %p196 = scmp.ne.s32.totalorder %s179, %s195
    %p197 = scmp.eq.s32.totalorder %s19, 0
    %p198 = por %p196, %p197
    %p199 = scmp.le.s32.totalorder 1, %s13
    %p200 = scmp.lt.s32.totalorder %s13, 3
    %p201 = pnand %p199, %p200
    %p202 = pneg %p201
    // Predicated region
    $region9: #{bottleneck_forward.1} parent=5 // pred_check
      _
    $region10: #{bottleneck_forward.1} parent=5 // pred_check_branch
      %204 = sbr.rel (%p201) target = $region12
    $region11: #{bottleneck_forward.1} parent=5 // pred_region
      %s205 = ssub.s32 %s13, 1
      // Predicated region
      $region13: #{bottleneck_forward.1} parent=11 // pred_check
        %p206 = pneg %p60
      $region14: #{bottleneck_forward.1} parent=11 // pred_check_branch
        %208 = sbr.rel (%p206) target = $region16
      $region15: #{bottleneck_forward.1} parent=11 // pred_region
        _
      $region16: #{bottleneck_forward.1} parent=11 // pred_fallthru
        _
      // Predicated region
      $region17: #{bottleneck_forward.1} parent=11 // pred_check
        %p209 = pneg %p81
      $region18: #{bottleneck_forward.1} parent=11 // pred_check_branch
        %211 = sbr.rel (%p209) target = $region20
      $region19: #{bottleneck_forward.1} parent=11 // pred_region
        _
      $region20: #{bottleneck_forward.1} parent=11 // pred_fallthru
        _
      // Predicated region
      $region21: #{bottleneck_forward.1} parent=11 // pred_check
        %p212 = pneg %p102
      $region22: #{bottleneck_forward.1} parent=11 // pred_check_branch
        %214 = sbr.rel (%p212) target = $region24
      $region23: #{bottleneck_forward.1} parent=11 // pred_region
        _
      $region24: #{bottleneck_forward.1} parent=11 // pred_fallthru
        _
      // Predicated region
      $region25: #{bottleneck_forward.1} parent=11 // pred_check
        %p215 = pneg %p123
      $region26: #{bottleneck_forward.1} parent=11 // pred_check_branch
        %217 = sbr.rel (%p215) target = $region28
      $region27: #{bottleneck_forward.1} parent=11 // pred_region
        _
      $region28: #{bottleneck_forward.1} parent=11 // pred_fallthru
        _
      // Predicated region
      $region29: #{bottleneck_forward.1} parent=11 // pred_check
        %p218 = pneg %p144
      $region30: #{bottleneck_forward.1} parent=11 // pred_check_branch
        %220 = sbr.rel (%p218) target = $region32
      $region31: #{bottleneck_forward.1} parent=11 // pred_region
        _
      $region32: #{bottleneck_forward.1} parent=11 // pred_fallthru
        _
      // Predicated region
      $region33: #{bottleneck_forward.1} parent=11 // pred_check
        %p221 = pneg %p165
      $region34: #{bottleneck_forward.1} parent=11 // pred_check_branch
        %223 = sbr.rel (%p221) target = $region36
      $region35: #{bottleneck_forward.1} parent=11 // pred_region
        _
      $region36: #{bottleneck_forward.1} parent=11 // pred_fallthru
        _
    $region12: #{bottleneck_forward.1} parent=5 // pred_fallthru
      _
    %p224 = scmp.lt.s32.totalorder %s13, 2
    // Predicated region
    $region37: #{bottleneck_forward.1} parent=5 // pred_check
      %p225 = pneg %p224
    $region38: #{bottleneck_forward.1} parent=5 // pred_check_branch
      %227 = sbr.rel (%p225) target = $region40
    $region39: #{bottleneck_forward.1} parent=5 // pred_region
      // Predicated region
      $region41: #{bottleneck_forward.1} parent=39 // pred_check
        %p228 = pneg %p33
      $region42: #{bottleneck_forward.1} parent=39 // pred_check_branch
        %230 = sbr.rel (%p228) target = $region44
      $region43: #{bottleneck_forward.1} parent=39 // pred_region
        %p231 = scmp.lt.s32.totalorder %s13, 1
        %s232 = scalar_select %p231, %s13, 1
        %s233 = smul.addr %s232, 32
        %s234 = smul.addr %s233, 8
        %s235 = scalar_lea.vmem %s0, %s234
      $region44: #{bottleneck_forward.1} parent=39 // pred_fallthru
        _
    $region40: #{bottleneck_forward.1} parent=5 // pred_fallthru
      _
    %p236 = scmp.le.s32.totalorder 1, %s13
    %p237 = scmp.lt.s32.totalorder %s13, 3
    %p238 = pnand %p236, %p237
    %p239 = pneg %p238
    // Predicated region
    $region45: #{bottleneck_forward.1} parent=5 // pred_check
      _
    $region46: #{bottleneck_forward.1} parent=5 // pred_check_branch
      %241 = sbr.rel (%p238) target = $region48
    $region47: #{bottleneck_forward.1} parent=5 // pred_region
      %s242 = ssub.s32 %s13, 1
      %p243 = scmp.lt.s32.totalorder %s18, 1
      %s244 = scalar_select %p243, %s18, 1
      %s245 = smul.addr %s244, 32
      %s246 = smul.addr %s245, 8
      %s247 = scalar_lea.vmem %s0, %s246
      %p248 = pneg %p39
      %p249 = pneg %p36
      %p250 = pneg %p60
      %p251 = pneg %p57
      %p252 = pneg %p81
      %p253 = pneg %p78
      %p254 = pneg %p102
      %p255 = pneg %p99
      %p256 = pneg %p123
      %p257 = pneg %p120
      %p258 = pneg %p144
      %p259 = pneg %p141
      %p260 = pneg %p165
      %p261 = pneg %p162
      %p262 = pneg %p191
      %p263 = pneg %p188
      %p264 = scmp.lt.s32.totalorder %s18, 1
      %s265 = scalar_select %p264, %s18, 1
      %s266 = smul.addr %s265, 32
      %s267 = smul.addr %s266, 8
      %s268 = scalar_lea.vmem %s7, %s267
      %p269 = scmp.lt.s32.totalorder %s18, 1
      %s270 = scalar_select %p269, %s18, 1
      %s271 = smul.addr %s270, 32
      %s272 = smul.addr %s271, 8
      %s273 = scalar_lea.vmem %s0, %s272
      %p274 = scmp.lt.s32.totalorder %s18, 1
      %s275 = scalar_select %p274, %s18, 1
      %s276 = smul.addr %s275, 32
      %s277 = smul.addr %s276, 8
      %s278 = scalar_lea.vmem %s7, %s277
      %v280 = vld [vmem:[%s273] sm:$0xff]
      %v281 = vld [vmem:[%s273 + $0x8] sm:$0xff]
      %v282 = vld [vmem:[%s273 + $0x10] sm:$0xff]
      %v283 = vld [vmem:[%s273 + $0x18] sm:$0xff]
      %v284 = vld [vmem:[%s273 + $0x20] sm:$0xff]
      %v285 = vld [vmem:[%s273 + $0x28] sm:$0xff]
      %v286 = vld [vmem:[%s273 + $0x30] sm:$0xff]
      %v287 = vld [vmem:[%s273 + $0x38] sm:$0xff]
      %v288 = vld [vmem:[%s273 + $0x40] sm:$0xff]
      %v289 = vld [vmem:[%s273 + $0x48] sm:$0xff]
      %v290 = vld [vmem:[%s273 + $0x50] sm:$0xff]
      %v291 = vld [vmem:[%s273 + $0x58] sm:$0xff]
      %v292 = vld [vmem:[%s273 + $0x60] sm:$0xff]
      %v293 = vld [vmem:[%s273 + $0x68] sm:$0xff]
      %v294 = vld [vmem:[%s273 + $0x70] sm:$0xff]
      %v295 = vld [vmem:[%s273 + $0x78] sm:$0xff]
      %v296 = vld [vmem:[%s273 + $0x80] sm:$0xff]
      %v297 = vld [vmem:[%s273 + $0x88] sm:$0xff]
      %v298 = vld [vmem:[%s273 + $0x90] sm:$0xff]
      %v299 = vld [vmem:[%s273 + $0x98] sm:$0xff]
      %v300 = vld [vmem:[%s273 + $0xa0] sm:$0xff]
      %v301 = vld [vmem:[%s273 + $0xa8] sm:$0xff]
      %v302 = vld [vmem:[%s273 + $0xb0] sm:$0xff]
      %v303 = vld [vmem:[%s273 + $0xb8] sm:$0xff]
      %v304 = vld [vmem:[%s273 + $0xc0] sm:$0xff]
      %v305 = vld [vmem:[%s273 + $0xc8] sm:$0xff]
      %v306 = vld [vmem:[%s273 + $0xd0] sm:$0xff]
      %v307 = vld [vmem:[%s273 + $0xd8] sm:$0xff]
      %v308 = vld [vmem:[%s273 + $0xe0] sm:$0xff]
      %v309 = vld [vmem:[%s273 + $0xe8] sm:$0xff]
      %v310 = vld [vmem:[%s273 + $0xf0] sm:$0xff]
      %v311 = vld [vmem:[%s273 + $0xf8] sm:$0xff]
      %v312 = vpack.c.bf16 %v281, %v280
      %v313 = vpack.c.bf16 %v283, %v282
      %v314 = vpack.c.bf16 %v285, %v284
      %v315 = vpack.c.bf16 %v287, %v286
      %v316 = vpack.c.bf16 %v289, %v288
      %v317 = vpack.c.bf16 %v291, %v290
      %v318 = vpack.c.bf16 %v293, %v292
      %v319 = vpack.c.bf16 %v295, %v294
      %v320 = vpack.c.bf16 %v297, %v296
      %v321 = vpack.c.bf16 %v299, %v298
      %v322 = vpack.c.bf16 %v301, %v300
      %v323 = vpack.c.bf16 %v303, %v302
      %v324 = vpack.c.bf16 %v305, %v304
      %v325 = vpack.c.bf16 %v307, %v306
      %v326 = vpack.c.bf16 %v309, %v308
      %v327 = vpack.c.bf16 %v311, %v310
      %v328 = vld [vmem:[%s1] sm:$0xf]
      %v329 = vld [vmem:[%s1 + $0x4] sm:$0xf]
      %v330 = vld [vmem:[%s1 + $0x8] sm:$0xf]
      %v331 = vld [vmem:[%s1 + $0xc] sm:$0xf]
      %v332 = vld [vmem:[%s1 + $0x10] sm:$0xf]
      %v333 = vld [vmem:[%s1 + $0x14] sm:$0xf]
      %v334 = vld [vmem:[%s1 + $0x18] sm:$0xf]
      %v335 = vld [vmem:[%s1 + $0x1c] sm:$0xf]
      %v336 = vld [vmem:[%s1 + $0x20] sm:$0xf]
      %v337 = vld [vmem:[%s1 + $0x24] sm:$0xf]
      %v338 = vld [vmem:[%s1 + $0x28] sm:$0xf]
      %v339 = vld [vmem:[%s1 + $0x2c] sm:$0xf]
      %v340 = vld [vmem:[%s1 + $0x30] sm:$0xf]
      %v341 = vld [vmem:[%s1 + $0x34] sm:$0xf]
      %v342 = vld [vmem:[%s1 + $0x38] sm:$0xf]
      %v343 = vld [vmem:[%s1 + $0x3c] sm:$0xf]
      %v344 = vld [vmem:[%s2] sm:$0x1]
      %v346 = vlaneseq
      %v347 = vshrl.u32 %v346, 7
      %v348 = vsub.s32 0, %v347
      %v349 = vrot.slane %v344, %v348
      %v367 = vunpack.c.l.b16 %v328
      %v368 = vunpack.c.l.b16 %v329
      %v369 = vunpack.c.l.b16 %v330
      %v370 = vunpack.c.l.b16 %v331
      %v371 = vunpack.c.l.b16 %v332
      %v372 = vunpack.c.l.b16 %v333
      %v373 = vunpack.c.l.b16 %v334
      %v374 = vunpack.c.l.b16 %v335
      %v375 = vunpack.c.l.b16 %v336
      %v376 = vunpack.c.l.b16 %v337
      %v377 = vunpack.c.l.b16 %v338
      %v378 = vunpack.c.l.b16 %v339
      %v379 = vunpack.c.l.b16 %v340
      %v380 = vunpack.c.l.b16 %v341
      %v381 = vunpack.c.l.b16 %v342
      %v382 = vunpack.c.l.b16 %v343
      %v383 = vpack.c.b16 %v368, %v367
      %v384 = vpack.c.b16 %v370, %v369
      %v385 = vpack.c.b16 %v372, %v371
      %v386 = vpack.c.b16 %v374, %v373
      %v387 = vpack.c.b16 %v376, %v375
      %v388 = vpack.c.b16 %v378, %v377
      %v389 = vpack.c.b16 %v380, %v379
      %v390 = vpack.c.b16 %v382, %v381
      %399 = vmatprep.subr.bf16.mxu0 0
      %400 = vmatpush1.bf16.msra.mxu0 %v383
      %401 = vmatprep.subr.bf16.mxu0 0
      %402 = vmatpush1.bf16.msra.mxu0 %v384
      %403 = vmatprep.subr.bf16.mxu0 0
      %404 = vmatpush1.bf16.msra.mxu0 %v385
      %405 = vmatprep.subr.bf16.mxu0 0
      %406 = vmatpush1.bf16.msra.mxu0 %v386
      %407 = vmatprep.subr.bf16.mxu0 0
      %408 = vmatpush1.bf16.msra.mxu0 %v387
      %409 = vmatprep.subr.bf16.mxu0 0
      %410 = vmatpush1.bf16.msra.mxu0 %v388
      %411 = vmatprep.subr.bf16.mxu0 0
      %412 = vmatpush1.bf16.msra.mxu0 %v389
      %413 = vmatprep.subr.bf16.mxu0 0
      %414 = vmatpush1.bf16.msra.mxu0 %v390
      %415 = vmatprep.subr.bf16.mxu0 0
      %416 = vmatpush1.bf16.msra.mxu0 0
      %417 = vmatprep.subr.bf16.mxu0 0
      %418 = vmatpush1.bf16.msra.mxu0 0
      %419 = vmatprep.subr.bf16.mxu0 0
      %420 = vmatpush1.bf16.msra.mxu0 0
      %421 = vmatprep.subr.bf16.mxu0 0
      %422 = vmatpush1.bf16.msra.mxu0 0
      %423 = vmatprep.subr.bf16.mxu0 0
      %424 = vmatpush1.bf16.msra.mxu0 0
      %425 = vmatprep.subr.bf16.mxu0 0
      %426 = vmatpush1.bf16.msra.mxu0 0
      %427 = vmatprep.subr.bf16.mxu0 0
      %428 = vmatpush1.bf16.msra.mxu0 0
      %429 = vmatprep.subr.bf16.mxu0 0
      %430 = vmatpush1.bf16.msra.mxu0 0
      %431 = vmatprep.mubr.bf16.mxu0 0
      %432 = vmatmul.mubr.bf16.gmra.mrb[0].mxu0 %v312
      %v433 = vpop.f32.mrb[0].mxu0
      %v434 = vadd.f32 %v349, %v433
      %v435 = vpop.f32.mrb[0].mxu0
      %v436 = vpop.f32.mrb[0].mxu0
      %v437 = vadd.f32 %v349, %v436
      %v438 = vpop.f32.mrb[0].mxu0
      %439 = vmatprep.mubr.bf16.mxu0 0
      %440 = vmatmul.mubr.bf16.gmra.mrb[0].mxu0 %v313
      %v441 = vpop.f32.mrb[0].mxu0
      %v442 = vadd.f32 %v349, %v441
      %v443 = vpop.f32.mrb[0].mxu0
      %v444 = vpop.f32.mrb[0].mxu0
      %v445 = vadd.f32 %v349, %v444
      %v446 = vpop.f32.mrb[0].mxu0
      %447 = vmatprep.mubr.bf16.mxu0 0
      %448 = vmatmul.mubr.bf16.gmra.mrb[0].mxu0 %v314
      %v449 = vpop.f32.mrb[0].mxu0
      %v450 = vadd.f32 %v349, %v449
      %v451 = vpop.f32.mrb[0].mxu0
      %v452 = vpop.f32.mrb[0].mxu0
      %v453 = vadd.f32 %v349, %v452
      %v454 = vpop.f32.mrb[0].mxu0
      %455 = vmatprep.mubr.bf16.mxu0 0
      %456 = vmatmul.mubr.bf16.gmra.mrb[0].mxu0 %v315
      %v457 = vpop.f32.mrb[0].mxu0
      %v458 = vadd.f32 %v349, %v457
      %v459 = vpop.f32.mrb[0].mxu0
      %v460 = vpop.f32.mrb[0].mxu0
      %v461 = vadd.f32 %v349, %v460
      %v462 = vpop.f32.mrb[0].mxu0
      %463 = vmatprep.mubr.bf16.mxu0 0
      %464 = vmatmul.mubr.bf16.gmra.mrb[0].mxu0 %v316
      %v465 = vpop.f32.mrb[0].mxu0
      %v466 = vadd.f32 %v349, %v465
      %v467 = vpop.f32.mrb[0].mxu0
      %v468 = vpop.f32.mrb[0].mxu0
      %v469 = vadd.f32 %v349, %v468
      %v470 = vpop.f32.mrb[0].mxu0
      %471 = vmatprep.mubr.bf16.mxu0 0
      %472 = vmatmul.mubr.bf16.gmra.mrb[0].mxu0 %v317
      %v473 = vpop.f32.mrb[0].mxu0
      %v474 = vadd.f32 %v349, %v473
      %v475 = vpop.f32.mrb[0].mxu0
      %v476 = vpop.f32.mrb[0].mxu0
      %v477 = vadd.f32 %v349, %v476
      %v478 = vpop.f32.mrb[0].mxu0
      %479 = vmatprep.mubr.bf16.mxu0 0
      %480 = vmatmul.mubr.bf16.gmra.mrb[0].mxu0 %v318
      %v481 = vpop.f32.mrb[0].mxu0
      %v482 = vadd.f32 %v349, %v481
      %v483 = vpop.f32.mrb[0].mxu0
      %v484 = vpop.f32.mrb[0].mxu0
      %v485 = vadd.f32 %v349, %v484
      %v486 = vpop.f32.mrb[0].mxu0
      %487 = vmatprep.mubr.bf16.mxu0 0
      %488 = vmatmul.mubr.bf16.gmra.mrb[0].mxu0 %v319
      %v489 = vpop.f32.mrb[0].mxu0
      %v490 = vadd.f32 %v349, %v489
      %v491 = vpop.f32.mrb[0].mxu0
      %v492 = vpop.f32.mrb[0].mxu0
      %v493 = vadd.f32 %v349, %v492
      %v494 = vpop.f32.mrb[0].mxu0
      %495 = vmatprep.mubr.bf16.mxu0 0
      %496 = vmatmul.mubr.bf16.gmra.mrb[0].mxu0 %v320
      %v497 = vpop.f32.mrb[0].mxu0
      %v498 = vadd.f32 %v349, %v497
      %v499 = vpop.f32.mrb[0].mxu0
      %v500 = vpop.f32.mrb[0].mxu0
      %v501 = vadd.f32 %v349, %v500
      %v502 = vpop.f32.mrb[0].mxu0
      %503 = vmatprep.mubr.bf16.mxu0 0
      %504 = vmatmul.mubr.bf16.gmra.mrb[0].mxu0 %v321
      %v505 = vpop.f32.mrb[0].mxu0
      %v506 = vadd.f32 %v349, %v505
      %v507 = vpop.f32.mrb[0].mxu0
      %v508 = vpop.f32.mrb[0].mxu0
      %v509 = vadd.f32 %v349, %v508
      %v510 = vpop.f32.mrb[0].mxu0
      %511 = vmatprep.mubr.bf16.mxu0 0
      %512 = vmatmul.mubr.bf16.gmra.mrb[0].mxu0 %v322
      %v513 = vpop.f32.mrb[0].mxu0
      %v514 = vadd.f32 %v349, %v513
      %v515 = vpop.f32.mrb[0].mxu0
      %v516 = vpop.f32.mrb[0].mxu0
      %v517 = vadd.f32 %v349, %v516
      %v518 = vpop.f32.mrb[0].mxu0
      %519 = vmatprep.mubr.bf16.mxu0 0
      %520 = vmatmul.mubr.bf16.gmra.mrb[0].mxu0 %v323
      %v521 = vpop.f32.mrb[0].mxu0
      %v522 = vadd.f32 %v349, %v521
      %v523 = vpop.f32.mrb[0].mxu0
      %v524 = vpop.f32.mrb[0].mxu0
      %v525 = vadd.f32 %v349, %v524
      %v526 = vpop.f32.mrb[0].mxu0
      %527 = vmatprep.mubr.bf16.mxu0 0
      %528 = vmatmul.mubr.bf16.gmra.mrb[0].mxu0 %v324
      %v529 = vpop.f32.mrb[0].mxu0
      %v530 = vadd.f32 %v349, %v529
      %v531 = vpop.f32.mrb[0].mxu0
      %v532 = vpop.f32.mrb[0].mxu0
      %v533 = vadd.f32 %v349, %v532
      %v534 = vpop.f32.mrb[0].mxu0
      %535 = vmatprep.mubr.bf16.mxu0 0
      %536 = vmatmul.mubr.bf16.gmra.mrb[0].mxu0 %v325
      %v537 = vpop.f32.mrb[0].mxu0
      %v538 = vadd.f32 %v349, %v537
      %v539 = vpop.f32.mrb[0].mxu0
      %v540 = vpop.f32.mrb[0].mxu0
      %v541 = vadd.f32 %v349, %v540
      %v542 = vpop.f32.mrb[0].mxu0
      %543 = vmatprep.mubr.bf16.mxu0 0
      %544 = vmatmul.mubr.bf16.gmra.mrb[0].mxu0 %v326
      %v545 = vpop.f32.mrb[0].mxu0
      %v546 = vadd.f32 %v349, %v545
      %v547 = vpop.f32.mrb[0].mxu0
      %v548 = vpop.f32.mrb[0].mxu0
      %v549 = vadd.f32 %v349, %v548
      %v550 = vpop.f32.mrb[0].mxu0
      %551 = vmatprep.mubr.bf16.mxu0 0
      %552 = vmatmul.mubr.bf16.gmra.mrb[0].mxu0 %v327
      %v553 = vpop.f32.mrb[0].mxu0
      %v554 = vadd.f32 %v349, %v553
      %v555 = vpop.f32.mrb[0].mxu0
      %v556 = vpop.f32.mrb[0].mxu0
      %v557 = vadd.f32 %v349, %v556
      %v558 = vpop.f32.mrb[0].mxu0
      %559 = vdwg.mxu0
      %v560 = vmax.f32 %v434, 0.0
      %v561 = vmax.f32 %v437, 0.0
      %v562 = vmax.f32 %v442, 0.0
      %v563 = vmax.f32 %v445, 0.0
      %v564 = vmax.f32 %v450, 0.0
      %v565 = vmax.f32 %v453, 0.0
      %v566 = vmax.f32 %v458, 0.0
      %v567 = vmax.f32 %v461, 0.0
      %v568 = vmax.f32 %v466, 0.0
      %v569 = vmax.f32 %v469, 0.0
      %v570 = vmax.f32 %v474, 0.0
      %v571 = vmax.f32 %v477, 0.0
      %v572 = vmax.f32 %v482, 0.0
      %v573 = vmax.f32 %v485, 0.0
      %v574 = vmax.f32 %v490, 0.0
      %v575 = vmax.f32 %v493, 0.0
      %v576 = vmax.f32 %v498, 0.0
      %v577 = vmax.f32 %v501, 0.0
      %v578 = vmax.f32 %v506, 0.0
      %v579 = vmax.f32 %v509, 0.0
      %v580 = vmax.f32 %v514, 0.0
      %v581 = vmax.f32 %v517, 0.0
      %v582 = vmax.f32 %v522, 0.0
      %v583 = vmax.f32 %v525, 0.0
      %v584 = vmax.f32 %v530, 0.0
      %v585 = vmax.f32 %v533, 0.0
      %v586 = vmax.f32 %v538, 0.0
      %v587 = vmax.f32 %v541, 0.0
      %v588 = vmax.f32 %v546, 0.0
      %v589 = vmax.f32 %v549, 0.0
      %v590 = vmax.f32 %v554, 0.0
      %v591 = vmax.f32 %v557, 0.0
      %592 = vst [vmem:[#allocation2] sm:$0xff] 0.0
      %593 = vst [vmem:[#allocation2 + $0x8] sm:$0xff] 0.0
      %594 = vst [vmem:[#allocation2 + $0x10] sm:$0x3] 0.0
      %595 = vst [vmem:[#allocation2 + $0x18] sm:$0xff] 0.0
      %596 = vst [vmem:[#allocation2 + $0x20] sm:$0xff] 0.0
      %597 = vst [vmem:[#allocation2 + $0x28] sm:$0x3] 0.0
      %598 = vst [vmem:[#allocation2 + $0x30] sm:$0xff] 0.0
      %599 = vst [vmem:[#allocation2 + $0x38] sm:$0xff] 0.0
      %600 = vst [vmem:[#allocation2 + $0x40] sm:$0x3] 0.0
      %601 = vst [vmem:[#allocation2 + $0x48] sm:$0xff] 0.0
      %602 = vst [vmem:[#allocation2 + $0x50] sm:$0xff] 0.0
      %603 = vst [vmem:[#allocation2 + $0x58] sm:$0x3] 0.0
      %604 = vst [vmem:[#allocation2 + $0x60] sm:$0xff] 0.0
      %605 = vst [vmem:[#allocation2 + $0x68] sm:$0xff] 0.0
      %606 = vst [vmem:[#allocation2 + $0x70] sm:$0x3] 0.0
      %607 = vst [vmem:[#allocation2 + $0x78] sm:$0xff] 0.0
      %608 = vst [vmem:[#allocation2 + $0x80] sm:$0xff] 0.0
      %609 = vst [vmem:[#allocation2 + $0x88] sm:$0x3] 0.0
      %610 = vst [vmem:[#allocation2 + $0x90] sm:$0xff] 0.0
      %611 = vst [vmem:[#allocation2 + $0x98] sm:$0xff] 0.0
      %612 = vst [vmem:[#allocation2 + $0xa0] sm:$0x3] 0.0
      %613 = vst [vmem:[#allocation2 + $0xa8] sm:$0xff] 0.0
      %614 = vst [vmem:[#allocation2 + $0xb0] sm:$0xff] 0.0
      %615 = vst [vmem:[#allocation2 + $0xb8] sm:$0x3] 0.0
      %616 = vst [vmem:[#allocation2 + $0xc0] sm:$0xff] 0.0
      %617 = vst [vmem:[#allocation2 + $0xc8] sm:$0xff] 0.0
      %618 = vst [vmem:[#allocation2 + $0xd0] sm:$0x3] 0.0
      %619 = vst [vmem:[#allocation2 + $0xd8] sm:$0xff] 0.0
      %620 = vst [vmem:[#allocation2 + $0xe0] sm:$0xff] 0.0
      %621 = vst [vmem:[#allocation2 + $0xe8] sm:$0x3] 0.0
      %622 = vst [vmem:[#allocation2 + $0xf0] sm:$0xff] 0.0
      %623 = vst [vmem:[#allocation2 + $0xf8] sm:$0xff] 0.0
      %624 = vst [vmem:[#allocation2 + $0x100] sm:$0x3] 0.0
      %625 = vst [vmem:[#allocation2 + $0x108] sm:$0xff] 0.0
      %626 = vst [vmem:[#allocation2 + $0x110] sm:$0xff] 0.0
      %627 = vst [vmem:[#allocation2 + $0x118] sm:$0x3] 0.0
      %628 = vst [vmem:[#allocation2 + $0x120] sm:$0xff] 0.0
      %629 = vst [vmem:[#allocation2 + $0x128] sm:$0xff] 0.0
      %630 = vst [vmem:[#allocation2 + $0x130] sm:$0x3] 0.0
      %631 = vst [vmem:[#allocation2 + $0x138] sm:$0xff] 0.0
      %632 = vst [vmem:[#allocation2 + $0x140] sm:$0xff] 0.0
      %633 = vst [vmem:[#allocation2 + $0x148] sm:$0x3] 0.0
      %634 = vst [vmem:[#allocation2 + $0x150] sm:$0xff] 0.0
      %635 = vst [vmem:[#allocation2 + $0x158] sm:$0xff] 0.0
      %636 = vst [vmem:[#allocation2 + $0x160] sm:$0x3] 0.0
      %637 = vst [vmem:[#allocation2 + $0x168] sm:$0xff] 0.0
      %638 = vst [vmem:[#allocation2 + $0x170] sm:$0xff] 0.0
      %639 = vst [vmem:[#allocation2 + $0x178] sm:$0x3] 0.0
      %640 = vst [vmem:[#allocation2 + $0x180] sm:$0xff] 0.0
      %641 = vst [vmem:[#allocation2 + $0x188] sm:$0xff] 0.0
      %642 = vst [vmem:[#allocation2 + $0x190] sm:$0x3] 0.0
      %643 = vst [vmem:[#allocation2 + $0x198] sm:$0xff] 0.0
      %644 = vst [vmem:[#allocation2 + $0x1a0] sm:$0xff] 0.0
      %645 = vst [vmem:[#allocation2 + $0x1a8] sm:$0x3] 0.0
      %s646 = scalar_lea.vmem [#allocation2], 24
      %647 = vst [vmem:[%s646 + $0x1] sm:$0xff] %v560
      %648 = vst [vmem:[%s646 + $0x9] sm:$0xff] %v561
      %649 = vst [vmem:[%s646 + $0x19] sm:$0xff] %v562
      %650 = vst [vmem:[%s646 + $0x21] sm:$0xff] %v563
      %651 = vst [vmem:[%s646 + $0x31] sm:$0xff] %v564
      %652 = vst [vmem:[%s646 + $0x39] sm:$0xff] %v565
      %653 = vst [vmem:[%s646 + $0x49] sm:$0xff] %v566
      %654 = vst [vmem:[%s646 + $0x51] sm:$0xff] %v567
      %655 = vst [vmem:[%s646 + $0x61] sm:$0xff] %v568
      %656 = vst [vmem:[%s646 + $0x69] sm:$0xff] %v569
      %657 = vst [vmem:[%s646 + $0x79] sm:$0xff] %v570
      %658 = vst [vmem:[%s646 + $0x81] sm:$0xff] %v571
      %659 = vst [vmem:[%s646 + $0x91] sm:$0xff] %v572
      %660 = vst [vmem:[%s646 + $0x99] sm:$0xff] %v573
      %661 = vst [vmem:[%s646 + $0xa9] sm:$0xff] %v574
      %662 = vst [vmem:[%s646 + $0xb1] sm:$0xff] %v575
      %663 = vst [vmem:[%s646 + $0xc1] sm:$0xff] %v576
      %664 = vst [vmem:[%s646 + $0xc9] sm:$0xff] %v577
      %665 = vst [vmem:[%s646 + $0xd9] sm:$0xff] %v578
      %666 = vst [vmem:[%s646 + $0xe1] sm:$0xff] %v579
      %667 = vst [vmem:[%s646 + $0xf1] sm:$0xff] %v580
      %668 = vst [vmem:[%s646 + $0xf9] sm:$0xff] %v581
      %669 = vst [vmem:[%s646 + $0x109] sm:$0xff] %v582
      %670 = vst [vmem:[%s646 + $0x111] sm:$0xff] %v583
      %671 = vst [vmem:[%s646 + $0x121] sm:$0xff] %v584
      %672 = vst [vmem:[%s646 + $0x129] sm:$0xff] %v585
      %673 = vst [vmem:[%s646 + $0x139] sm:$0xff] %v586
      %674 = vst [vmem:[%s646 + $0x141] sm:$0xff] %v587
      %675 = vst [vmem:[%s646 + $0x151] sm:$0xff] %v588
      %676 = vst [vmem:[%s646 + $0x159] sm:$0xff] %v589
      %677 = vst [vmem:[%s646 + $0x169] sm:$0xff] %v590
      %678 = vst [vmem:[%s646 + $0x171] sm:$0xff] %v591
      %v679 = vld [vmem:[#allocation2] sm:$0xff]
      %v680 = vld [vmem:[#allocation2 + $0x8] sm:$0xff]
      %v681 = vld [vmem:[#allocation2 + $0x18] sm:$0xff]
      %v682 = vld [vmem:[#allocation2 + $0x20] sm:$0xff]
      %v683 = vld [vmem:[#allocation2 + $0x30] sm:$0xff]
      %v684 = vld [vmem:[#allocation2 + $0x38] sm:$0xff]
      %v685 = vld [vmem:[#allocation2 + $0x48] sm:$0xff]
      %v686 = vld [vmem:[#allocation2 + $0x50] sm:$0xff]
      %v687 = vld [vmem:[#allocation2 + $0x60] sm:$0xff]
      %v688 = vld [vmem:[#allocation2 + $0x68] sm:$0xff]
      %v689 = vld [vmem:[#allocation2 + $0x78] sm:$0xff]
      %v690 = vld [vmem:[#allocation2 + $0x80] sm:$0xff]
      %v691 = vld [vmem:[#allocation2 + $0x90] sm:$0xff]
      %v692 = vld [vmem:[#allocation2 + $0x98] sm:$0xff]
      %v693 = vld [vmem:[#allocation2 + $0xa8] sm:$0xff]
      %v694 = vld [vmem:[#allocation2 + $0xb0] sm:$0xff]
      %v695 = vld [vmem:[#allocation2 + $0xc0] sm:$0xff]
      %v696 = vld [vmem:[#allocation2 + $0xc8] sm:$0xff]
      %v697 = vld [vmem:[#allocation2 + $0xd8] sm:$0xff]
      %v698 = vld [vmem:[#allocation2 + $0xe0] sm:$0xff]
      %v699 = vld [vmem:[#allocation2 + $0xf0] sm:$0xff]
      %v700 = vld [vmem:[#allocation2 + $0xf8] sm:$0xff]
      %v701 = vld [vmem:[#allocation2 + $0x108] sm:$0xff]
      %v702 = vld [vmem:[#allocation2 + $0x110] sm:$0xff]
      %v703 = vld [vmem:[#allocation2 + $0x120] sm:$0xff]
      %v704 = vld [vmem:[#allocation2 + $0x128] sm:$0xff]
      %v705 = vld [vmem:[#allocation2 + $0x138] sm:$0xff]
      %v706 = vld [vmem:[#allocation2 + $0x140] sm:$0xff]
      %v707 = vld [vmem:[#allocation2 + $0x150] sm:$0xff]
      %v708 = vld [vmem:[#allocation2 + $0x158] sm:$0xff]
      %v709 = vld [vmem:[#allocation2 + $0x168] sm:$0xff]
      %v710 = vld [vmem:[#allocation2 + $0x170] sm:$0xff]
      %v711 = vpack.c.bf16 %v680, %v679
      %v712 = vpack.c.bf16 %v682, %v681
      %v713 = vpack.c.bf16 %v684, %v683
      %v714 = vpack.c.bf16 %v686, %v685
      %v715 = vpack.c.bf16 %v688, %v687
      %v716 = vpack.c.bf16 %v690, %v689
      %v717 = vpack.c.bf16 %v692, %v691
      %v718 = vpack.c.bf16 %v694, %v693
      %v719 = vpack.c.bf16 %v696, %v695
      %v720 = vpack.c.bf16 %v698, %v697
      %v721 = vpack.c.bf16 %v700, %v699
      %v722 = vpack.c.bf16 %v702, %v701
      %v723 = vpack.c.bf16 %v704, %v703
      %v724 = vpack.c.bf16 %v706, %v705
      %v725 = vpack.c.bf16 %v708, %v707
      %v726 = vpack.c.bf16 %v710, %v709
      %v727 = vld [vmem:[%s3] sm:$0xf]
      %v728 = vld [vmem:[%s3 + $0x4] sm:$0xf]
      %v729 = vld [vmem:[%s3 + $0x8] sm:$0xf]
      %v730 = vld [vmem:[%s3 + $0xc] sm:$0xf]
      %v731 = vld [vmem:[%s3 + $0x10] sm:$0xf]
      %v732 = vld [vmem:[%s3 + $0x14] sm:$0xf]
      %v733 = vld [vmem:[%s3 + $0x18] sm:$0xf]
      %v734 = vld [vmem:[%s3 + $0x1c] sm:$0xf]
      %v735 = vld [vmem:[%s3 + $0x20] sm:$0xf]
      %v736 = vld [vmem:[%s3 + $0x24] sm:$0xf]
      %v737 = vld [vmem:[%s3 + $0x28] sm:$0xf]
      %v738 = vld [vmem:[%s3 + $0x2c] sm:$0xf]
      %v739 = vld [vmem:[%s3 + $0x30] sm:$0xf]
      %v740 = vld [vmem:[%s3 + $0x34] sm:$0xf]
      %v741 = vld [vmem:[%s3 + $0x38] sm:$0xf]
      %v742 = vld [vmem:[%s3 + $0x3c] sm:$0xf]
      %v759 = vunpack.c.l.b16 %v727
      %v760 = vunpack.c.l.b16 %v728
      %v761 = vunpack.c.l.b16 %v729
      %v762 = vunpack.c.l.b16 %v730
      %v763 = vunpack.c.l.b16 %v731
      %v764 = vunpack.c.l.b16 %v732
      %v765 = vunpack.c.l.b16 %v733
      %v766 = vunpack.c.l.b16 %v734
      %v767 = vunpack.c.l.b16 %v735
      %v768 = vunpack.c.l.b16 %v736
      %v769 = vunpack.c.l.b16 %v737
      %v770 = vunpack.c.l.b16 %v738
      %v771 = vunpack.c.l.b16 %v739
      %v772 = vunpack.c.l.b16 %v740
      %v773 = vunpack.c.l.b16 %v741
      %v774 = vunpack.c.l.b16 %v742
      %v775 = vpack.c.b16 %v760, %v759
      %v776 = vpack.c.b16 %v762, %v761
      %v777 = vpack.c.b16 %v764, %v763
      %v778 = vpack.c.b16 %v766, %v765
      %v779 = vpack.c.b16 %v768, %v767
      %v780 = vpack.c.b16 %v770, %v769
      %v781 = vpack.c.b16 %v772, %v771
      %v782 = vpack.c.b16 %v774, %v773
      %791 = vmatprep.subr.bf16.mxu0 0
      %792 = vmatpush1.bf16.msra.mxu0 %v775
      %793 = vmatprep.subr.bf16.mxu0 0
      %794 = vmatpush1.bf16.msra.mxu0 %v776
      %795 = vmatprep.subr.bf16.mxu0 0
      %796 = vmatpush1.bf16.msra.mxu0 %v777
      %797 = vmatprep.subr.bf16.mxu0 0
      %798 = vmatpush1.bf16.msra.mxu0 %v778
      %799 = vmatprep.subr.bf16.mxu0 0
      %800 = vmatpush1.bf16.msra.mxu0 %v779
      %801 = vmatprep.subr.bf16.mxu0 0
      %802 = vmatpush1.bf16.msra.mxu0 %v780
      %803 = vmatprep.subr.bf16.mxu0 0
      %804 = vmatpush1.bf16.msra.mxu0 %v781
      %805 = vmatprep.subr.bf16.mxu0 0
      %806 = vmatpush1.bf16.msra.mxu0 %v782
      %807 = vmatprep.subr.bf16.mxu0 0
      %808 = vmatpush1.bf16.msra.mxu0 0
      %809 = vmatprep.subr.bf16.mxu0 0
      %810 = vmatpush1.bf16.msra.mxu0 0
      %811 = vmatprep.subr.bf16.mxu0 0
      %812 = vmatpush1.bf16.msra.mxu0 0
      %813 = vmatprep.subr.bf16.mxu0 0
      %814 = vmatpush1.bf16.msra.mxu0 0
      %815 = vmatprep.subr.bf16.mxu0 0
      %816 = vmatpush1.bf16.msra.mxu0 0
      %817 = vmatprep.subr.bf16.mxu0 0
      %818 = vmatpush1.bf16.msra.mxu0 0
      %819 = vmatprep.subr.bf16.mxu0 0
      %820 = vmatpush1.bf16.msra.mxu0 0
      %821 = vmatprep.subr.bf16.mxu0 0
      %822 = vmatpush1.bf16.msra.mxu0 0
      %823 = vmatprep.mubr.bf16.mxu0 0
      %824 = vmatmul.mubr.bf16.gmra.mrb[0].mxu0 %v711
      %v825 = vpop.f32.mrb[0].mxu0
      %v826 = vadd.f32 0.0, %v825
      %v827 = vpop.f32.mrb[0].mxu0
      %v828 = vpop.f32.mrb[0].mxu0
      %v829 = vadd.f32 0.0, %v828
      %v830 = vpop.f32.mrb[0].mxu0
      %831 = vmatprep.mubr.bf16.mxu0 0
      %832 = vmatmul.mubr.bf16.gmra.mrb[0].mxu0 %v712
      %v833 = vpop.f32.mrb[0].mxu0
      %v834 = vadd.f32 0.0, %v833
      %v835 = vpop.f32.mrb[0].mxu0
      %v836 = vpop.f32.mrb[0].mxu0
      %v837 = vadd.f32 0.0, %v836
      %v838 = vpop.f32.mrb[0].mxu0
      %839 = vmatprep.mubr.bf16.mxu0 0
      %840 = vmatmul.mubr.bf16.gmra.mrb[0].mxu0 %v713
      %v841 = vpop.f32.mrb[0].mxu0
      %v842 = vadd.f32 0.0, %v841
      %v843 = vpop.f32.mrb[0].mxu0
      %v844 = vpop.f32.mrb[0].mxu0
      %v845 = vadd.f32 0.0, %v844
      %v846 = vpop.f32.mrb[0].mxu0
      %847 = vmatprep.mubr.bf16.mxu0 0
      %848 = vmatmul.mubr.bf16.gmra.mrb[0].mxu0 %v714
      %v849 = vpop.f32.mrb[0].mxu0
      %v850 = vadd.f32 0.0, %v849
      %v851 = vpop.f32.mrb[0].mxu0
      %v852 = vpop.f32.mrb[0].mxu0
      %v853 = vadd.f32 0.0, %v852
      %v854 = vpop.f32.mrb[0].mxu0
      %855 = vmatprep.mubr.bf16.mxu0 0
      %856 = vmatmul.mubr.bf16.gmra.mrb[0].mxu0 %v715
      %v857 = vpop.f32.mrb[0].mxu0
      %v858 = vadd.f32 0.0, %v857
      %v859 = vpop.f32.mrb[0].mxu0
      %v860 = vpop.f32.mrb[0].mxu0
      %v861 = vadd.f32 0.0, %v860
      %v862 = vpop.f32.mrb[0].mxu0
      %863 = vmatprep.mubr.bf16.mxu0 0
      %864 = vmatmul.mubr.bf16.gmra.mrb[0].mxu0 %v716
      %v865 = vpop.f32.mrb[0].mxu0
      %v866 = vadd.f32 0.0, %v865
      %v867 = vpop.f32.mrb[0].mxu0
      %v868 = vpop.f32.mrb[0].mxu0
      %v869 = vadd.f32 0.0, %v868
      %v870 = vpop.f32.mrb[0].mxu0
      %871 = vmatprep.mubr.bf16.mxu0 0
      %872 = vmatmul.mubr.bf16.gmra.mrb[0].mxu0 %v717
      %v873 = vpop.f32.mrb[0].mxu0
      %v874 = vadd.f32 0.0, %v873
      %v875 = vpop.f32.mrb[0].mxu0
      %v876 = vpop.f32.mrb[0].mxu0
      %v877 = vadd.f32 0.0, %v876
      %v878 = vpop.f32.mrb[0].mxu0
      %879 = vmatprep.mubr.bf16.mxu0 0
      %880 = vmatmul.mubr.bf16.gmra.mrb[0].mxu0 %v718
      %v881 = vpop.f32.mrb[0].mxu0
      %v882 = vadd.f32 0.0, %v881
      %v883 = vpop.f32.mrb[0].mxu0
      %v884 = vpop.f32.mrb[0].mxu0
      %v885 = vadd.f32 0.0, %v884
      %v886 = vpop.f32.mrb[0].mxu0
      %887 = vmatprep.mubr.bf16.mxu0 0
      %888 = vmatmul.mubr.bf16.gmra.mrb[0].mxu0 %v719
      %v889 = vpop.f32.mrb[0].mxu0
      %v890 = vadd.f32 0.0, %v889
      %v891 = vpop.f32.mrb[0].mxu0
      %v892 = vpop.f32.mrb[0].mxu0
      %v893 = vadd.f32 0.0, %v892
      %v894 = vpop.f32.mrb[0].mxu0
      %895 = vmatprep.mubr.bf16.mxu0 0
      %896 = vmatmul.mubr.bf16.gmra.mrb[0].mxu0 %v720
      %v897 = vpop.f32.mrb[0].mxu0
      %v898 = vadd.f32 0.0, %v897
      %v899 = vpop.f32.mrb[0].mxu0
      %v900 = vpop.f32.mrb[0].mxu0
      %v901 = vadd.f32 0.0, %v900
      %v902 = vpop.f32.mrb[0].mxu0
      %903 = vmatprep.mubr.bf16.mxu0 0
      %904 = vmatmul.mubr.bf16.gmra.mrb[0].mxu0 %v721
      %v905 = vpop.f32.mrb[0].mxu0
      %v906 = vadd.f32 0.0, %v905
      %v907 = vpop.f32.mrb[0].mxu0
      %v908 = vpop.f32.mrb[0].mxu0
      %v909 = vadd.f32 0.0, %v908
      %v910 = vpop.f32.mrb[0].mxu0
      %911 = vmatprep.mubr.bf16.mxu0 0
      %912 = vmatmul.mubr.bf16.gmra.mrb[0].mxu0 %v722
      %v913 = vpop.f32.mrb[0].mxu0
      %v914 = vadd.f32 0.0, %v913
      %v915 = vpop.f32.mrb[0].mxu0
      %v916 = vpop.f32.mrb[0].mxu0
      %v917 = vadd.f32 0.0, %v916
      %v918 = vpop.f32.mrb[0].mxu0
      %919 = vmatprep.mubr.bf16.mxu0 0
      %920 = vmatmul.mubr.bf16.gmra.mrb[0].mxu0 %v723
      %v921 = vpop.f32.mrb[0].mxu0
      %v922 = vadd.f32 0.0, %v921
      %v923 = vpop.f32.mrb[0].mxu0
      %v924 = vpop.f32.mrb[0].mxu0
      %v925 = vadd.f32 0.0, %v924
      %v926 = vpop.f32.mrb[0].mxu0
      %927 = vmatprep.mubr.bf16.mxu0 0
      %928 = vmatmul.mubr.bf16.gmra.mrb[0].mxu0 %v724
      %v929 = vpop.f32.mrb[0].mxu0
      %v930 = vadd.f32 0.0, %v929
      %v931 = vpop.f32.mrb[0].mxu0
      %v932 = vpop.f32.mrb[0].mxu0
      %v933 = vadd.f32 0.0, %v932
      %v934 = vpop.f32.mrb[0].mxu0
      %935 = vmatprep.mubr.bf16.mxu0 0
      %936 = vmatmul.mubr.bf16.gmra.mrb[0].mxu0 %v725
      %v937 = vpop.f32.mrb[0].mxu0
      %v938 = vadd.f32 0.0, %v937
      %v939 = vpop.f32.mrb[0].mxu0
      %v940 = vpop.f32.mrb[0].mxu0
      %v941 = vadd.f32 0.0, %v940
      %v942 = vpop.f32.mrb[0].mxu0
      %943 = vmatprep.mubr.bf16.mxu0 0
      %944 = vmatmul.mubr.bf16.gmra.mrb[0].mxu0 %v726
      %v945 = vpop.f32.mrb[0].mxu0
      %v946 = vadd.f32 0.0, %v945
      %v947 = vpop.f32.mrb[0].mxu0
      %v948 = vpop.f32.mrb[0].mxu0
      %v949 = vadd.f32 0.0, %v948
      %v950 = vpop.f32.mrb[0].mxu0
      %951 = vdwg.mxu0
      %952 = vst [vmem:[#allocation3] sm:$0xff] %v826
      %953 = vst [vmem:[#allocation3 + $0x8] sm:$0xff] %v829
      %954 = vst [vmem:[#allocation3 + $0x10] sm:$0xff] %v834
      %955 = vst [vmem:[#allocation3 + $0x18] sm:$0xff] %v837
      %956 = vst [vmem:[#allocation3 + $0x20] sm:$0xff] %v842
      %957 = vst [vmem:[#allocation3 + $0x28] sm:$0xff] %v845
      %958 = vst [vmem:[#allocation3 + $0x30] sm:$0xff] %v850
      %959 = vst [vmem:[#allocation3 + $0x38] sm:$0xff] %v853
      %960 = vst [vmem:[#allocation3 + $0x40] sm:$0xff] %v858
      %961 = vst [vmem:[#allocation3 + $0x48] sm:$0xff] %v861
      %962 = vst [vmem:[#allocation3 + $0x50] sm:$0xff] %v866
      %963 = vst [vmem:[#allocation3 + $0x58] sm:$0xff] %v869
      %964 = vst [vmem:[#allocation3 + $0x60] sm:$0xff] %v874
      %965 = vst [vmem:[#allocation3 + $0x68] sm:$0xff] %v877
      %966 = vst [vmem:[#allocation3 + $0x70] sm:$0xff] %v882
      %967 = vst [vmem:[#allocation3 + $0x78] sm:$0xff] %v885
      %968 = vst [vmem:[#allocation3 + $0x80] sm:$0xff] %v890
      %969 = vst [vmem:[#allocation3 + $0x88] sm:$0xff] %v893
      %970 = vst [vmem:[#allocation3 + $0x90] sm:$0xff] %v898
      %971 = vst [vmem:[#allocation3 + $0x98] sm:$0xff] %v901
      %972 = vst [vmem:[#allocation3 + $0xa0] sm:$0xff] %v906
      %973 = vst [vmem:[#allocation3 + $0xa8] sm:$0xff] %v909
      %974 = vst [vmem:[#allocation3 + $0xb0] sm:$0xff] %v914
      %975 = vst [vmem:[#allocation3 + $0xb8] sm:$0xff] %v917
      %976 = vst [vmem:[#allocation3 + $0xc0] sm:$0xff] %v922
      %977 = vst [vmem:[#allocation3 + $0xc8] sm:$0xff] %v925
      %978 = vst [vmem:[#allocation3 + $0xd0] sm:$0xff] %v930
      %979 = vst [vmem:[#allocation3 + $0xd8] sm:$0xff] %v933
      %980 = vst [vmem:[#allocation3 + $0xe0] sm:$0xff] %v938
      %981 = vst [vmem:[#allocation3 + $0xe8] sm:$0xff] %v941
      %982 = vst [vmem:[#allocation3 + $0xf0] sm:$0xff] %v946
      %983 = vst [vmem:[#allocation3 + $0xf8] sm:$0xff] %v949
      %v984 = vld [vmem:[#allocation2 + $0x1] sm:$0xff]
      %v985 = vld [vmem:[#allocation2 + $0x9] sm:$0xff]
      %v986 = vld [vmem:[#allocation2 + $0x19] sm:$0xff]
      %v987 = vld [vmem:[#allocation2 + $0x21] sm:$0xff]
      %v988 = vld [vmem:[#allocation2 + $0x31] sm:$0xff]
      %v989 = vld [vmem:[#allocation2 + $0x39] sm:$0xff]
      %v990 = vld [vmem:[#allocation2 + $0x49] sm:$0xff]
      %v991 = vld [vmem:[#allocation2 + $0x51] sm:$0xff]
      %v992 = vld [vmem:[#allocation2 + $0x61] sm:$0xff]
      %v993 = vld [vmem:[#allocation2 + $0x69] sm:$0xff]
      %v994 = vld [vmem:[#allocation2 + $0x79] sm:$0xff]
      %v995 = vld [vmem:[#allocation2 + $0x81] sm:$0xff]
      %v996 = vld [vmem:[#allocation2 + $0x91] sm:$0xff]
      %v997 = vld [vmem:[#allocation2 + $0x99] sm:$0xff]
      %v998 = vld [vmem:[#allocation2 + $0xa9] sm:$0xff]
      %v999 = vld [vmem:[#allocation2 + $0xb1] sm:$0xff]
      %v1000 = vld [vmem:[#allocation2 + $0xc1] sm:$0xff]
      %v1001 = vld [vmem:[#allocation2 + $0xc9] sm:$0xff]
      %v1002 = vld [vmem:[#allocation2 + $0xd9] sm:$0xff]
      %v1003 = vld [vmem:[#allocation2 + $0xe1] sm:$0xff]
      %v1004 = vld [vmem:[#allocation2 + $0xf1] sm:$0xff]
      %v1005 = vld [vmem:[#allocation2 + $0xf9] sm:$0xff]
      %v1006 = vld [vmem:[#allocation2 + $0x109] sm:$0xff]
      %v1007 = vld [vmem:[#allocation2 + $0x111] sm:$0xff]
      %v1008 = vld [vmem:[#allocation2 + $0x121] sm:$0xff]
      %v1009 = vld [vmem:[#allocation2 + $0x129] sm:$0xff]
      %v1010 = vld [vmem:[#allocation2 + $0x139] sm:$0xff]
      %v1011 = vld [vmem:[#allocation2 + $0x141] sm:$0xff]
      %v1012 = vld [vmem:[#allocation2 + $0x151] sm:$0xff]
      %v1013 = vld [vmem:[#allocation2 + $0x159] sm:$0xff]
      %v1014 = vld [vmem:[#allocation2 + $0x169] sm:$0xff]
      %v1015 = vld [vmem:[#allocation2 + $0x171] sm:$0xff]
      %v1016 = vpack.c.bf16 %v985, %v984
      %v1017 = vpack.c.bf16 %v987, %v986
      %v1018 = vpack.c.bf16 %v989, %v988
      %v1019 = vpack.c.bf16 %v991, %v990
      %v1020 = vpack.c.bf16 %v993, %v992
      %v1021 = vpack.c.bf16 %v995, %v994
      %v1022 = vpack.c.bf16 %v997, %v996
      %v1023 = vpack.c.bf16 %v999, %v998
      %v1024 = vpack.c.bf16 %v1001, %v1000
      %v1025 = vpack.c.bf16 %v1003, %v1002
      %v1026 = vpack.c.bf16 %v1005, %v1004
      %v1027 = vpack.c.bf16 %v1007, %v1006
      %v1028 = vpack.c.bf16 %v1009, %v1008
      %v1029 = vpack.c.bf16 %v1011, %v1010
      %v1030 = vpack.c.bf16 %v1013, %v1012
      %v1031 = vpack.c.bf16 %v1015, %v1014
      %s1032 = scalar_lea.vmem %s3, 64
      %v1033 = vld [vmem:[%s1032] sm:$0xf]
      %v1034 = vld [vmem:[%s1032 + $0x4] sm:$0xf]
      %v1035 = vld [vmem:[%s1032 + $0x8] sm:$0xf]
      %v1036 = vld [vmem:[%s1032 + $0xc] sm:$0xf]
      %v1037 = vld [vmem:[%s1032 + $0x10] sm:$0xf]
      %v1038 = vld [vmem:[%s1032 + $0x14] sm:$0xf]
      %v1039 = vld [vmem:[%s1032 + $0x18] sm:$0xf]
      %v1040 = vld [vmem:[%s1032 + $0x1c] sm:$0xf]
      %v1041 = vld [vmem:[%s1032 + $0x20] sm:$0xf]
      %v1042 = vld [vmem:[%s1032 + $0x24] sm:$0xf]
      %v1043 = vld [vmem:[%s1032 + $0x28] sm:$0xf]
      %v1044 = vld [vmem:[%s1032 + $0x2c] sm:$0xf]
      %v1045 = vld [vmem:[%s1032 + $0x30] sm:$0xf]
      %v1046 = vld [vmem:[%s1032 + $0x34] sm:$0xf]
      %v1047 = vld [vmem:[%s1032 + $0x38] sm:$0xf]
      %v1048 = vld [vmem:[%s1032 + $0x3c] sm:$0xf]
      %v1065 = vunpack.c.l.b16 %v1033
      %v1066 = vunpack.c.l.b16 %v1034
      %v1067 = vunpack.c.l.b16 %v1035
      %v1068 = vunpack.c.l.b16 %v1036
      %v1069 = vunpack.c.l.b16 %v1037
      %v1070 = vunpack.c.l.b16 %v1038
      %v1071 = vunpack.c.l.b16 %v1039
      %v1072 = vunpack.c.l.b16 %v1040
      %v1073 = vunpack.c.l.b16 %v1041
      %v1074 = vunpack.c.l.b16 %v1042
      %v1075 = vunpack.c.l.b16 %v1043
      %v1076 = vunpack.c.l.b16 %v1044
      %v1077 = vunpack.c.l.b16 %v1045
      %v1078 = vunpack.c.l.b16 %v1046
      %v1079 = vunpack.c.l.b16 %v1047
      %v1080 = vunpack.c.l.b16 %v1048
      %v1081 = vpack.c.b16 %v1066, %v1065
      %v1082 = vpack.c.b16 %v1068, %v1067
      %v1083 = vpack.c.b16 %v1070, %v1069
      %v1084 = vpack.c.b16 %v1072, %v1071
      %v1085 = vpack.c.b16 %v1074, %v1073
      %v1086 = vpack.c.b16 %v1076, %v1075
      %v1087 = vpack.c.b16 %v1078, %v1077
      %v1088 = vpack.c.b16 %v1080, %v1079
      %1097 = vmatprep.subr.bf16.mxu0 0
      %1098 = vmatpush1.bf16.msra.mxu0 %v1081
      %1099 = vmatprep.subr.bf16.mxu0 0
      %1100 = vmatpush1.bf16.msra.mxu0 %v1082
      %1101 = vmatprep.subr.bf16.mxu0 0
      %1102 = vmatpush1.bf16.msra.mxu0 %v1083
      %1103 = vmatprep.subr.bf16.mxu0 0
      %1104 = vmatpush1.bf16.msra.mxu0 %v1084
      %1105 = vmatprep.subr.bf16.mxu0 0
      %1106 = vmatpush1.bf16.msra.mxu0 %v1085
      %1107 = vmatprep.subr.bf16.mxu0 0
      %1108 = vmatpush1.bf16.msra.mxu0 %v1086
      %1109 = vmatprep.subr.bf16.mxu0 0
      %1110 = vmatpush1.bf16.msra.mxu0 %v1087
      %1111 = vmatprep.subr.bf16.mxu0 0
      %1112 = vmatpush1.bf16.msra.mxu0 %v1088
      %1113 = vmatprep.subr.bf16.mxu0 0
      %1114 = vmatpush1.bf16.msra.mxu0 0
      %1115 = vmatprep.subr.bf16.mxu0 0
      %1116 = vmatpush1.bf16.msra.mxu0 0
      %1117 = vmatprep.subr.bf16.mxu0 0
      %1118 = vmatpush1.bf16.msra.mxu0 0
      %1119 = vmatprep.subr.bf16.mxu0 0
      %1120 = vmatpush1.bf16.msra.mxu0 0
      %1121 = vmatprep.subr.bf16.mxu0 0
      %1122 = vmatpush1.bf16.msra.mxu0 0
      %1123 = vmatprep.subr.bf16.mxu0 0
      %1124 = vmatpush1.bf16.msra.mxu0 0
      %1125 = vmatprep.subr.bf16.mxu0 0
      %1126 = vmatpush1.bf16.msra.mxu0 0
      %1127 = vmatprep.subr.bf16.mxu0 0
      %1128 = vmatpush1.bf16.msra.mxu0 0
      %1129 = vmatprep.mubr.bf16.mxu0 0
      %1130 = vmatmul.mubr.bf16.gmra.mrb[0].mxu0 %v1016
      %v1131 = vpop.f32.mrb[0].mxu0
      %v1132 = vadd.f32 0.0, %v1131
      %v1133 = vpop.f32.mrb[0].mxu0
      %v1134 = vpop.f32.mrb[0].mxu0
      %v1135 = vadd.f32 0.0, %v1134
      %v1136 = vpop.f32.mrb[0].mxu0
      %1137 = vmatprep.mubr.bf16.mxu0 0
      %1138 = vmatmul.mubr.bf16.gmra.mrb[0].mxu0 %v1017
      %v1139 = vpop.f32.mrb[0].mxu0
      %v1140 = vadd.f32 0.0, %v1139
      %v1141 = vpop.f32.mrb[0].mxu0
      %v1142 = vpop.f32.mrb[0].mxu0
      %v1143 = vadd.f32 0.0, %v1142
      %v1144 = vpop.f32.mrb[0].mxu0
      %1145 = vmatprep.mubr.bf16.mxu0 0
      %1146 = vmatmul.mubr.bf16.gmra.mrb[0].mxu0 %v1018
      %v1147 = vpop.f32.mrb[0].mxu0
      %v1148 = vadd.f32 0.0, %v1147
      %v1149 = vpop.f32.mrb[0].mxu0
      %v1150 = vpop.f32.mrb[0].mxu0
      %v1151 = vadd.f32 0.0, %v1150
      %v1152 = vpop.f32.mrb[0].mxu0
      %1153 = vmatprep.mubr.bf16.mxu0 0
      %1154 = vmatmul.mubr.bf16.gmra.mrb[0].mxu0 %v1019
      %v1155 = vpop.f32.mrb[0].mxu0
      %v1156 = vadd.f32 0.0, %v1155
      %v1157 = vpop.f32.mrb[0].mxu0
      %v1158 = vpop.f32.mrb[0].mxu0
      %v1159 = vadd.f32 0.0, %v1158
      %v1160 = vpop.f32.mrb[0].mxu0
      %1161 = vmatprep.mubr.bf16.mxu0 0
      %1162 = vmatmul.mubr.bf16.gmra.mrb[0].mxu0 %v1020
      %v1163 = vpop.f32.mrb[0].mxu0
      %v1164 = vadd.f32 0.0, %v1163
      %v1165 = vpop.f32.mrb[0].mxu0
      %v1166 = vpop.f32.mrb[0].mxu0
      %v1167 = vadd.f32 0.0, %v1166
      %v1168 = vpop.f32.mrb[0].mxu0
      %1169 = vmatprep.mubr.bf16.mxu0 0
      %1170 = vmatmul.mubr.bf16.gmra.mrb[0].mxu0 %v1021
      %v1171 = vpop.f32.mrb[0].mxu0
      %v1172 = vadd.f32 0.0, %v1171
      %v1173 = vpop.f32.mrb[0].mxu0
      %v1174 = vpop.f32.mrb[0].mxu0
      %v1175 = vadd.f32 0.0, %v1174
      %v1176 = vpop.f32.mrb[0].mxu0
      %1177 = vmatprep.mubr.bf16.mxu0 0
      %1178 = vmatmul.mubr.bf16.gmra.mrb[0].mxu0 %v1022
      %v1179 = vpop.f32.mrb[0].mxu0
      %v1180 = vadd.f32 0.0, %v1179
      %v1181 = vpop.f32.mrb[0].mxu0
      %v1182 = vpop.f32.mrb[0].mxu0
      %v1183 = vadd.f32 0.0, %v1182
      %v1184 = vpop.f32.mrb[0].mxu0
      %1185 = vmatprep.mubr.bf16.mxu0 0
      %1186 = vmatmul.mubr.bf16.gmra.mrb[0].mxu0 %v1023
      %v1187 = vpop.f32.mrb[0].mxu0
      %v1188 = vadd.f32 0.0, %v1187
      %v1189 = vpop.f32.mrb[0].mxu0
      %v1190 = vpop.f32.mrb[0].mxu0
      %v1191 = vadd.f32 0.0, %v1190
      %v1192 = vpop.f32.mrb[0].mxu0
      %1193 = vmatprep.mubr.bf16.mxu0 0
      %1194 = vmatmul.mubr.bf16.gmra.mrb[0].mxu0 %v1024
      %v1195 = vpop.f32.mrb[0].mxu0
      %v1196 = vadd.f32 0.0, %v1195
      %v1197 = vpop.f32.mrb[0].mxu0
      %v1198 = vpop.f32.mrb[0].mxu0
      %v1199 = vadd.f32 0.0, %v1198
      %v1200 = vpop.f32.mrb[0].mxu0
      %1201 = vmatprep.mubr.bf16.mxu0 0
      %1202 = vmatmul.mubr.bf16.gmra.mrb[0].mxu0 %v1025
      %v1203 = vpop.f32.mrb[0].mxu0
      %v1204 = vadd.f32 0.0, %v1203
      %v1205 = vpop.f32.mrb[0].mxu0
      %v1206 = vpop.f32.mrb[0].mxu0
      %v1207 = vadd.f32 0.0, %v1206
      %v1208 = vpop.f32.mrb[0].mxu0
      %1209 = vmatprep.mubr.bf16.mxu0 0
      %1210 = vmatmul.mubr.bf16.gmra.mrb[0].mxu0 %v1026
      %v1211 = vpop.f32.mrb[0].mxu0
      %v1212 = vadd.f32 0.0, %v1211
      %v1213 = vpop.f32.mrb[0].mxu0
      %v1214 = vpop.f32.mrb[0].mxu0
      %v1215 = vadd.f32 0.0, %v1214
      %v1216 = vpop.f32.mrb[0].mxu0
      %1217 = vmatprep.mubr.bf16.mxu0 0
      %1218 = vmatmul.mubr.bf16.gmra.mrb[0].mxu0 %v1027
      %v1219 = vpop.f32.mrb[0].mxu0
      %v1220 = vadd.f32 0.0, %v1219
      %v1221 = vpop.f32.mrb[0].mxu0
      %v1222 = vpop.f32.mrb[0].mxu0
      %v1223 = vadd.f32 0.0, %v1222
      %v1224 = vpop.f32.mrb[0].mxu0
      %1225 = vmatprep.mubr.bf16.mxu0 0
      %1226 = vmatmul.mubr.bf16.gmra.mrb[0].mxu0 %v1028
      %v1227 = vpop.f32.mrb[0].mxu0
      %v1228 = vadd.f32 0.0, %v1227
      %v1229 = vpop.f32.mrb[0].mxu0
      %v1230 = vpop.f32.mrb[0].mxu0
      %v1231 = vadd.f32 0.0, %v1230
      %v1232 = vpop.f32.mrb[0].mxu0
      %1233 = vmatprep.mubr.bf16.mxu0 0
      %1234 = vmatmul.mubr.bf16.gmra.mrb[0].mxu0 %v1029
      %v1235 = vpop.f32.mrb[0].mxu0
      %v1236 = vadd.f32 0.0, %v1235
      %v1237 = vpop.f32.mrb[0].mxu0
      %v1238 = vpop.f32.mrb[0].mxu0
      %v1239 = vadd.f32 0.0, %v1238
      %v1240 = vpop.f32.mrb[0].mxu0
      %1241 = vmatprep.mubr.bf16.mxu0 0
      %1242 = vmatmul.mubr.bf16.gmra.mrb[0].mxu0 %v1030
      %v1243 = vpop.f32.mrb[0].mxu0
      %v1244 = vadd.f32 0.0, %v1243
      %v1245 = vpop.f32.mrb[0].mxu0
      %v1246 = vpop.f32.mrb[0].mxu0
      %v1247 = vadd.f32 0.0, %v1246
      %v1248 = vpop.f32.mrb[0].mxu0
      %1249 = vmatprep.mubr.bf16.mxu0 0
      %1250 = vmatmul.mubr.bf16.gmra.mrb[0].mxu0 %v1031
      %v1251 = vpop.f32.mrb[0].mxu0
      %v1252 = vadd.f32 0.0, %v1251
      %v1253 = vpop.f32.mrb[0].mxu0
      %v1254 = vpop.f32.mrb[0].mxu0
      %v1255 = vadd.f32 0.0, %v1254
      %v1256 = vpop.f32.mrb[0].mxu0
      %1257 = vdwg.mxu0
      %v1258 = vld [vmem:[#allocation3] sm:$0xff]
      %v1259 = vld [vmem:[#allocation3 + $0x8] sm:$0xff]
      %v1260 = vld [vmem:[#allocation3 + $0x10] sm:$0xff]
      %v1261 = vld [vmem:[#allocation3 + $0x18] sm:$0xff]
      %v1262 = vld [vmem:[#allocation3 + $0x20] sm:$0xff]
      %v1263 = vld [vmem:[#allocation3 + $0x28] sm:$0xff]
      %v1264 = vld [vmem:[#allocation3 + $0x30] sm:$0xff]
      %v1265 = vld [vmem:[#allocation3 + $0x38] sm:$0xff]
      %v1266 = vld [vmem:[#allocation3 + $0x40] sm:$0xff]
      %v1267 = vld [vmem:[#allocation3 + $0x48] sm:$0xff]
      %v1268 = vld [vmem:[#allocation3 + $0x50] sm:$0xff]
      %v1269 = vld [vmem:[#allocation3 + $0x58] sm:$0xff]
      %v1270 = vld [vmem:[#allocation3 + $0x60] sm:$0xff]
      %v1271 = vld [vmem:[#allocation3 + $0x68] sm:$0xff]
      %v1272 = vld [vmem:[#allocation3 + $0x70] sm:$0xff]
      %v1273 = vld [vmem:[#allocation3 + $0x78] sm:$0xff]
      %v1274 = vld [vmem:[#allocation3 + $0x80] sm:$0xff]
      %v1275 = vld [vmem:[#allocation3 + $0x88] sm:$0xff]
      %v1276 = vld [vmem:[#allocation3 + $0x90] sm:$0xff]
      %v1277 = vld [vmem:[#allocation3 + $0x98] sm:$0xff]
      %v1278 = vld [vmem:[#allocation3 + $0xa0] sm:$0xff]
      %v1279 = vld [vmem:[#allocation3 + $0xa8] sm:$0xff]
      %v1280 = vld [vmem:[#allocation3 + $0xb0] sm:$0xff]
      %v1281 = vld [vmem:[#allocation3 + $0xb8] sm:$0xff]
      %v1282 = vld [vmem:[#allocation3 + $0xc0] sm:$0xff]
      %v1283 = vld [vmem:[#allocation3 + $0xc8] sm:$0xff]
      %v1284 = vld [vmem:[#allocation3 + $0xd0] sm:$0xff]
      %v1285 = vld [vmem:[#allocation3 + $0xd8] sm:$0xff]
      %v1286 = vld [vmem:[#allocation3 + $0xe0] sm:$0xff]
      %v1287 = vld [vmem:[#allocation3 + $0xe8] sm:$0xff]
      %v1288 = vld [vmem:[#allocation3 + $0xf0] sm:$0xff]
      %v1289 = vld [vmem:[#allocation3 + $0xf8] sm:$0xff]
      %v1290 = vadd.f32 %v1258, %v1132
      %v1291 = vadd.f32 %v1259, %v1135
      %v1292 = vadd.f32 %v1260, %v1140
      %v1293 = vadd.f32 %v1261, %v1143
      %v1294 = vadd.f32 %v1262, %v1148
      %v1295 = vadd.f32 %v1263, %v1151
      %v1296 = vadd.f32 %v1264, %v1156
      %v1297 = vadd.f32 %v1265, %v1159
      %v1298 = vadd.f32 %v1266, %v1164
      %v1299 = vadd.f32 %v1267, %v1167
      %v1300 = vadd.f32 %v1268, %v1172
      %v1301 = vadd.f32 %v1269, %v1175
      %v1302 = vadd.f32 %v1270, %v1180
      %v1303 = vadd.f32 %v1271, %v1183
      %v1304 = vadd.f32 %v1272, %v1188
      %v1305 = vadd.f32 %v1273, %v1191
      %v1306 = vadd.f32 %v1274, %v1196
      %v1307 = vadd.f32 %v1275, %v1199
      %v1308 = vadd.f32 %v1276, %v1204
      %v1309 = vadd.f32 %v1277, %v1207
      %v1310 = vadd.f32 %v1278, %v1212
      %v1311 = vadd.f32 %v1279, %v1215
      %v1312 = vadd.f32 %v1280, %v1220
      %v1313 = vadd.f32 %v1281, %v1223
      %v1314 = vadd.f32 %v1282, %v1228
      %v1315 = vadd.f32 %v1283, %v1231
      %v1316 = vadd.f32 %v1284, %v1236
      %v1317 = vadd.f32 %v1285, %v1239
      %v1318 = vadd.f32 %v1286, %v1244
      %v1319 = vadd.f32 %v1287, %v1247
      %v1320 = vadd.f32 %v1288, %v1252
      %v1321 = vadd.f32 %v1289, %v1255
      %1322 = vst [vmem:[#allocation3] sm:$0xff] %v1290
      %1323 = vst [vmem:[#allocation3 + $0x8] sm:$0xff] %v1291
      %1324 = vst [vmem:[#allocation3 + $0x10] sm:$0xff] %v1292
      %1325 = vst [vmem:[#allocation3 + $0x18] sm:$0xff] %v1293
      %1326 = vst [vmem:[#allocation3 + $0x20] sm:$0xff] %v1294
      %1327 = vst [vmem:[#allocation3 + $0x28] sm:$0xff] %v1295
      %1328 = vst [vmem:[#allocation3 + $0x30] sm:$0xff] %v1296
      %1329 = vst [vmem:[#allocation3 + $0x38] sm:$0xff] %v1297
      %1330 = vst [vmem:[#allocation3 + $0x40] sm:$0xff] %v1298
      %1331 = vst [vmem:[#allocation3 + $0x48] sm:$0xff] %v1299
      %1332 = vst [vmem:[#allocation3 + $0x50] sm:$0xff] %v1300
      %1333 = vst [vmem:[#allocation3 + $0x58] sm:$0xff] %v1301
      %1334 = vst [vmem:[#allocation3 + $0x60] sm:$0xff] %v1302
      %1335 = vst [vmem:[#allocation3 + $0x68] sm:$0xff] %v1303
      %1336 = vst [vmem:[#allocation3 + $0x70] sm:$0xff] %v1304
      %1337 = vst [vmem:[#allocation3 + $0x78] sm:$0xff] %v1305
      %1338 = vst [vmem:[#allocation3 + $0x80] sm:$0xff] %v1306
      %1339 = vst [vmem:[#allocation3 + $0x88] sm:$0xff] %v1307
      %1340 = vst [vmem:[#allocation3 + $0x90] sm:$0xff] %v1308
      %1341 = vst [vmem:[#allocation3 + $0x98] sm:$0xff] %v1309
      %1342 = vst [vmem:[#allocation3 + $0xa0] sm:$0xff] %v1310
      %1343 = vst [vmem:[#allocation3 + $0xa8] sm:$0xff] %v1311
      %1344 = vst [vmem:[#allocation3 + $0xb0] sm:$0xff] %v1312
      %1345 = vst [vmem:[#allocation3 + $0xb8] sm:$0xff] %v1313
      %1346 = vst [vmem:[#allocation3 + $0xc0] sm:$0xff] %v1314
      %1347 = vst [vmem:[#allocation3 + $0xc8] sm:$0xff] %v1315
      %1348 = vst [vmem:[#allocation3 + $0xd0] sm:$0xff] %v1316
      %1349 = vst [vmem:[#allocation3 + $0xd8] sm:$0xff] %v1317
      %1350 = vst [vmem:[#allocation3 + $0xe0] sm:$0xff] %v1318
      %1351 = vst [vmem:[#allocation3 + $0xe8] sm:$0xff] %v1319
      %1352 = vst [vmem:[#allocation3 + $0xf0] sm:$0xff] %v1320
      %1353 = vst [vmem:[#allocation3 + $0xf8] sm:$0xff] %v1321
      %v1354 = vld [vmem:[#allocation2 + $0x2] sm:$0xff]
      %v1355 = vld [vmem:[#allocation2 + $0xa] sm:$0xff]
      %v1356 = vld [vmem:[#allocation2 + $0x1a] sm:$0xff]
      %v1357 = vld [vmem:[#allocation2 + $0x22] sm:$0xff]
      %v1358 = vld [vmem:[#allocation2 + $0x32] sm:$0xff]
      %v1359 = vld [vmem:[#allocation2 + $0x3a] sm:$0xff]
      %v1360 = vld [vmem:[#allocation2 + $0x4a] sm:$0xff]
      %v1361 = vld [vmem:[#allocation2 + $0x52] sm:$0xff]
      %v1362 = vld [vmem:[#allocation2 + $0x62] sm:$0xff]
      %v1363 = vld [vmem:[#allocation2 + $0x6a] sm:$0xff]
      %v1364 = vld [vmem:[#allocation2 + $0x7a] sm:$0xff]
      %v1365 = vld [vmem:[#allocation2 + $0x82] sm:$0xff]
      %v1366 = vld [vmem:[#allocation2 + $0x92] sm:$0xff]
      %v1367 = vld [vmem:[#allocation2 + $0x9a] sm:$0xff]
      %v1368 = vld [vmem:[#allocation2 + $0xaa] sm:$0xff]
      %v1369 = vld [vmem:[#allocation2 + $0xb2] sm:$0xff]
      %v1370 = vld [vmem:[#allocation2 + $0xc2] sm:$0xff]
      %v1371 = vld [vmem:[#allocation2 + $0xca] sm:$0xff]
      %v1372 = vld [vmem:[#allocation2 + $0xda] sm:$0xff]
      %v1373 = vld [vmem:[#allocation2 + $0xe2] sm:$0xff]
      %v1374 = vld [vmem:[#allocation2 + $0xf2] sm:$0xff]
      %v1375 = vld [vmem:[#allocation2 + $0xfa] sm:$0xff]
      %v1376 = vld [vmem:[#allocation2 + $0x10a] sm:$0xff]
      %v1377 = vld [vmem:[#allocation2 + $0x112] sm:$0xff]
      %v1378 = vld [vmem:[#allocation2 + $0x122] sm:$0xff]
      %v1379 = vld [vmem:[#allocation2 + $0x12a] sm:$0xff]
      %v1380 = vld [vmem:[#allocation2 + $0x13a] sm:$0xff]
      %v1381 = vld [vmem:[#allocation2 + $0x142] sm:$0xff]
      %v1382 = vld [vmem:[#allocation2 + $0x152] sm:$0xff]
      %v1383 = vld [vmem:[#allocation2 + $0x15a] sm:$0xff]
      %v1384 = vld [vmem:[#allocation2 + $0x16a] sm:$0xff]
      %v1385 = vld [vmem:[#allocation2 + $0x172] sm:$0xff]
      %v1386 = vpack.c.bf16 %v1355, %v1354
      %v1387 = vpack.c.bf16 %v1357, %v1356
      %v1388 = vpack.c.bf16 %v1359, %v1358
      %v1389 = vpack.c.bf16 %v1361, %v1360
      %v1390 = vpack.c.bf16 %v1363, %v1362
      %v1391 = vpack.c.bf16 %v1365, %v1364
      %v1392 = vpack.c.bf16 %v1367, %v1366
      %v1393 = vpack.c.bf16 %v1369, %v1368
      %v1394 = vpack.c.bf16 %v1371, %v1370
      %v1395 = vpack.c.bf16 %v1373, %v1372
      %v1396 = vpack.c.bf16 %v1375, %v1374
      %v1397 = vpack.c.bf16 %v1377, %v1376
      %v1398 = vpack.c.bf16 %v1379, %v1378
      %v1399 = vpack.c.bf16 %v1381, %v1380
      %v1400 = vpack.c.bf16 %v1383, %v1382
      %v1401 = vpack.c.bf16 %v1385, %v1384
      %s1402 = scalar_lea.vmem %s3, 128
      %v1403 = vld [vmem:[%s1402] sm:$0xf]
      %v1404 = vld [vmem:[%s1402 + $0x4] sm:$0xf]
      %v1405 = vld [vmem:[%s1402 + $0x8] sm:$0xf]
      %v1406 = vld [vmem:[%s1402 + $0xc] sm:$0xf]
      %v1407 = vld [vmem:[%s1402 + $0x10] sm:$0xf]
      %v1408 = vld [vmem:[%s1402 + $0x14] sm:$0xf]
      %v1409 = vld [vmem:[%s1402 + $0x18] sm:$0xf]
      %v1410 = vld [vmem:[%s1402 + $0x1c] sm:$0xf]
      %v1411 = vld [vmem:[%s1402 + $0x20] sm:$0xf]
      %v1412 = vld [vmem:[%s1402 + $0x24] sm:$0xf]
      %v1413 = vld [vmem:[%s1402 + $0x28] sm:$0xf]
      %v1414 = vld [vmem:[%s1402 + $0x2c] sm:$0xf]
      %v1415 = vld [vmem:[%s1402 + $0x30] sm:$0xf]
      %v1416 = vld [vmem:[%s1402 + $0x34] sm:$0xf]
      %v1417 = vld [vmem:[%s1402 + $0x38] sm:$0xf]
      %v1418 = vld [vmem:[%s1402 + $0x3c] sm:$0xf]
      %v1435 = vunpack.c.l.b16 %v1403
      %v1436 = vunpack.c.l.b16 %v1404
      %v1437 = vunpack.c.l.b16 %v1405
      %v1438 = vunpack.c.l.b16 %v1406
      %v1439 = vunpack.c.l.b16 %v1407
      %v1440 = vunpack.c.l.b16 %v1408
      %v1441 = vunpack.c.l.b16 %v1409
      %v1442 = vunpack.c.l.b16 %v1410
      %v1443 = vunpack.c.l.b16 %v1411
      %v1444 = vunpack.c.l.b16 %v1412
      %v1445 = vunpack.c.l.b16 %v1413
      %v1446 = vunpack.c.l.b16 %v1414
      %v1447 = vunpack.c.l.b16 %v1415
      %v1448 = vunpack.c.l.b16 %v1416
      %v1449 = vunpack.c.l.b16 %v1417
      %v1450 = vunpack.c.l.b16 %v1418
      %v1451 = vpack.c.b16 %v1436, %v1435
      %v1452 = vpack.c.b16 %v1438, %v1437
      %v1453 = vpack.c.b16 %v1440, %v1439
      %v1454 = vpack.c.b16 %v1442, %v1441
      %v1455 = vpack.c.b16 %v1444, %v1443
      %v1456 = vpack.c.b16 %v1446, %v1445
      %v1457 = vpack.c.b16 %v1448, %v1447
      %v1458 = vpack.c.b16 %v1450, %v1449
      %1467 = vmatprep.subr.bf16.mxu0 0
      %1468 = vmatpush1.bf16.msra.mxu0 %v1451
      %1469 = vmatprep.subr.bf16.mxu0 0
      %1470 = vmatpush1.bf16.msra.mxu0 %v1452
      %1471 = vmatprep.subr.bf16.mxu0 0
      %1472 = vmatpush1.bf16.msra.mxu0 %v1453
      %1473 = vmatprep.subr.bf16.mxu0 0
      %1474 = vmatpush1.bf16.msra.mxu0 %v1454
      %1475 = vmatprep.subr.bf16.mxu0 0
      %1476 = vmatpush1.bf16.msra.mxu0 %v1455
      %1477 = vmatprep.subr.bf16.mxu0 0
      %1478 = vmatpush1.bf16.msra.mxu0 %v1456
      %1479 = vmatprep.subr.bf16.mxu0 0
      %1480 = vmatpush1.bf16.msra.mxu0 %v1457
      %1481 = vmatprep.subr.bf16.mxu0 0
      %1482 = vmatpush1.bf16.msra.mxu0 %v1458
      %1483 = vmatprep.subr.bf16.mxu0 0
      %1484 = vmatpush1.bf16.msra.mxu0 0
      %1485 = vmatprep.subr.bf16.mxu0 0
      %1486 = vmatpush1.bf16.msra.mxu0 0
      %1487 = vmatprep.subr.bf16.mxu0 0
      %1488 = vmatpush1.bf16.msra.mxu0 0
      %1489 = vmatprep.subr.bf16.mxu0 0
      %1490 = vmatpush1.bf16.msra.mxu0 0
      %1491 = vmatprep.subr.bf16.mxu0 0
      %1492 = vmatpush1.bf16.msra.mxu0 0
      %1493 = vmatprep.subr.bf16.mxu0 0
      %1494 = vmatpush1.bf16.msra.mxu0 0
      %1495 = vmatprep.subr.bf16.mxu0 0
      %1496 = vmatpush1.bf16.msra.mxu0 0
      %1497 = vmatprep.subr.bf16.mxu0 0
      %1498 = vmatpush1.bf16.msra.mxu0 0
      %1499 = vmatprep.mubr.bf16.mxu0 0
      %1500 = vmatmul.mubr.bf16.gmra.mrb[0].mxu0 %v1386
      %v1501 = vpop.f32.mrb[0].mxu0
      %v1502 = vadd.f32 0.0, %v1501
      %v1503 = vpop.f32.mrb[0].mxu0
      %v1504 = vpop.f32.mrb[0].mxu0
      %v1505 = vadd.f32 0.0, %v1504
      %v1506 = vpop.f32.mrb[0].mxu0
      %1507 = vmatprep.mubr.bf16.mxu0 0
      %1508 = vmatmul.mubr.bf16.gmra.mrb[0].mxu0 %v1387
      %v1509 = vpop.f32.mrb[0].mxu0
      %v1510 = vadd.f32 0.0, %v1509
      %v1511 = vpop.f32.mrb[0].mxu0
      %v1512 = vpop.f32.mrb[0].mxu0
      %v1513 = vadd.f32 0.0, %v1512
      %v1514 = vpop.f32.mrb[0].mxu0
      %1515 = vmatprep.mubr.bf16.mxu0 0
      %1516 = vmatmul.mubr.bf16.gmra.mrb[0].mxu0 %v1388
      %v1517 = vpop.f32.mrb[0].mxu0
      %v1518 = vadd.f32 0.0, %v1517
      %v1519 = vpop.f32.mrb[0].mxu0
      %v1520 = vpop.f32.mrb[0].mxu0
      %v1521 = vadd.f32 0.0, %v1520
      %v1522 = vpop.f32.mrb[0].mxu0
      %1523 = vmatprep.mubr.bf16.mxu0 0
      %1524 = vmatmul.mubr.bf16.gmra.mrb[0].mxu0 %v1389
      %v1525 = vpop.f32.mrb[0].mxu0
      %v1526 = vadd.f32 0.0, %v1525
      %v1527 = vpop.f32.mrb[0].mxu0
      %v1528 = vpop.f32.mrb[0].mxu0
      %v1529 = vadd.f32 0.0, %v1528
      %v1530 = vpop.f32.mrb[0].mxu0
      %1531 = vmatprep.mubr.bf16.mxu0 0
      %1532 = vmatmul.mubr.bf16.gmra.mrb[0].mxu0 %v1390
      %v1533 = vpop.f32.mrb[0].mxu0
      %v1534 = vadd.f32 0.0, %v1533
      %v1535 = vpop.f32.mrb[0].mxu0
      %v1536 = vpop.f32.mrb[0].mxu0
      %v1537 = vadd.f32 0.0, %v1536
      %v1538 = vpop.f32.mrb[0].mxu0
      %1539 = vmatprep.mubr.bf16.mxu0 0
      %1540 = vmatmul.mubr.bf16.gmra.mrb[0].mxu0 %v1391
      %v1541 = vpop.f32.mrb[0].mxu0
      %v1542 = vadd.f32 0.0, %v1541
      %v1543 = vpop.f32.mrb[0].mxu0
      %v1544 = vpop.f32.mrb[0].mxu0
      %v1545 = vadd.f32 0.0, %v1544
      %v1546 = vpop.f32.mrb[0].mxu0
      %1547 = vmatprep.mubr.bf16.mxu0 0
      %1548 = vmatmul.mubr.bf16.gmra.mrb[0].mxu0 %v1392
      %v1549 = vpop.f32.mrb[0].mxu0
      %v1550 = vadd.f32 0.0, %v1549
      %v1551 = vpop.f32.mrb[0].mxu0
      %v1552 = vpop.f32.mrb[0].mxu0
      %v1553 = vadd.f32 0.0, %v1552
      %v1554 = vpop.f32.mrb[0].mxu0
      %1555 = vmatprep.mubr.bf16.mxu0 0
      %1556 = vmatmul.mubr.bf16.gmra.mrb[0].mxu0 %v1393
      %v1557 = vpop.f32.mrb[0].mxu0
      %v1558 = vadd.f32 0.0, %v1557
      %v1559 = vpop.f32.mrb[0].mxu0
      %v1560 = vpop.f32.mrb[0].mxu0
      %v1561 = vadd.f32 0.0, %v1560
      %v1562 = vpop.f32.mrb[0].mxu0
      %1563 = vmatprep.mubr.bf16.mxu0 0
      %1564 = vmatmul.mubr.bf16.gmra.mrb[0].mxu0 %v1394
      %v1565 = vpop.f32.mrb[0].mxu0
      %v1566 = vadd.f32 0.0, %v1565
      %v1567 = vpop.f32.mrb[0].mxu0
      %v1568 = vpop.f32.mrb[0].mxu0
      %v1569 = vadd.f32 0.0, %v1568
      %v1570 = vpop.f32.mrb[0].mxu0
      %1571 = vmatprep.mubr.bf16.mxu0 0
      %1572 = vmatmul.mubr.bf16.gmra.mrb[0].mxu0 %v1395
      %v1573 = vpop.f32.mrb[0].mxu0
      %v1574 = vadd.f32 0.0, %v1573
      %v1575 = vpop.f32.mrb[0].mxu0
      %v1576 = vpop.f32.mrb[0].mxu0
      %v1577 = vadd.f32 0.0, %v1576
      %v1578 = vpop.f32.mrb[0].mxu0
      %1579 = vmatprep.mubr.bf16.mxu0 0
      %1580 = vmatmul.mubr.bf16.gmra.mrb[0].mxu0 %v1396
      %v1581 = vpop.f32.mrb[0].mxu0
      %v1582 = vadd.f32 0.0, %v1581
      %v1583 = vpop.f32.mrb[0].mxu0
      %v1584 = vpop.f32.mrb[0].mxu0
      %v1585 = vadd.f32 0.0, %v1584
      %v1586 = vpop.f32.mrb[0].mxu0
      %1587 = vmatprep.mubr.bf16.mxu0 0
      %1588 = vmatmul.mubr.bf16.gmra.mrb[0].mxu0 %v1397
      %v1589 = vpop.f32.mrb[0].mxu0
      %v1590 = vadd.f32 0.0, %v1589
      %v1591 = vpop.f32.mrb[0].mxu0
      %v1592 = vpop.f32.mrb[0].mxu0
      %v1593 = vadd.f32 0.0, %v1592
      %v1594 = vpop.f32.mrb[0].mxu0
      %1595 = vmatprep.mubr.bf16.mxu0 0
      %1596 = vmatmul.mubr.bf16.gmra.mrb[0].mxu0 %v1398
      %v1597 = vpop.f32.mrb[0].mxu0
      %v1598 = vadd.f32 0.0, %v1597
      %v1599 = vpop.f32.mrb[0].mxu0
      %v1600 = vpop.f32.mrb[0].mxu0
      %v1601 = vadd.f32 0.0, %v1600
      %v1602 = vpop.f32.mrb[0].mxu0
      %1603 = vmatprep.mubr.bf16.mxu0 0
      %1604 = vmatmul.mubr.bf16.gmra.mrb[0].mxu0 %v1399
      %v1605 = vpop.f32.mrb[0].mxu0
      %v1606 = vadd.f32 0.0, %v1605
      %v1607 = vpop.f32.mrb[0].mxu0
      %v1608 = vpop.f32.mrb[0].mxu0
      %v1609 = vadd.f32 0.0, %v1608
      %v1610 = vpop.f32.mrb[0].mxu0
      %1611 = vmatprep.mubr.bf16.mxu0 0
      %1612 = vmatmul.mubr.bf16.gmra.mrb[0].mxu0 %v1400
      %v1613 = vpop.f32.mrb[0].mxu0
      %v1614 = vadd.f32 0.0, %v1613
      %v1615 = vpop.f32.mrb[0].mxu0
      %v1616 = vpop.f32.mrb[0].mxu0
      %v1617 = vadd.f32 0.0, %v1616
      %v1618 = vpop.f32.mrb[0].mxu0
      %1619 = vmatprep.mubr.bf16.mxu0 0
      %1620 = vmatmul.mubr.bf16.gmra.mrb[0].mxu0 %v1401
      %v1621 = vpop.f32.mrb[0].mxu0
      %v1622 = vadd.f32 0.0, %v1621
      %v1623 = vpop.f32.mrb[0].mxu0
      %v1624 = vpop.f32.mrb[0].mxu0
      %v1625 = vadd.f32 0.0, %v1624
      %v1626 = vpop.f32.mrb[0].mxu0
      %1627 = vdwg.mxu0
      %v1628 = vld [vmem:[#allocation3] sm:$0xff]
      %v1629 = vld [vmem:[#allocation3 + $0x8] sm:$0xff]
      %v1630 = vld [vmem:[#allocation3 + $0x10] sm:$0xff]
      %v1631 = vld [vmem:[#allocation3 + $0x18] sm:$0xff]
      %v1632 = vld [vmem:[#allocation3 + $0x20] sm:$0xff]
      %v1633 = vld [vmem:[#allocation3 + $0x28] sm:$0xff]
      %v1634 = vld [vmem:[#allocation3 + $0x30] sm:$0xff]
      %v1635 = vld [vmem:[#allocation3 + $0x38] sm:$0xff]
      %v1636 = vld [vmem:[#allocation3 + $0x40] sm:$0xff]
      %v1637 = vld [vmem:[#allocation3 + $0x48] sm:$0xff]
      %v1638 = vld [vmem:[#allocation3 + $0x50] sm:$0xff]
      %v1639 = vld [vmem:[#allocation3 + $0x58] sm:$0xff]
      %v1640 = vld [vmem:[#allocation3 + $0x60] sm:$0xff]
      %v1641 = vld [vmem:[#allocation3 + $0x68] sm:$0xff]
      %v1642 = vld [vmem:[#allocation3 + $0x70] sm:$0xff]
      %v1643 = vld [vmem:[#allocation3 + $0x78] sm:$0xff]
      %v1644 = vld [vmem:[#allocation3 + $0x80] sm:$0xff]
      %v1645 = vld [vmem:[#allocation3 + $0x88] sm:$0xff]
      %v1646 = vld [vmem:[#allocation3 + $0x90] sm:$0xff]
      %v1647 = vld [vmem:[#allocation3 + $0x98] sm:$0xff]
      %v1648 = vld [vmem:[#allocation3 + $0xa0] sm:$0xff]
      %v1649 = vld [vmem:[#allocation3 + $0xa8] sm:$0xff]
      %v1650 = vld [vmem:[#allocation3 + $0xb0] sm:$0xff]
      %v1651 = vld [vmem:[#allocation3 + $0xb8] sm:$0xff]
      %v1652 = vld [vmem:[#allocation3 + $0xc0] sm:$0xff]
      %v1653 = vld [vmem:[#allocation3 + $0xc8] sm:$0xff]
      %v1654 = vld [vmem:[#allocation3 + $0xd0] sm:$0xff]
      %v1655 = vld [vmem:[#allocation3 + $0xd8] sm:$0xff]
      %v1656 = vld [vmem:[#allocation3 + $0xe0] sm:$0xff]
      %v1657 = vld [vmem:[#allocation3 + $0xe8] sm:$0xff]
      %v1658 = vld [vmem:[#allocation3 + $0xf0] sm:$0xff]
      %v1659 = vld [vmem:[#allocation3 + $0xf8] sm:$0xff]
      %v1660 = vadd.f32 %v1628, %v1502
      %v1661 = vadd.f32 %v1629, %v1505
      %v1662 = vadd.f32 %v1630, %v1510
      %v1663 = vadd.f32 %v1631, %v1513
      %v1664 = vadd.f32 %v1632, %v1518
      %v1665 = vadd.f32 %v1633, %v1521
      %v1666 = vadd.f32 %v1634, %v1526
      %v1667 = vadd.f32 %v1635, %v1529
      %v1668 = vadd.f32 %v1636, %v1534
      %v1669 = vadd.f32 %v1637, %v1537
      %v1670 = vadd.f32 %v1638, %v1542
      %v1671 = vadd.f32 %v1639, %v1545
      %v1672 = vadd.f32 %v1640, %v1550
      %v1673 = vadd.f32 %v1641, %v1553
      %v1674 = vadd.f32 %v1642, %v1558
      %v1675 = vadd.f32 %v1643, %v1561
      %v1676 = vadd.f32 %v1644, %v1566
      %v1677 = vadd.f32 %v1645, %v1569
      %v1678 = vadd.f32 %v1646, %v1574
      %v1679 = vadd.f32 %v1647, %v1577
      %v1680 = vadd.f32 %v1648, %v1582
      %v1681 = vadd.f32 %v1649, %v1585
      %v1682 = vadd.f32 %v1650, %v1590
      %v1683 = vadd.f32 %v1651, %v1593
      %v1684 = vadd.f32 %v1652, %v1598
      %v1685 = vadd.f32 %v1653, %v1601
      %v1686 = vadd.f32 %v1654, %v1606
      %v1687 = vadd.f32 %v1655, %v1609
      %v1688 = vadd.f32 %v1656, %v1614
      %v1689 = vadd.f32 %v1657, %v1617
      %v1690 = vadd.f32 %v1658, %v1622
      %v1691 = vadd.f32 %v1659, %v1625
      %1692 = vst [vmem:[#allocation3] sm:$0xff] %v1660
      %1693 = vst [vmem:[#allocation3 + $0x8] sm:$0xff] %v1661
      %1694 = vst [vmem:[#allocation3 + $0x10] sm:$0xff] %v1662
      %1695 = vst [vmem:[#allocation3 + $0x18] sm:$0xff] %v1663
      %1696 = vst [vmem:[#allocation3 + $0x20] sm:$0xff] %v1664
      %1697 = vst [vmem:[#allocation3 + $0x28] sm:$0xff] %v1665
      %1698 = vst [vmem:[#allocation3 + $0x30] sm:$0xff] %v1666
      %1699 = vst [vmem:[#allocation3 + $0x38] sm:$0xff] %v1667
      %1700 = vst [vmem:[#allocation3 + $0x40] sm:$0xff] %v1668
      %1701 = vst [vmem:[#allocation3 + $0x48] sm:$0xff] %v1669
      %1702 = vst [vmem:[#allocation3 + $0x50] sm:$0xff] %v1670
      %1703 = vst [vmem:[#allocation3 + $0x58] sm:$0xff] %v1671
      %1704 = vst [vmem:[#allocation3 + $0x60] sm:$0xff] %v1672
      %1705 = vst [vmem:[#allocation3 + $0x68] sm:$0xff] %v1673
      %1706 = vst [vmem:[#allocation3 + $0x70] sm:$0xff] %v1674
      %1707 = vst [vmem:[#allocation3 + $0x78] sm:$0xff] %v1675
      %1708 = vst [vmem:[#allocation3 + $0x80] sm:$0xff] %v1676
      %1709 = vst [vmem:[#allocation3 + $0x88] sm:$0xff] %v1677
      %1710 = vst [vmem:[#allocation3 + $0x90] sm:$0xff] %v1678
      %1711 = vst [vmem:[#allocation3 + $0x98] sm:$0xff] %v1679
      %1712 = vst [vmem:[#allocation3 + $0xa0] sm:$0xff] %v1680
      %1713 = vst [vmem:[#allocation3 + $0xa8] sm:$0xff] %v1681
      %1714 = vst [vmem:[#allocation3 + $0xb0] sm:$0xff] %v1682
      %1715 = vst [vmem:[#allocation3 + $0xb8] sm:$0xff] %v1683
      %1716 = vst [vmem:[#allocation3 + $0xc0] sm:$0xff] %v1684
      %1717 = vst [vmem:[#allocation3 + $0xc8] sm:$0xff] %v1685
      %1718 = vst [vmem:[#allocation3 + $0xd0] sm:$0xff] %v1686
      %1719 = vst [vmem:[#allocation3 + $0xd8] sm:$0xff] %v1687
      %1720 = vst [vmem:[#allocation3 + $0xe0] sm:$0xff] %v1688
      %1721 = vst [vmem:[#allocation3 + $0xe8] sm:$0xff] %v1689
      %1722 = vst [vmem:[#allocation3 + $0xf0] sm:$0xff] %v1690
      %1723 = vst [vmem:[#allocation3 + $0xf8] sm:$0xff] %v1691
      %v1724 = vld [vmem:[%s646] sm:$0xff]
      %v1725 = vld [vmem:[%s646 + $0x8] sm:$0xff]
      %v1726 = vld [vmem:[%s646 + $0x18] sm:$0xff]
      %v1727 = vld [vmem:[%s646 + $0x20] sm:$0xff]
      %v1728 = vld [vmem:[%s646 + $0x30] sm:$0xff]
      %v1729 = vld [vmem:[%s646 + $0x38] sm:$0xff]
      %v1730 = vld [vmem:[%s646 + $0x48] sm:$0xff]
      %v1731 = vld [vmem:[%s646 + $0x50] sm:$0xff]
      %v1732 = vld [vmem:[%s646 + $0x60] sm:$0xff]
      %v1733 = vld [vmem:[%s646 + $0x68] sm:$0xff]
      %v1734 = vld [vmem:[%s646 + $0x78] sm:$0xff]
      %v1735 = vld [vmem:[%s646 + $0x80] sm:$0xff]
      %v1736 = vld [vmem:[%s646 + $0x90] sm:$0xff]
      %v1737 = vld [vmem:[%s646 + $0x98] sm:$0xff]
      %v1738 = vld [vmem:[%s646 + $0xa8] sm:$0xff]
      %v1739 = vld [vmem:[%s646 + $0xb0] sm:$0xff]
      %v1740 = vld [vmem:[%s646 + $0xc0] sm:$0xff]
      %v1741 = vld [vmem:[%s646 + $0xc8] sm:$0xff]
      %v1742 = vld [vmem:[%s646 + $0xd8] sm:$0xff]
      %v1743 = vld [vmem:[%s646 + $0xe0] sm:$0xff]
      %v1744 = vld [vmem:[%s646 + $0xf0] sm:$0xff]
      %v1745 = vld [vmem:[%s646 + $0xf8] sm:$0xff]
      %v1746 = vld [vmem:[%s646 + $0x108] sm:$0xff]
      %v1747 = vld [vmem:[%s646 + $0x110] sm:$0xff]
      %v1748 = vld [vmem:[%s646 + $0x120] sm:$0xff]
      %v1749 = vld [vmem:[%s646 + $0x128] sm:$0xff]
      %v1750 = vld [vmem:[%s646 + $0x138] sm:$0xff]
      %v1751 = vld [vmem:[%s646 + $0x140] sm:$0xff]
      %v1752 = vld [vmem:[%s646 + $0x150] sm:$0xff]
      %v1753 = vld [vmem:[%s646 + $0x158] sm:$0xff]
      %v1754 = vld [vmem:[%s646 + $0x168] sm:$0xff]
      %v1755 = vld [vmem:[%s646 + $0x170] sm:$0xff]
      %v1756 = vpack.c.bf16 %v1725, %v1724
      %v1757 = vpack.c.bf16 %v1727, %v1726
      %v1758 = vpack.c.bf16 %v1729, %v1728
      %v1759 = vpack.c.bf16 %v1731, %v1730
      %v1760 = vpack.c.bf16 %v1733, %v1732
      %v1761 = vpack.c.bf16 %v1735, %v1734
      %v1762 = vpack.c.bf16 %v1737, %v1736
      %v1763 = vpack.c.bf16 %v1739, %v1738
      %v1764 = vpack.c.bf16 %v1741, %v1740
      %v1765 = vpack.c.bf16 %v1743, %v1742
      %v1766 = vpack.c.bf16 %v1745, %v1744
      %v1767 = vpack.c.bf16 %v1747, %v1746
      %v1768 = vpack.c.bf16 %v1749, %v1748
      %v1769 = vpack.c.bf16 %v1751, %v1750
      %v1770 = vpack.c.bf16 %v1753, %v1752
      %v1771 = vpack.c.bf16 %v1755, %v1754
      %s1772 = scalar_lea.vmem %s3, 192
      %v1773 = vld [vmem:[%s1772] sm:$0xf]
      %v1774 = vld [vmem:[%s1772 + $0x4] sm:$0xf]
      %v1775 = vld [vmem:[%s1772 + $0x8] sm:$0xf]
      %v1776 = vld [vmem:[%s1772 + $0xc] sm:$0xf]
      %v1777 = vld [vmem:[%s1772 + $0x10] sm:$0xf]
      %v1778 = vld [vmem:[%s1772 + $0x14] sm:$0xf]
      %v1779 = vld [vmem:[%s1772 + $0x18] sm:$0xf]
      %v1780 = vld [vmem:[%s1772 + $0x1c] sm:$0xf]
      %v1781 = vld [vmem:[%s1772 + $0x20] sm:$0xf]
      %v1782 = vld [vmem:[%s1772 + $0x24] sm:$0xf]
      %v1783 = vld [vmem:[%s1772 + $0x28] sm:$0xf]
      %v1784 = vld [vmem:[%s1772 + $0x2c] sm:$0xf]
      %v1785 = vld [vmem:[%s1772 + $0x30] sm:$0xf]
      %v1786 = vld [vmem:[%s1772 + $0x34] sm:$0xf]
      %v1787 = vld [vmem:[%s1772 + $0x38] sm:$0xf]
      %v1788 = vld [vmem:[%s1772 + $0x3c] sm:$0xf]
      %v1805 = vunpack.c.l.b16 %v1773
      %v1806 = vunpack.c.l.b16 %v1774
      %v1807 = vunpack.c.l.b16 %v1775
      %v1808 = vunpack.c.l.b16 %v1776
      %v1809 = vunpack.c.l.b16 %v1777
      %v1810 = vunpack.c.l.b16 %v1778
      %v1811 = vunpack.c.l.b16 %v1779
      %v1812 = vunpack.c.l.b16 %v1780
      %v1813 = vunpack.c.l.b16 %v1781
      %v1814 = vunpack.c.l.b16 %v1782
      %v1815 = vunpack.c.l.b16 %v1783
      %v1816 = vunpack.c.l.b16 %v1784
      %v1817 = vunpack.c.l.b16 %v1785
      %v1818 = vunpack.c.l.b16 %v1786
      %v1819 = vunpack.c.l.b16 %v1787
      %v1820 = vunpack.c.l.b16 %v1788
      %v1821 = vpack.c.b16 %v1806, %v1805
      %v1822 = vpack.c.b16 %v1808, %v1807
      %v1823 = vpack.c.b16 %v1810, %v1809
      %v1824 = vpack.c.b16 %v1812, %v1811
      %v1825 = vpack.c.b16 %v1814, %v1813
      %v1826 = vpack.c.b16 %v1816, %v1815
      %v1827 = vpack.c.b16 %v1818, %v1817
      %v1828 = vpack.c.b16 %v1820, %v1819
      %1837 = vmatprep.subr.bf16.mxu0 0
      %1838 = vmatpush1.bf16.msra.mxu0 %v1821
      %1839 = vmatprep.subr.bf16.mxu0 0
      %1840 = vmatpush1.bf16.msra.mxu0 %v1822
      %1841 = vmatprep.subr.bf16.mxu0 0
      %1842 = vmatpush1.bf16.msra.mxu0 %v1823
      %1843 = vmatprep.subr.bf16.mxu0 0
      %1844 = vmatpush1.bf16.msra.mxu0 %v1824
      %1845 = vmatprep.subr.bf16.mxu0 0
      %1846 = vmatpush1.bf16.msra.mxu0 %v1825
      %1847 = vmatprep.subr.bf16.mxu0 0
      %1848 = vmatpush1.bf16.msra.mxu0 %v1826
      %1849 = vmatprep.subr.bf16.mxu0 0
      %1850 = vmatpush1.bf16.msra.mxu0 %v1827
      %1851 = vmatprep.subr.bf16.mxu0 0
      %1852 = vmatpush1.bf16.msra.mxu0 %v1828
      %1853 = vmatprep.subr.bf16.mxu0 0
      %1854 = vmatpush1.bf16.msra.mxu0 0
      %1855 = vmatprep.subr.bf16.mxu0 0
      %1856 = vmatpush1.bf16.msra.mxu0 0
      %1857 = vmatprep.subr.bf16.mxu0 0
      %1858 = vmatpush1.bf16.msra.mxu0 0
      %1859 = vmatprep.subr.bf16.mxu0 0
      %1860 = vmatpush1.bf16.msra.mxu0 0
      %1861 = vmatprep.subr.bf16.mxu0 0
      %1862 = vmatpush1.bf16.msra.mxu0 0
      %1863 = vmatprep.subr.bf16.mxu0 0
      %1864 = vmatpush1.bf16.msra.mxu0 0
      %1865 = vmatprep.subr.bf16.mxu0 0
      %1866 = vmatpush1.bf16.msra.mxu0 0
      %1867 = vmatprep.subr.bf16.mxu0 0
      %1868 = vmatpush1.bf16.msra.mxu0 0
      %1869 = vmatprep.mubr.bf16.mxu0 0
      %1870 = vmatmul.mubr.bf16.gmra.mrb[0].mxu0 %v1756
      %v1871 = vpop.f32.mrb[0].mxu0
      %v1872 = vadd.f32 0.0, %v1871
      %v1873 = vpop.f32.mrb[0].mxu0
      %v1874 = vpop.f32.mrb[0].mxu0
      %v1875 = vadd.f32 0.0, %v1874
      %v1876 = vpop.f32.mrb[0].mxu0
      %1877 = vmatprep.mubr.bf16.mxu0 0
      %1878 = vmatmul.mubr.bf16.gmra.mrb[0].mxu0 %v1757
      %v1879 = vpop.f32.mrb[0].mxu0
      %v1880 = vadd.f32 0.0, %v1879
      %v1881 = vpop.f32.mrb[0].mxu0
      %v1882 = vpop.f32.mrb[0].mxu0
      %v1883 = vadd.f32 0.0, %v1882
      %v1884 = vpop.f32.mrb[0].mxu0
      %1885 = vmatprep.mubr.bf16.mxu0 0
      %1886 = vmatmul.mubr.bf16.gmra.mrb[0].mxu0 %v1758
      %v1887 = vpop.f32.mrb[0].mxu0
      %v1888 = vadd.f32 0.0, %v1887
      %v1889 = vpop.f32.mrb[0].mxu0
      %v1890 = vpop.f32.mrb[0].mxu0
      %v1891 = vadd.f32 0.0, %v1890
      %v1892 = vpop.f32.mrb[0].mxu0
      %1893 = vmatprep.mubr.bf16.mxu0 0
      %1894 = vmatmul.mubr.bf16.gmra.mrb[0].mxu0 %v1759
      %v1895 = vpop.f32.mrb[0].mxu0
      %v1896 = vadd.f32 0.0, %v1895
      %v1897 = vpop.f32.mrb[0].mxu0
      %v1898 = vpop.f32.mrb[0].mxu0
      %v1899 = vadd.f32 0.0, %v1898
      %v1900 = vpop.f32.mrb[0].mxu0
      %1901 = vmatprep.mubr.bf16.mxu0 0
      %1902 = vmatmul.mubr.bf16.gmra.mrb[0].mxu0 %v1760
      %v1903 = vpop.f32.mrb[0].mxu0
      %v1904 = vadd.f32 0.0, %v1903
      %v1905 = vpop.f32.mrb[0].mxu0
      %v1906 = vpop.f32.mrb[0].mxu0
      %v1907 = vadd.f32 0.0, %v1906
      %v1908 = vpop.f32.mrb[0].mxu0
      %1909 = vmatprep.mubr.bf16.mxu0 0
      %1910 = vmatmul.mubr.bf16.gmra.mrb[0].mxu0 %v1761
      %v1911 = vpop.f32.mrb[0].mxu0
      %v1912 = vadd.f32 0.0, %v1911
      %v1913 = vpop.f32.mrb[0].mxu0
      %v1914 = vpop.f32.mrb[0].mxu0
      %v1915 = vadd.f32 0.0, %v1914
      %v1916 = vpop.f32.mrb[0].mxu0
      %1917 = vmatprep.mubr.bf16.mxu0 0
      %1918 = vmatmul.mubr.bf16.gmra.mrb[0].mxu0 %v1762
      %v1919 = vpop.f32.mrb[0].mxu0
      %v1920 = vadd.f32 0.0, %v1919
      %v1921 = vpop.f32.mrb[0].mxu0
      %v1922 = vpop.f32.mrb[0].mxu0
      %v1923 = vadd.f32 0.0, %v1922
      %v1924 = vpop.f32.mrb[0].mxu0
      %1925 = vmatprep.mubr.bf16.mxu0 0
      %1926 = vmatmul.mubr.bf16.gmra.mrb[0].mxu0 %v1763
      %v1927 = vpop.f32.mrb[0].mxu0
      %v1928 = vadd.f32 0.0, %v1927
      %v1929 = vpop.f32.mrb[0].mxu0
      %v1930 = vpop.f32.mrb[0].mxu0
      %v1931 = vadd.f32 0.0, %v1930
      %v1932 = vpop.f32.mrb[0].mxu0
      %1933 = vmatprep.mubr.bf16.mxu0 0
      %1934 = vmatmul.mubr.bf16.gmra.mrb[0].mxu0 %v1764
      %v1935 = vpop.f32.mrb[0].mxu0
      %v1936 = vadd.f32 0.0, %v1935
      %v1937 = vpop.f32.mrb[0].mxu0
      %v1938 = vpop.f32.mrb[0].mxu0
      %v1939 = vadd.f32 0.0, %v1938
      %v1940 = vpop.f32.mrb[0].mxu0
      %1941 = vmatprep.mubr.bf16.mxu0 0
      %1942 = vmatmul.mubr.bf16.gmra.mrb[0].mxu0 %v1765
      %v1943 = vpop.f32.mrb[0].mxu0
      %v1944 = vadd.f32 0.0, %v1943
      %v1945 = vpop.f32.mrb[0].mxu0
      %v1946 = vpop.f32.mrb[0].mxu0
      %v1947 = vadd.f32 0.0, %v1946
      %v1948 = vpop.f32.mrb[0].mxu0
      %1949 = vmatprep.mubr.bf16.mxu0 0
      %1950 = vmatmul.mubr.bf16.gmra.mrb[0].mxu0 %v1766
      %v1951 = vpop.f32.mrb[0].mxu0
      %v1952 = vadd.f32 0.0, %v1951
      %v1953 = vpop.f32.mrb[0].mxu0
      %v1954 = vpop.f32.mrb[0].mxu0
      %v1955 = vadd.f32 0.0, %v1954
      %v1956 = vpop.f32.mrb[0].mxu0
      %1957 = vmatprep.mubr.bf16.mxu0 0
      %1958 = vmatmul.mubr.bf16.gmra.mrb[0].mxu0 %v1767
      %v1959 = vpop.f32.mrb[0].mxu0
      %v1960 = vadd.f32 0.0, %v1959
      %v1961 = vpop.f32.mrb[0].mxu0
      %v1962 = vpop.f32.mrb[0].mxu0
      %v1963 = vadd.f32 0.0, %v1962
      %v1964 = vpop.f32.mrb[0].mxu0
      %1965 = vmatprep.mubr.bf16.mxu0 0
      %1966 = vmatmul.mubr.bf16.gmra.mrb[0].mxu0 %v1768
      %v1967 = vpop.f32.mrb[0].mxu0
      %v1968 = vadd.f32 0.0, %v1967
      %v1969 = vpop.f32.mrb[0].mxu0
      %v1970 = vpop.f32.mrb[0].mxu0
      %v1971 = vadd.f32 0.0, %v1970
      %v1972 = vpop.f32.mrb[0].mxu0
      %1973 = vmatprep.mubr.bf16.mxu0 0
      %1974 = vmatmul.mubr.bf16.gmra.mrb[0].mxu0 %v1769
      %v1975 = vpop.f32.mrb[0].mxu0
      %v1976 = vadd.f32 0.0, %v1975
      %v1977 = vpop.f32.mrb[0].mxu0
      %v1978 = vpop.f32.mrb[0].mxu0
      %v1979 = vadd.f32 0.0, %v1978
      %v1980 = vpop.f32.mrb[0].mxu0
      %1981 = vmatprep.mubr.bf16.mxu0 0
      %1982 = vmatmul.mubr.bf16.gmra.mrb[0].mxu0 %v1770
      %v1983 = vpop.f32.mrb[0].mxu0
      %v1984 = vadd.f32 0.0, %v1983
      %v1985 = vpop.f32.mrb[0].mxu0
      %v1986 = vpop.f32.mrb[0].mxu0
      %v1987 = vadd.f32 0.0, %v1986
      %v1988 = vpop.f32.mrb[0].mxu0
      %1989 = vmatprep.mubr.bf16.mxu0 0
      %1990 = vmatmul.mubr.bf16.gmra.mrb[0].mxu0 %v1771
      %v1991 = vpop.f32.mrb[0].mxu0
      %v1992 = vadd.f32 0.0, %v1991
      %v1993 = vpop.f32.mrb[0].mxu0
      %v1994 = vpop.f32.mrb[0].mxu0
      %v1995 = vadd.f32 0.0, %v1994
      %v1996 = vpop.f32.mrb[0].mxu0
      %1997 = vdwg.mxu0
      %v1998 = vld [vmem:[#allocation3] sm:$0xff]
      %v1999 = vld [vmem:[#allocation3 + $0x8] sm:$0xff]
      %v2000 = vld [vmem:[#allocation3 + $0x10] sm:$0xff]
      %v2001 = vld [vmem:[#allocation3 + $0x18] sm:$0xff]
      %v2002 = vld [vmem:[#allocation3 + $0x20] sm:$0xff]
      %v2003 = vld [vmem:[#allocation3 + $0x28] sm:$0xff]
      %v2004 = vld [vmem:[#allocation3 + $0x30] sm:$0xff]
      %v2005 = vld [vmem:[#allocation3 + $0x38] sm:$0xff]
      %v2006 = vld [vmem:[#allocation3 + $0x40] sm:$0xff]
      %v2007 = vld [vmem:[#allocation3 + $0x48] sm:$0xff]
      %v2008 = vld [vmem:[#allocation3 + $0x50] sm:$0xff]
      %v2009 = vld [vmem:[#allocation3 + $0x58] sm:$0xff]
      %v2010 = vld [vmem:[#allocation3 + $0x60] sm:$0xff]
      %v2011 = vld [vmem:[#allocation3 + $0x68] sm:$0xff]
      %v2012 = vld [vmem:[#allocation3 + $0x70] sm:$0xff]
      %v2013 = vld [vmem:[#allocation3 + $0x78] sm:$0xff]
      %v2014 = vld [vmem:[#allocation3 + $0x80] sm:$0xff]
      %v2015 = vld [vmem:[#allocation3 + $0x88] sm:$0xff]
      %v2016 = vld [vmem:[#allocation3 + $0x90] sm:$0xff]
      %v2017 = vld [vmem:[#allocation3 + $0x98] sm:$0xff]
      %v2018 = vld [vmem:[#allocation3 + $0xa0] sm:$0xff]
      %v2019 = vld [vmem:[#allocation3 + $0xa8] sm:$0xff]
      %v2020 = vld [vmem:[#allocation3 + $0xb0] sm:$0xff]
      %v2021 = vld [vmem:[#allocation3 + $0xb8] sm:$0xff]
      %v2022 = vld [vmem:[#allocation3 + $0xc0] sm:$0xff]
      %v2023 = vld [vmem:[#allocation3 + $0xc8] sm:$0xff]
      %v2024 = vld [vmem:[#allocation3 + $0xd0] sm:$0xff]
      %v2025 = vld [vmem:[#allocation3 + $0xd8] sm:$0xff]
      %v2026 = vld [vmem:[#allocation3 + $0xe0] sm:$0xff]
      %v2027 = vld [vmem:[#allocation3 + $0xe8] sm:$0xff]
      %v2028 = vld [vmem:[#allocation3 + $0xf0] sm:$0xff]
      %v2029 = vld [vmem:[#allocation3 + $0xf8] sm:$0xff]
      %v2030 = vadd.f32 %v1998, %v1872
      %v2031 = vadd.f32 %v1999, %v1875
      %v2032 = vadd.f32 %v2000, %v1880
      %v2033 = vadd.f32 %v2001, %v1883
      %v2034 = vadd.f32 %v2002, %v1888
      %v2035 = vadd.f32 %v2003, %v1891
      %v2036 = vadd.f32 %v2004, %v1896
      %v2037 = vadd.f32 %v2005, %v1899
      %v2038 = vadd.f32 %v2006, %v1904
      %v2039 = vadd.f32 %v2007, %v1907
      %v2040 = vadd.f32 %v2008, %v1912
      %v2041 = vadd.f32 %v2009, %v1915
      %v2042 = vadd.f32 %v2010, %v1920
      %v2043 = vadd.f32 %v2011, %v1923
      %v2044 = vadd.f32 %v2012, %v1928
      %v2045 = vadd.f32 %v2013, %v1931
      %v2046 = vadd.f32 %v2014, %v1936
      %v2047 = vadd.f32 %v2015, %v1939
      %v2048 = vadd.f32 %v2016, %v1944
      %v2049 = vadd.f32 %v2017, %v1947
      %v2050 = vadd.f32 %v2018, %v1952
      %v2051 = vadd.f32 %v2019, %v1955
      %v2052 = vadd.f32 %v2020, %v1960
      %v2053 = vadd.f32 %v2021, %v1963
      %v2054 = vadd.f32 %v2022, %v1968
      %v2055 = vadd.f32 %v2023, %v1971
      %v2056 = vadd.f32 %v2024, %v1976
      %v2057 = vadd.f32 %v2025, %v1979
      %v2058 = vadd.f32 %v2026, %v1984
      %v2059 = vadd.f32 %v2027, %v1987
      %v2060 = vadd.f32 %v2028, %v1992
      %v2061 = vadd.f32 %v2029, %v1995
      %2062 = vst [vmem:[#allocation3] sm:$0xff] %v2030
      %2063 = vst [vmem:[#allocation3 + $0x8] sm:$0xff] %v2031
      %2064 = vst [vmem:[#allocation3 + $0x10] sm:$0xff] %v2032
      %2065 = vst [vmem:[#allocation3 + $0x18] sm:$0xff] %v2033
      %2066 = vst [vmem:[#allocation3 + $0x20] sm:$0xff] %v2034
      %2067 = vst [vmem:[#allocation3 + $0x28] sm:$0xff] %v2035
      %2068 = vst [vmem:[#allocation3 + $0x30] sm:$0xff] %v2036
      %2069 = vst [vmem:[#allocation3 + $0x38] sm:$0xff] %v2037
      %2070 = vst [vmem:[#allocation3 + $0x40] sm:$0xff] %v2038
      %2071 = vst [vmem:[#allocation3 + $0x48] sm:$0xff] %v2039
      %2072 = vst [vmem:[#allocation3 + $0x50] sm:$0xff] %v2040
      %2073 = vst [vmem:[#allocation3 + $0x58] sm:$0xff] %v2041
      %2074 = vst [vmem:[#allocation3 + $0x60] sm:$0xff] %v2042
      %2075 = vst [vmem:[#allocation3 + $0x68] sm:$0xff] %v2043
      %2076 = vst [vmem:[#allocation3 + $0x70] sm:$0xff] %v2044
      %2077 = vst [vmem:[#allocation3 + $0x78] sm:$0xff] %v2045
      %2078 = vst [vmem:[#allocation3 + $0x80] sm:$0xff] %v2046
      %2079 = vst [vmem:[#allocation3 + $0x88] sm:$0xff] %v2047
      %2080 = vst [vmem:[#allocation3 + $0x90] sm:$0xff] %v2048
      %2081 = vst [vmem:[#allocation3 + $0x98] sm:$0xff] %v2049
      %2082 = vst [vmem:[#allocation3 + $0xa0] sm:$0xff] %v2050
      %2083 = vst [vmem:[#allocation3 + $0xa8] sm:$0xff] %v2051
      %2084 = vst [vmem:[#allocation3 + $0xb0] sm:$0xff] %v2052
      %2085 = vst [vmem:[#allocation3 + $0xb8] sm:$0xff] %v2053
      %2086 = vst [vmem:[#allocation3 + $0xc0] sm:$0xff] %v2054
      %2087 = vst [vmem:[#allocation3 + $0xc8] sm:$0xff] %v2055
      %2088 = vst [vmem:[#allocation3 + $0xd0] sm:$0xff] %v2056
      %2089 = vst [vmem:[#allocation3 + $0xd8] sm:$0xff] %v2057
      %2090 = vst [vmem:[#allocation3 + $0xe0] sm:$0xff] %v2058
      %2091 = vst [vmem:[#allocation3 + $0xe8] sm:$0xff] %v2059
      %2092 = vst [vmem:[#allocation3 + $0xf0] sm:$0xff] %v2060
      %2093 = vst [vmem:[#allocation3 + $0xf8] sm:$0xff] %v2061
      %v2094 = vld [vmem:[%s646 + $0x1] sm:$0xff]
      %v2095 = vld [vmem:[%s646 + $0x9] sm:$0xff]
      %v2096 = vld [vmem:[%s646 + $0x19] sm:$0xff]
      %v2097 = vld [vmem:[%s646 + $0x21] sm:$0xff]
      %v2098 = vld [vmem:[%s646 + $0x31] sm:$0xff]
      %v2099 = vld [vmem:[%s646 + $0x39] sm:$0xff]
      %v2100 = vld [vmem:[%s646 + $0x49] sm:$0xff]
      %v2101 = vld [vmem:[%s646 + $0x51] sm:$0xff]
      %v2102 = vld [vmem:[%s646 + $0x61] sm:$0xff]
      %v2103 = vld [vmem:[%s646 + $0x69] sm:$0xff]
      %v2104 = vld [vmem:[%s646 + $0x79] sm:$0xff]
      %v2105 = vld [vmem:[%s646 + $0x81] sm:$0xff]
      %v2106 = vld [vmem:[%s646 + $0x91] sm:$0xff]
      %v2107 = vld [vmem:[%s646 + $0x99] sm:$0xff]
      %v2108 = vld [vmem:[%s646 + $0xa9] sm:$0xff]
      %v2109 = vld [vmem:[%s646 + $0xb1] sm:$0xff]
      %v2110 = vld [vmem:[%s646 + $0xc1] sm:$0xff]
      %v2111 = vld [vmem:[%s646 + $0xc9] sm:$0xff]
      %v2112 = vld [vmem:[%s646 + $0xd9] sm:$0xff]
      %v2113 = vld [vmem:[%s646 + $0xe1] sm:$0xff]
      %v2114 = vld [vmem:[%s646 + $0xf1] sm:$0xff]
      %v2115 = vld [vmem:[%s646 + $0xf9] sm:$0xff]
      %v2116 = vld [vmem:[%s646 + $0x109] sm:$0xff]
      %v2117 = vld [vmem:[%s646 + $0x111] sm:$0xff]
      %v2118 = vld [vmem:[%s646 + $0x121] sm:$0xff]
      %v2119 = vld [vmem:[%s646 + $0x129] sm:$0xff]
      %v2120 = vld [vmem:[%s646 + $0x139] sm:$0xff]
      %v2121 = vld [vmem:[%s646 + $0x141] sm:$0xff]
      %v2122 = vld [vmem:[%s646 + $0x151] sm:$0xff]
      %v2123 = vld [vmem:[%s646 + $0x159] sm:$0xff]
      %v2124 = vld [vmem:[%s646 + $0x169] sm:$0xff]
      %v2125 = vld [vmem:[%s646 + $0x171] sm:$0xff]
      %v2126 = vpack.c.bf16 %v2095, %v2094
      %v2127 = vpack.c.bf16 %v2097, %v2096
      %v2128 = vpack.c.bf16 %v2099, %v2098
      %v2129 = vpack.c.bf16 %v2101, %v2100
      %v2130 = vpack.c.bf16 %v2103, %v2102
      %v2131 = vpack.c.bf16 %v2105, %v2104
      %v2132 = vpack.c.bf16 %v2107, %v2106
      %v2133 = vpack.c.bf16 %v2109, %v2108
      %v2134 = vpack.c.bf16 %v2111, %v2110
      %v2135 = vpack.c.bf16 %v2113, %v2112
      %v2136 = vpack.c.bf16 %v2115, %v2114
      %v2137 = vpack.c.bf16 %v2117, %v2116
      %v2138 = vpack.c.bf16 %v2119, %v2118
      %v2139 = vpack.c.bf16 %v2121, %v2120
      %v2140 = vpack.c.bf16 %v2123, %v2122
      %v2141 = vpack.c.bf16 %v2125, %v2124
      %s2142 = scalar_lea.vmem %s3, 256
      %v2143 = vld [vmem:[%s2142] sm:$0xf]
      %v2144 = vld [vmem:[%s2142 + $0x4] sm:$0xf]
      %v2145 = vld [vmem:[%s2142 + $0x8] sm:$0xf]
      %v2146 = vld [vmem:[%s2142 + $0xc] sm:$0xf]
      %v2147 = vld [vmem:[%s2142 + $0x10] sm:$0xf]
      %v2148 = vld [vmem:[%s2142 + $0x14] sm:$0xf]
      %v2149 = vld [vmem:[%s2142 + $0x18] sm:$0xf]
      %v2150 = vld [vmem:[%s2142 + $0x1c] sm:$0xf]
      %v2151 = vld [vmem:[%s2142 + $0x20] sm:$0xf]
      %v2152 = vld [vmem:[%s2142 + $0x24] sm:$0xf]
      %v2153 = vld [vmem:[%s2142 + $0x28] sm:$0xf]
      %v2154 = vld [vmem:[%s2142 + $0x2c] sm:$0xf]
      %v2155 = vld [vmem:[%s2142 + $0x30] sm:$0xf]
      %v2156 = vld [vmem:[%s2142 + $0x34] sm:$0xf]
      %v2157 = vld [vmem:[%s2142 + $0x38] sm:$0xf]
      %v2158 = vld [vmem:[%s2142 + $0x3c] sm:$0xf]
      %v2175 = vunpack.c.l.b16 %v2143
      %v2176 = vunpack.c.l.b16 %v2144
      %v2177 = vunpack.c.l.b16 %v2145
      %v2178 = vunpack.c.l.b16 %v2146
      %v2179 = vunpack.c.l.b16 %v2147
      %v2180 = vunpack.c.l.b16 %v2148
      %v2181 = vunpack.c.l.b16 %v2149
      %v2182 = vunpack.c.l.b16 %v2150
      %v2183 = vunpack.c.l.b16 %v2151
      %v2184 = vunpack.c.l.b16 %v2152
      %v2185 = vunpack.c.l.b16 %v2153
      %v2186 = vunpack.c.l.b16 %v2154
      %v2187 = vunpack.c.l.b16 %v2155
      %v2188 = vunpack.c.l.b16 %v2156
      %v2189 = vunpack.c.l.b16 %v2157
      %v2190 = vunpack.c.l.b16 %v2158
      %v2191 = vpack.c.b16 %v2176, %v2175
      %v2192 = vpack.c.b16 %v2178, %v2177
      %v2193 = vpack.c.b16 %v2180, %v2179
      %v2194 = vpack.c.b16 %v2182, %v2181
      %v2195 = vpack.c.b16 %v2184, %v2183
      %v2196 = vpack.c.b16 %v2186, %v2185
      %v2197 = vpack.c.b16 %v2188, %v2187
      %v2198 = vpack.c.b16 %v2190, %v2189
      %2207 = vmatprep.subr.bf16.mxu0 0
      %2208 = vmatpush1.bf16.msra.mxu0 %v2191
      %2209 = vmatprep.subr.bf16.mxu0 0
      %2210 = vmatpush1.bf16.msra.mxu0 %v2192
      %2211 = vmatprep.subr.bf16.mxu0 0
      %2212 = vmatpush1.bf16.msra.mxu0 %v2193
      %2213 = vmatprep.subr.bf16.mxu0 0
      %2214 = vmatpush1.bf16.msra.mxu0 %v2194
      %2215 = vmatprep.subr.bf16.mxu0 0
      %2216 = vmatpush1.bf16.msra.mxu0 %v2195
      %2217 = vmatprep.subr.bf16.mxu0 0
      %2218 = vmatpush1.bf16.msra.mxu0 %v2196
      %2219 = vmatprep.subr.bf16.mxu0 0
      %2220 = vmatpush1.bf16.msra.mxu0 %v2197
      %2221 = vmatprep.subr.bf16.mxu0 0
      %2222 = vmatpush1.bf16.msra.mxu0 %v2198
      %2223 = vmatprep.subr.bf16.mxu0 0
      %2224 = vmatpush1.bf16.msra.mxu0 0
      %2225 = vmatprep.subr.bf16.mxu0 0
      %2226 = vmatpush1.bf16.msra.mxu0 0
      %2227 = vmatprep.subr.bf16.mxu0 0
      %2228 = vmatpush1.bf16.msra.mxu0 0
      %2229 = vmatprep.subr.bf16.mxu0 0
      %2230 = vmatpush1.bf16.msra.mxu0 0
      %2231 = vmatprep.subr.bf16.mxu0 0
      %2232 = vmatpush1.bf16.msra.mxu0 0
      %2233 = vmatprep.subr.bf16.mxu0 0
      %2234 = vmatpush1.bf16.msra.mxu0 0
      %2235 = vmatprep.subr.bf16.mxu0 0
      %2236 = vmatpush1.bf16.msra.mxu0 0
      %2237 = vmatprep.subr.bf16.mxu0 0
      %2238 = vmatpush1.bf16.msra.mxu0 0
      %2239 = vmatprep.mubr.bf16.mxu0 0
      %2240 = vmatmul.mubr.bf16.gmra.mrb[0].mxu0 %v2126
      %v2241 = vpop.f32.mrb[0].mxu0
      %v2242 = vadd.f32 0.0, %v2241
      %v2243 = vpop.f32.mrb[0].mxu0
      %v2244 = vpop.f32.mrb[0].mxu0
      %v2245 = vadd.f32 0.0, %v2244
      %v2246 = vpop.f32.mrb[0].mxu0
      %2247 = vmatprep.mubr.bf16.mxu0 0
      %2248 = vmatmul.mubr.bf16.gmra.mrb[0].mxu0 %v2127
      %v2249 = vpop.f32.mrb[0].mxu0
      %v2250 = vadd.f32 0.0, %v2249
      %v2251 = vpop.f32.mrb[0].mxu0
      %v2252 = vpop.f32.mrb[0].mxu0
      %v2253 = vadd.f32 0.0, %v2252
      %v2254 = vpop.f32.mrb[0].mxu0
      %2255 = vmatprep.mubr.bf16.mxu0 0
      %2256 = vmatmul.mubr.bf16.gmra.mrb[0].mxu0 %v2128
      %v2257 = vpop.f32.mrb[0].mxu0
      %v2258 = vadd.f32 0.0, %v2257
      %v2259 = vpop.f32.mrb[0].mxu0
      %v2260 = vpop.f32.mrb[0].mxu0
      %v2261 = vadd.f32 0.0, %v2260
      %v2262 = vpop.f32.mrb[0].mxu0
      %2263 = vmatprep.mubr.bf16.mxu0 0
      %2264 = vmatmul.mubr.bf16.gmra.mrb[0].mxu0 %v2129
      %v2265 = vpop.f32.mrb[0].mxu0
      %v2266 = vadd.f32 0.0, %v2265
      %v2267 = vpop.f32.mrb[0].mxu0
      %v2268 = vpop.f32.mrb[0].mxu0
      %v2269 = vadd.f32 0.0, %v2268
      %v2270 = vpop.f32.mrb[0].mxu0
      %2271 = vmatprep.mubr.bf16.mxu0 0
      %2272 = vmatmul.mubr.bf16.gmra.mrb[0].mxu0 %v2130
      %v2273 = vpop.f32.mrb[0].mxu0
      %v2274 = vadd.f32 0.0, %v2273
      %v2275 = vpop.f32.mrb[0].mxu0
      %v2276 = vpop.f32.mrb[0].mxu0
      %v2277 = vadd.f32 0.0, %v2276
      %v2278 = vpop.f32.mrb[0].mxu0
      %2279 = vmatprep.mubr.bf16.mxu0 0
      %2280 = vmatmul.mubr.bf16.gmra.mrb[0].mxu0 %v2131
      %v2281 = vpop.f32.mrb[0].mxu0
      %v2282 = vadd.f32 0.0, %v2281
      %v2283 = vpop.f32.mrb[0].mxu0
      %v2284 = vpop.f32.mrb[0].mxu0
      %v2285 = vadd.f32 0.0, %v2284
      %v2286 = vpop.f32.mrb[0].mxu0
      %2287 = vmatprep.mubr.bf16.mxu0 0
      %2288 = vmatmul.mubr.bf16.gmra.mrb[0].mxu0 %v2132
      %v2289 = vpop.f32.mrb[0].mxu0
      %v2290 = vadd.f32 0.0, %v2289
      %v2291 = vpop.f32.mrb[0].mxu0
      %v2292 = vpop.f32.mrb[0].mxu0
      %v2293 = vadd.f32 0.0, %v2292
      %v2294 = vpop.f32.mrb[0].mxu0
      %2295 = vmatprep.mubr.bf16.mxu0 0
      %2296 = vmatmul.mubr.bf16.gmra.mrb[0].mxu0 %v2133
      %v2297 = vpop.f32.mrb[0].mxu0
      %v2298 = vadd.f32 0.0, %v2297
      %v2299 = vpop.f32.mrb[0].mxu0
      %v2300 = vpop.f32.mrb[0].mxu0
      %v2301 = vadd.f32 0.0, %v2300
      %v2302 = vpop.f32.mrb[0].mxu0
      %2303 = vmatprep.mubr.bf16.mxu0 0
      %2304 = vmatmul.mubr.bf16.gmra.mrb[0].mxu0 %v2134
      %v2305 = vpop.f32.mrb[0].mxu0
      %v2306 = vadd.f32 0.0, %v2305
      %v2307 = vpop.f32.mrb[0].mxu0
      %v2308 = vpop.f32.mrb[0].mxu0
      %v2309 = vadd.f32 0.0, %v2308
      %v2310 = vpop.f32.mrb[0].mxu0
      %2311 = vmatprep.mubr.bf16.mxu0 0
      %2312 = vmatmul.mubr.bf16.gmra.mrb[0].mxu0 %v2135
      %v2313 = vpop.f32.mrb[0].mxu0
      %v2314 = vadd.f32 0.0, %v2313
      %v2315 = vpop.f32.mrb[0].mxu0
      %v2316 = vpop.f32.mrb[0].mxu0
      %v2317 = vadd.f32 0.0, %v2316
      %v2318 = vpop.f32.mrb[0].mxu0
      %2319 = vmatprep.mubr.bf16.mxu0 0
      %2320 = vmatmul.mubr.bf16.gmra.mrb[0].mxu0 %v2136
      %v2321 = vpop.f32.mrb[0].mxu0
      %v2322 = vadd.f32 0.0, %v2321
      %v2323 = vpop.f32.mrb[0].mxu0
      %v2324 = vpop.f32.mrb[0].mxu0
      %v2325 = vadd.f32 0.0, %v2324
      %v2326 = vpop.f32.mrb[0].mxu0
      %2327 = vmatprep.mubr.bf16.mxu0 0
      %2328 = vmatmul.mubr.bf16.gmra.mrb[0].mxu0 %v2137
      %v2329 = vpop.f32.mrb[0].mxu0
      %v2330 = vadd.f32 0.0, %v2329
      %v2331 = vpop.f32.mrb[0].mxu0
      %v2332 = vpop.f32.mrb[0].mxu0
      %v2333 = vadd.f32 0.0, %v2332
      %v2334 = vpop.f32.mrb[0].mxu0
      %2335 = vmatprep.mubr.bf16.mxu0 0
      %2336 = vmatmul.mubr.bf16.gmra.mrb[0].mxu0 %v2138
      %v2337 = vpop.f32.mrb[0].mxu0
      %v2338 = vadd.f32 0.0, %v2337
      %v2339 = vpop.f32.mrb[0].mxu0
      %v2340 = vpop.f32.mrb[0].mxu0
      %v2341 = vadd.f32 0.0, %v2340
      %v2342 = vpop.f32.mrb[0].mxu0
      %2343 = vmatprep.mubr.bf16.mxu0 0
      %2344 = vmatmul.mubr.bf16.gmra.mrb[0].mxu0 %v2139
      %v2345 = vpop.f32.mrb[0].mxu0
      %v2346 = vadd.f32 0.0, %v2345
      %v2347 = vpop.f32.mrb[0].mxu0
      %v2348 = vpop.f32.mrb[0].mxu0
      %v2349 = vadd.f32 0.0, %v2348
      %v2350 = vpop.f32.mrb[0].mxu0
      %2351 = vmatprep.mubr.bf16.mxu0 0
      %2352 = vmatmul.mubr.bf16.gmra.mrb[0].mxu0 %v2140
      %v2353 = vpop.f32.mrb[0].mxu0
      %v2354 = vadd.f32 0.0, %v2353
      %v2355 = vpop.f32.mrb[0].mxu0
      %v2356 = vpop.f32.mrb[0].mxu0
      %v2357 = vadd.f32 0.0, %v2356
      %v2358 = vpop.f32.mrb[0].mxu0
      %2359 = vmatprep.mubr.bf16.mxu0 0
      %2360 = vmatmul.mubr.bf16.gmra.mrb[0].mxu0 %v2141
      %v2361 = vpop.f32.mrb[0].mxu0
      %v2362 = vadd.f32 0.0, %v2361
      %v2363 = vpop.f32.mrb[0].mxu0
      %v2364 = vpop.f32.mrb[0].mxu0
      %v2365 = vadd.f32 0.0, %v2364
      %v2366 = vpop.f32.mrb[0].mxu0
      %2367 = vdwg.mxu0
      %v2368 = vld [vmem:[#allocation3] sm:$0xff]
      %v2369 = vld [vmem:[#allocation3 + $0x8] sm:$0xff]
      %v2370 = vld [vmem:[#allocation3 + $0x10] sm:$0xff]
      %v2371 = vld [vmem:[#allocation3 + $0x18] sm:$0xff]
      %v2372 = vld [vmem:[#allocation3 + $0x20] sm:$0xff]
      %v2373 = vld [vmem:[#allocation3 + $0x28] sm:$0xff]
      %v2374 = vld [vmem:[#allocation3 + $0x30] sm:$0xff]
      %v2375 = vld [vmem:[#allocation3 + $0x38] sm:$0xff]
      %v2376 = vld [vmem:[#allocation3 + $0x40] sm:$0xff]
      %v2377 = vld [vmem:[#allocation3 + $0x48] sm:$0xff]
      %v2378 = vld [vmem:[#allocation3 + $0x50] sm:$0xff]
      %v2379 = vld [vmem:[#allocation3 + $0x58] sm:$0xff]
      %v2380 = vld [vmem:[#allocation3 + $0x60] sm:$0xff]
      %v2381 = vld [vmem:[#allocation3 + $0x68] sm:$0xff]
      %v2382 = vld [vmem:[#allocation3 + $0x70] sm:$0xff]
      %v2383 = vld [vmem:[#allocation3 + $0x78] sm:$0xff]
      %v2384 = vld [vmem:[#allocation3 + $0x80] sm:$0xff]
      %v2385 = vld [vmem:[#allocation3 + $0x88] sm:$0xff]
      %v2386 = vld [vmem:[#allocation3 + $0x90] sm:$0xff]
      %v2387 = vld [vmem:[#allocation3 + $0x98] sm:$0xff]
      %v2388 = vld [vmem:[#allocation3 + $0xa0] sm:$0xff]
      %v2389 = vld [vmem:[#allocation3 + $0xa8] sm:$0xff]
      %v2390 = vld [vmem:[#allocation3 + $0xb0] sm:$0xff]
      %v2391 = vld [vmem:[#allocation3 + $0xb8] sm:$0xff]
      %v2392 = vld [vmem:[#allocation3 + $0xc0] sm:$0xff]
      %v2393 = vld [vmem:[#allocation3 + $0xc8] sm:$0xff]
      %v2394 = vld [vmem:[#allocation3 + $0xd0] sm:$0xff]
      %v2395 = vld [vmem:[#allocation3 + $0xd8] sm:$0xff]
      %v2396 = vld [vmem:[#allocation3 + $0xe0] sm:$0xff]
      %v2397 = vld [vmem:[#allocation3 + $0xe8] sm:$0xff]
      %v2398 = vld [vmem:[#allocation3 + $0xf0] sm:$0xff]
      %v2399 = vld [vmem:[#allocation3 + $0xf8] sm:$0xff]
      %v2400 = vadd.f32 %v2368, %v2242
      %v2401 = vadd.f32 %v2369, %v2245
      %v2402 = vadd.f32 %v2370, %v2250
      %v2403 = vadd.f32 %v2371, %v2253
      %v2404 = vadd.f32 %v2372, %v2258
      %v2405 = vadd.f32 %v2373, %v2261
      %v2406 = vadd.f32 %v2374, %v2266
      %v2407 = vadd.f32 %v2375, %v2269
      %v2408 = vadd.f32 %v2376, %v2274
      %v2409 = vadd.f32 %v2377, %v2277
      %v2410 = vadd.f32 %v2378, %v2282
      %v2411 = vadd.f32 %v2379, %v2285
      %v2412 = vadd.f32 %v2380, %v2290
      %v2413 = vadd.f32 %v2381, %v2293
      %v2414 = vadd.f32 %v2382, %v2298
      %v2415 = vadd.f32 %v2383, %v2301
      %v2416 = vadd.f32 %v2384, %v2306
      %v2417 = vadd.f32 %v2385, %v2309
      %v2418 = vadd.f32 %v2386, %v2314
      %v2419 = vadd.f32 %v2387, %v2317
      %v2420 = vadd.f32 %v2388, %v2322
      %v2421 = vadd.f32 %v2389, %v2325
      %v2422 = vadd.f32 %v2390, %v2330
      %v2423 = vadd.f32 %v2391, %v2333
      %v2424 = vadd.f32 %v2392, %v2338
      %v2425 = vadd.f32 %v2393, %v2341
      %v2426 = vadd.f32 %v2394, %v2346
      %v2427 = vadd.f32 %v2395, %v2349
      %v2428 = vadd.f32 %v2396, %v2354
      %v2429 = vadd.f32 %v2397, %v2357
      %v2430 = vadd.f32 %v2398, %v2362
      %v2431 = vadd.f32 %v2399, %v2365
      %2432 = vst [vmem:[#allocation3] sm:$0xff] %v2400
      %2433 = vst [vmem:[#allocation3 + $0x8] sm:$0xff] %v2401
      %2434 = vst [vmem:[#allocation3 + $0x10] sm:$0xff] %v2402
      %2435 = vst [vmem:[#allocation3 + $0x18] sm:$0xff] %v2403
      %2436 = vst [vmem:[#allocation3 + $0x20] sm:$0xff] %v2404
      %2437 = vst [vmem:[#allocation3 + $0x28] sm:$0xff] %v2405
      %2438 = vst [vmem:[#allocation3 + $0x30] sm:$0xff] %v2406
      %2439 = vst [vmem:[#allocation3 + $0x38] sm:$0xff] %v2407
      %2440 = vst [vmem:[#allocation3 + $0x40] sm:$0xff] %v2408
      %2441 = vst [vmem:[#allocation3 + $0x48] sm:$0xff] %v2409
      %2442 = vst [vmem:[#allocation3 + $0x50] sm:$0xff] %v2410
      %2443 = vst [vmem:[#allocation3 + $0x58] sm:$0xff] %v2411
      %2444 = vst [vmem:[#allocation3 + $0x60] sm:$0xff] %v2412
      %2445 = vst [vmem:[#allocation3 + $0x68] sm:$0xff] %v2413
      %2446 = vst [vmem:[#allocation3 + $0x70] sm:$0xff] %v2414
      %2447 = vst [vmem:[#allocation3 + $0x78] sm:$0xff] %v2415
      %2448 = vst [vmem:[#allocation3 + $0x80] sm:$0xff] %v2416
      %2449 = vst [vmem:[#allocation3 + $0x88] sm:$0xff] %v2417
      %2450 = vst [vmem:[#allocation3 + $0x90] sm:$0xff] %v2418
      %2451 = vst [vmem:[#allocation3 + $0x98] sm:$0xff] %v2419
      %2452 = vst [vmem:[#allocation3 + $0xa0] sm:$0xff] %v2420
      %2453 = vst [vmem:[#allocation3 + $0xa8] sm:$0xff] %v2421
      %2454 = vst [vmem:[#allocation3 + $0xb0] sm:$0xff] %v2422
      %2455 = vst [vmem:[#allocation3 + $0xb8] sm:$0xff] %v2423
      %2456 = vst [vmem:[#allocation3 + $0xc0] sm:$0xff] %v2424
      %2457 = vst [vmem:[#allocation3 + $0xc8] sm:$0xff] %v2425
      %2458 = vst [vmem:[#allocation3 + $0xd0] sm:$0xff] %v2426
      %2459 = vst [vmem:[#allocation3 + $0xd8] sm:$0xff] %v2427
      %2460 = vst [vmem:[#allocation3 + $0xe0] sm:$0xff] %v2428
      %2461 = vst [vmem:[#allocation3 + $0xe8] sm:$0xff] %v2429
      %2462 = vst [vmem:[#allocation3 + $0xf0] sm:$0xff] %v2430
      %2463 = vst [vmem:[#allocation3 + $0xf8] sm:$0xff] %v2431
      %v2464 = vld [vmem:[%s646 + $0x2] sm:$0xff]
      %v2465 = vld [vmem:[%s646 + $0xa] sm:$0xff]
      %v2466 = vld [vmem:[%s646 + $0x1a] sm:$0xff]
      %v2467 = vld [vmem:[%s646 + $0x22] sm:$0xff]
      %v2468 = vld [vmem:[%s646 + $0x32] sm:$0xff]
      %v2469 = vld [vmem:[%s646 + $0x3a] sm:$0xff]
      %v2470 = vld [vmem:[%s646 + $0x4a] sm:$0xff]
      %v2471 = vld [vmem:[%s646 + $0x52] sm:$0xff]
      %v2472 = vld [vmem:[%s646 + $0x62] sm:$0xff]
      %v2473 = vld [vmem:[%s646 + $0x6a] sm:$0xff]
      %v2474 = vld [vmem:[%s646 + $0x7a] sm:$0xff]
      %v2475 = vld [vmem:[%s646 + $0x82] sm:$0xff]
      %v2476 = vld [vmem:[%s646 + $0x92] sm:$0xff]
      %v2477 = vld [vmem:[%s646 + $0x9a] sm:$0xff]
      %v2478 = vld [vmem:[%s646 + $0xaa] sm:$0xff]
      %v2479 = vld [vmem:[%s646 + $0xb2] sm:$0xff]
      %v2480 = vld [vmem:[%s646 + $0xc2] sm:$0xff]
      %v2481 = vld [vmem:[%s646 + $0xca] sm:$0xff]
      %v2482 = vld [vmem:[%s646 + $0xda] sm:$0xff]
      %v2483 = vld [vmem:[%s646 + $0xe2] sm:$0xff]
      %v2484 = vld [vmem:[%s646 + $0xf2] sm:$0xff]
      %v2485 = vld [vmem:[%s646 + $0xfa] sm:$0xff]
      %v2486 = vld [vmem:[%s646 + $0x10a] sm:$0xff]
      %v2487 = vld [vmem:[%s646 + $0x112] sm:$0xff]
      %v2488 = vld [vmem:[%s646 + $0x122] sm:$0xff]
      %v2489 = vld [vmem:[%s646 + $0x12a] sm:$0xff]
      %v2490 = vld [vmem:[%s646 + $0x13a] sm:$0xff]
      %v2491 = vld [vmem:[%s646 + $0x142] sm:$0xff]
      %v2492 = vld [vmem:[%s646 + $0x152] sm:$0xff]
      %v2493 = vld [vmem:[%s646 + $0x15a] sm:$0xff]
      %v2494 = vld [vmem:[%s646 + $0x16a] sm:$0xff]
      %v2495 = vld [vmem:[%s646 + $0x172] sm:$0xff]
      %v2496 = vpack.c.bf16 %v2465, %v2464
      %v2497 = vpack.c.bf16 %v2467, %v2466
      %v2498 = vpack.c.bf16 %v2469, %v2468
      %v2499 = vpack.c.bf16 %v2471, %v2470
      %v2500 = vpack.c.bf16 %v2473, %v2472
      %v2501 = vpack.c.bf16 %v2475, %v2474
      %v2502 = vpack.c.bf16 %v2477, %v2476
      %v2503 = vpack.c.bf16 %v2479, %v2478
      %v2504 = vpack.c.bf16 %v2481, %v2480
      %v2505 = vpack.c.bf16 %v2483, %v2482
      %v2506 = vpack.c.bf16 %v2485, %v2484
      %v2507 = vpack.c.bf16 %v2487, %v2486
      %v2508 = vpack.c.bf16 %v2489, %v2488
      %v2509 = vpack.c.bf16 %v2491, %v2490
      %v2510 = vpack.c.bf16 %v2493, %v2492
      %v2511 = vpack.c.bf16 %v2495, %v2494
      %s2512 = scalar_lea.vmem %s3, 320
      %v2513 = vld [vmem:[%s2512] sm:$0xf]
      %v2514 = vld [vmem:[%s2512 + $0x4] sm:$0xf]
      %v2515 = vld [vmem:[%s2512 + $0x8] sm:$0xf]
      %v2516 = vld [vmem:[%s2512 + $0xc] sm:$0xf]
      %v2517 = vld [vmem:[%s2512 + $0x10] sm:$0xf]
      %v2518 = vld [vmem:[%s2512 + $0x14] sm:$0xf]
      %v2519 = vld [vmem:[%s2512 + $0x18] sm:$0xf]
      %v2520 = vld [vmem:[%s2512 + $0x1c] sm:$0xf]
      %v2521 = vld [vmem:[%s2512 + $0x20] sm:$0xf]
      %v2522 = vld [vmem:[%s2512 + $0x24] sm:$0xf]
      %v2523 = vld [vmem:[%s2512 + $0x28] sm:$0xf]
      %v2524 = vld [vmem:[%s2512 + $0x2c] sm:$0xf]
      %v2525 = vld [vmem:[%s2512 + $0x30] sm:$0xf]
      %v2526 = vld [vmem:[%s2512 + $0x34] sm:$0xf]
      %v2527 = vld [vmem:[%s2512 + $0x38] sm:$0xf]
      %v2528 = vld [vmem:[%s2512 + $0x3c] sm:$0xf]
      %v2545 = vunpack.c.l.b16 %v2513
      %v2546 = vunpack.c.l.b16 %v2514
      %v2547 = vunpack.c.l.b16 %v2515
      %v2548 = vunpack.c.l.b16 %v2516
      %v2549 = vunpack.c.l.b16 %v2517
      %v2550 = vunpack.c.l.b16 %v2518
      %v2551 = vunpack.c.l.b16 %v2519
      %v2552 = vunpack.c.l.b16 %v2520
      %v2553 = vunpack.c.l.b16 %v2521
      %v2554 = vunpack.c.l.b16 %v2522
      %v2555 = vunpack.c.l.b16 %v2523
      %v2556 = vunpack.c.l.b16 %v2524
      %v2557 = vunpack.c.l.b16 %v2525
      %v2558 = vunpack.c.l.b16 %v2526
      %v2559 = vunpack.c.l.b16 %v2527
      %v2560 = vunpack.c.l.b16 %v2528
      %v2561 = vpack.c.b16 %v2546, %v2545
      %v2562 = vpack.c.b16 %v2548, %v2547
      %v2563 = vpack.c.b16 %v2550, %v2549
      %v2564 = vpack.c.b16 %v2552, %v2551
      %v2565 = vpack.c.b16 %v2554, %v2553
      %v2566 = vpack.c.b16 %v2556, %v2555
      %v2567 = vpack.c.b16 %v2558, %v2557
      %v2568 = vpack.c.b16 %v2560, %v2559
      %2577 = vmatprep.subr.bf16.mxu0 0
      %2578 = vmatpush1.bf16.msra.mxu0 %v2561
      %2579 = vmatprep.subr.bf16.mxu0 0
      %2580 = vmatpush1.bf16.msra.mxu0 %v2562
      %2581 = vmatprep.subr.bf16.mxu0 0
      %2582 = vmatpush1.bf16.msra.mxu0 %v2563
      %2583 = vmatprep.subr.bf16.mxu0 0
      %2584 = vmatpush1.bf16.msra.mxu0 %v2564
      %2585 = vmatprep.subr.bf16.mxu0 0
      %2586 = vmatpush1.bf16.msra.mxu0 %v2565
      %2587 = vmatprep.subr.bf16.mxu0 0
      %2588 = vmatpush1.bf16.msra.mxu0 %v2566
      %2589 = vmatprep.subr.bf16.mxu0 0
      %2590 = vmatpush1.bf16.msra.mxu0 %v2567
      %2591 = vmatprep.subr.bf16.mxu0 0
      %2592 = vmatpush1.bf16.msra.mxu0 %v2568
      %2593 = vmatprep.subr.bf16.mxu0 0
      %2594 = vmatpush1.bf16.msra.mxu0 0
      %2595 = vmatprep.subr.bf16.mxu0 0
      %2596 = vmatpush1.bf16.msra.mxu0 0
      %2597 = vmatprep.subr.bf16.mxu0 0
      %2598 = vmatpush1.bf16.msra.mxu0 0
      %2599 = vmatprep.subr.bf16.mxu0 0
      %2600 = vmatpush1.bf16.msra.mxu0 0
      %2601 = vmatprep.subr.bf16.mxu0 0
      %2602 = vmatpush1.bf16.msra.mxu0 0
      %2603 = vmatprep.subr.bf16.mxu0 0
      %2604 = vmatpush1.bf16.msra.mxu0 0
      %2605 = vmatprep.subr.bf16.mxu0 0
      %2606 = vmatpush1.bf16.msra.mxu0 0
      %2607 = vmatprep.subr.bf16.mxu0 0
      %2608 = vmatpush1.bf16.msra.mxu0 0
      %2609 = vmatprep.mubr.bf16.mxu0 0
      %2610 = vmatmul.mubr.bf16.gmra.mrb[0].mxu0 %v2496
      %v2611 = vpop.f32.mrb[0].mxu0
      %v2612 = vadd.f32 0.0, %v2611
      %v2613 = vpop.f32.mrb[0].mxu0
      %v2614 = vpop.f32.mrb[0].mxu0
      %v2615 = vadd.f32 0.0, %v2614
      %v2616 = vpop.f32.mrb[0].mxu0
      %2617 = vmatprep.mubr.bf16.mxu0 0
      %2618 = vmatmul.mubr.bf16.gmra.mrb[0].mxu0 %v2497
      %v2619 = vpop.f32.mrb[0].mxu0
      %v2620 = vadd.f32 0.0, %v2619
      %v2621 = vpop.f32.mrb[0].mxu0
      %v2622 = vpop.f32.mrb[0].mxu0
      %v2623 = vadd.f32 0.0, %v2622
      %v2624 = vpop.f32.mrb[0].mxu0
      %2625 = vmatprep.mubr.bf16.mxu0 0
      %2626 = vmatmul.mubr.bf16.gmra.mrb[0].mxu0 %v2498
      %v2627 = vpop.f32.mrb[0].mxu0
      %v2628 = vadd.f32 0.0, %v2627
      %v2629 = vpop.f32.mrb[0].mxu0
      %v2630 = vpop.f32.mrb[0].mxu0
      %v2631 = vadd.f32 0.0, %v2630
      %v2632 = vpop.f32.mrb[0].mxu0
      %2633 = vmatprep.mubr.bf16.mxu0 0
      %2634 = vmatmul.mubr.bf16.gmra.mrb[0].mxu0 %v2499
      %v2635 = vpop.f32.mrb[0].mxu0
      %v2636 = vadd.f32 0.0, %v2635
      %v2637 = vpop.f32.mrb[0].mxu0
      %v2638 = vpop.f32.mrb[0].mxu0
      %v2639 = vadd.f32 0.0, %v2638
      %v2640 = vpop.f32.mrb[0].mxu0
      %2641 = vmatprep.mubr.bf16.mxu0 0
      %2642 = vmatmul.mubr.bf16.gmra.mrb[0].mxu0 %v2500
      %v2643 = vpop.f32.mrb[0].mxu0
      %v2644 = vadd.f32 0.0, %v2643
      %v2645 = vpop.f32.mrb[0].mxu0
      %v2646 = vpop.f32.mrb[0].mxu0
      %v2647 = vadd.f32 0.0, %v2646
      %v2648 = vpop.f32.mrb[0].mxu0
      %2649 = vmatprep.mubr.bf16.mxu0 0
      %2650 = vmatmul.mubr.bf16.gmra.mrb[0].mxu0 %v2501
      %v2651 = vpop.f32.mrb[0].mxu0
      %v2652 = vadd.f32 0.0, %v2651
      %v2653 = vpop.f32.mrb[0].mxu0
      %v2654 = vpop.f32.mrb[0].mxu0
      %v2655 = vadd.f32 0.0, %v2654
      %v2656 = vpop.f32.mrb[0].mxu0
      %2657 = vmatprep.mubr.bf16.mxu0 0
      %2658 = vmatmul.mubr.bf16.gmra.mrb[0].mxu0 %v2502
      %v2659 = vpop.f32.mrb[0].mxu0
      %v2660 = vadd.f32 0.0, %v2659
      %v2661 = vpop.f32.mrb[0].mxu0
      %v2662 = vpop.f32.mrb[0].mxu0
      %v2663 = vadd.f32 0.0, %v2662
      %v2664 = vpop.f32.mrb[0].mxu0
      %2665 = vmatprep.mubr.bf16.mxu0 0
      %2666 = vmatmul.mubr.bf16.gmra.mrb[0].mxu0 %v2503
      %v2667 = vpop.f32.mrb[0].mxu0
      %v2668 = vadd.f32 0.0, %v2667
      %v2669 = vpop.f32.mrb[0].mxu0
      %v2670 = vpop.f32.mrb[0].mxu0
      %v2671 = vadd.f32 0.0, %v2670
      %v2672 = vpop.f32.mrb[0].mxu0
      %2673 = vmatprep.mubr.bf16.mxu0 0
      %2674 = vmatmul.mubr.bf16.gmra.mrb[0].mxu0 %v2504
      %v2675 = vpop.f32.mrb[0].mxu0
      %v2676 = vadd.f32 0.0, %v2675
      %v2677 = vpop.f32.mrb[0].mxu0
      %v2678 = vpop.f32.mrb[0].mxu0
      %v2679 = vadd.f32 0.0, %v2678
      %v2680 = vpop.f32.mrb[0].mxu0
      %2681 = vmatprep.mubr.bf16.mxu0 0
      %2682 = vmatmul.mubr.bf16.gmra.mrb[0].mxu0 %v2505
      %v2683 = vpop.f32.mrb[0].mxu0
      %v2684 = vadd.f32 0.0, %v2683
      %v2685 = vpop.f32.mrb[0].mxu0
      %v2686 = vpop.f32.mrb[0].mxu0
      %v2687 = vadd.f32 0.0, %v2686
      %v2688 = vpop.f32.mrb[0].mxu0
      %2689 = vmatprep.mubr.bf16.mxu0 0
      %2690 = vmatmul.mubr.bf16.gmra.mrb[0].mxu0 %v2506
      %v2691 = vpop.f32.mrb[0].mxu0
      %v2692 = vadd.f32 0.0, %v2691
      %v2693 = vpop.f32.mrb[0].mxu0
      %v2694 = vpop.f32.mrb[0].mxu0
      %v2695 = vadd.f32 0.0, %v2694
      %v2696 = vpop.f32.mrb[0].mxu0
      %2697 = vmatprep.mubr.bf16.mxu0 0
      %2698 = vmatmul.mubr.bf16.gmra.mrb[0].mxu0 %v2507
      %v2699 = vpop.f32.mrb[0].mxu0
      %v2700 = vadd.f32 0.0, %v2699
      %v2701 = vpop.f32.mrb[0].mxu0
      %v2702 = vpop.f32.mrb[0].mxu0
      %v2703 = vadd.f32 0.0, %v2702
      %v2704 = vpop.f32.mrb[0].mxu0
      %2705 = vmatprep.mubr.bf16.mxu0 0
      %2706 = vmatmul.mubr.bf16.gmra.mrb[0].mxu0 %v2508
      %v2707 = vpop.f32.mrb[0].mxu0
      %v2708 = vadd.f32 0.0, %v2707
      %v2709 = vpop.f32.mrb[0].mxu0
      %v2710 = vpop.f32.mrb[0].mxu0
      %v2711 = vadd.f32 0.0, %v2710
      %v2712 = vpop.f32.mrb[0].mxu0
      %2713 = vmatprep.mubr.bf16.mxu0 0
      %2714 = vmatmul.mubr.bf16.gmra.mrb[0].mxu0 %v2509
      %v2715 = vpop.f32.mrb[0].mxu0
      %v2716 = vadd.f32 0.0, %v2715
      %v2717 = vpop.f32.mrb[0].mxu0
      %v2718 = vpop.f32.mrb[0].mxu0
      %v2719 = vadd.f32 0.0, %v2718
      %v2720 = vpop.f32.mrb[0].mxu0
      %2721 = vmatprep.mubr.bf16.mxu0 0
      %2722 = vmatmul.mubr.bf16.gmra.mrb[0].mxu0 %v2510
      %v2723 = vpop.f32.mrb[0].mxu0
      %v2724 = vadd.f32 0.0, %v2723
      %v2725 = vpop.f32.mrb[0].mxu0
      %v2726 = vpop.f32.mrb[0].mxu0
      %v2727 = vadd.f32 0.0, %v2726
      %v2728 = vpop.f32.mrb[0].mxu0
      %2729 = vmatprep.mubr.bf16.mxu0 0
      %2730 = vmatmul.mubr.bf16.gmra.mrb[0].mxu0 %v2511
      %v2731 = vpop.f32.mrb[0].mxu0
      %v2732 = vadd.f32 0.0, %v2731
      %v2733 = vpop.f32.mrb[0].mxu0
      %v2734 = vpop.f32.mrb[0].mxu0
      %v2735 = vadd.f32 0.0, %v2734
      %v2736 = vpop.f32.mrb[0].mxu0
      %2737 = vdwg.mxu0
      %v2738 = vld [vmem:[#allocation3] sm:$0xff]
      %v2739 = vld [vmem:[#allocation3 + $0x8] sm:$0xff]
      %v2740 = vld [vmem:[#allocation3 + $0x10] sm:$0xff]
      %v2741 = vld [vmem:[#allocation3 + $0x18] sm:$0xff]
      %v2742 = vld [vmem:[#allocation3 + $0x20] sm:$0xff]
      %v2743 = vld [vmem:[#allocation3 + $0x28] sm:$0xff]
      %v2744 = vld [vmem:[#allocation3 + $0x30] sm:$0xff]
      %v2745 = vld [vmem:[#allocation3 + $0x38] sm:$0xff]
      %v2746 = vld [vmem:[#allocation3 + $0x40] sm:$0xff]
      %v2747 = vld [vmem:[#allocation3 + $0x48] sm:$0xff]
      %v2748 = vld [vmem:[#allocation3 + $0x50] sm:$0xff]
      %v2749 = vld [vmem:[#allocation3 + $0x58] sm:$0xff]
      %v2750 = vld [vmem:[#allocation3 + $0x60] sm:$0xff]
      %v2751 = vld [vmem:[#allocation3 + $0x68] sm:$0xff]
      %v2752 = vld [vmem:[#allocation3 + $0x70] sm:$0xff]
      %v2753 = vld [vmem:[#allocation3 + $0x78] sm:$0xff]
      %v2754 = vld [vmem:[#allocation3 + $0x80] sm:$0xff]
      %v2755 = vld [vmem:[#allocation3 + $0x88] sm:$0xff]
      %v2756 = vld [vmem:[#allocation3 + $0x90] sm:$0xff]
      %v2757 = vld [vmem:[#allocation3 + $0x98] sm:$0xff]
      %v2758 = vld [vmem:[#allocation3 + $0xa0] sm:$0xff]
      %v2759 = vld [vmem:[#allocation3 + $0xa8] sm:$0xff]
      %v2760 = vld [vmem:[#allocation3 + $0xb0] sm:$0xff]
      %v2761 = vld [vmem:[#allocation3 + $0xb8] sm:$0xff]
      %v2762 = vld [vmem:[#allocation3 + $0xc0] sm:$0xff]
      %v2763 = vld [vmem:[#allocation3 + $0xc8] sm:$0xff]
      %v2764 = vld [vmem:[#allocation3 + $0xd0] sm:$0xff]
      %v2765 = vld [vmem:[#allocation3 + $0xd8] sm:$0xff]
      %v2766 = vld [vmem:[#allocation3 + $0xe0] sm:$0xff]
      %v2767 = vld [vmem:[#allocation3 + $0xe8] sm:$0xff]
      %v2768 = vld [vmem:[#allocation3 + $0xf0] sm:$0xff]
      %v2769 = vld [vmem:[#allocation3 + $0xf8] sm:$0xff]
      %v2770 = vadd.f32 %v2738, %v2612
      %v2771 = vadd.f32 %v2739, %v2615
      %v2772 = vadd.f32 %v2740, %v2620
      %v2773 = vadd.f32 %v2741, %v2623
      %v2774 = vadd.f32 %v2742, %v2628
      %v2775 = vadd.f32 %v2743, %v2631
      %v2776 = vadd.f32 %v2744, %v2636
      %v2777 = vadd.f32 %v2745, %v2639
      %v2778 = vadd.f32 %v2746, %v2644
      %v2779 = vadd.f32 %v2747, %v2647
      %v2780 = vadd.f32 %v2748, %v2652
      %v2781 = vadd.f32 %v2749, %v2655
      %v2782 = vadd.f32 %v2750, %v2660
      %v2783 = vadd.f32 %v2751, %v2663
      %v2784 = vadd.f32 %v2752, %v2668
      %v2785 = vadd.f32 %v2753, %v2671
      %v2786 = vadd.f32 %v2754, %v2676
      %v2787 = vadd.f32 %v2755, %v2679
      %v2788 = vadd.f32 %v2756, %v2684
      %v2789 = vadd.f32 %v2757, %v2687
      %v2790 = vadd.f32 %v2758, %v2692
      %v2791 = vadd.f32 %v2759, %v2695
      %v2792 = vadd.f32 %v2760, %v2700
      %v2793 = vadd.f32 %v2761, %v2703
      %v2794 = vadd.f32 %v2762, %v2708
      %v2795 = vadd.f32 %v2763, %v2711
      %v2796 = vadd.f32 %v2764, %v2716
      %v2797 = vadd.f32 %v2765, %v2719
      %v2798 = vadd.f32 %v2766, %v2724
      %v2799 = vadd.f32 %v2767, %v2727
      %v2800 = vadd.f32 %v2768, %v2732
      %v2801 = vadd.f32 %v2769, %v2735
      %2802 = vst [vmem:[#allocation3] sm:$0xff] %v2770
      %2803 = vst [vmem:[#allocation3 + $0x8] sm:$0xff] %v2771
      %2804 = vst [vmem:[#allocation3 + $0x10] sm:$0xff] %v2772
      %2805 = vst [vmem:[#allocation3 + $0x18] sm:$0xff] %v2773
      %2806 = vst [vmem:[#allocation3 + $0x20] sm:$0xff] %v2774
      %2807 = vst [vmem:[#allocation3 + $0x28] sm:$0xff] %v2775
      %2808 = vst [vmem:[#allocation3 + $0x30] sm:$0xff] %v2776
      %2809 = vst [vmem:[#allocation3 + $0x38] sm:$0xff] %v2777
      %2810 = vst [vmem:[#allocation3 + $0x40] sm:$0xff] %v2778
      %2811 = vst [vmem:[#allocation3 + $0x48] sm:$0xff] %v2779
      %2812 = vst [vmem:[#allocation3 + $0x50] sm:$0xff] %v2780
      %2813 = vst [vmem:[#allocation3 + $0x58] sm:$0xff] %v2781
      %2814 = vst [vmem:[#allocation3 + $0x60] sm:$0xff] %v2782
      %2815 = vst [vmem:[#allocation3 + $0x68] sm:$0xff] %v2783
      %2816 = vst [vmem:[#allocation3 + $0x70] sm:$0xff] %v2784
      %2817 = vst [vmem:[#allocation3 + $0x78] sm:$0xff] %v2785
      %2818 = vst [vmem:[#allocation3 + $0x80] sm:$0xff] %v2786
      %2819 = vst [vmem:[#allocation3 + $0x88] sm:$0xff] %v2787
      %2820 = vst [vmem:[#allocation3 + $0x90] sm:$0xff] %v2788
      %2821 = vst [vmem:[#allocation3 + $0x98] sm:$0xff] %v2789
      %2822 = vst [vmem:[#allocation3 + $0xa0] sm:$0xff] %v2790
      %2823 = vst [vmem:[#allocation3 + $0xa8] sm:$0xff] %v2791
      %2824 = vst [vmem:[#allocation3 + $0xb0] sm:$0xff] %v2792
      %2825 = vst [vmem:[#allocation3 + $0xb8] sm:$0xff] %v2793
      %2826 = vst [vmem:[#allocation3 + $0xc0] sm:$0xff] %v2794
      %2827 = vst [vmem:[#allocation3 + $0xc8] sm:$0xff] %v2795
      %2828 = vst [vmem:[#allocation3 + $0xd0] sm:$0xff] %v2796
      %2829 = vst [vmem:[#allocation3 + $0xd8] sm:$0xff] %v2797
      %2830 = vst [vmem:[#allocation3 + $0xe0] sm:$0xff] %v2798
      %2831 = vst [vmem:[#allocation3 + $0xe8] sm:$0xff] %v2799
      %2832 = vst [vmem:[#allocation3 + $0xf0] sm:$0xff] %v2800
      %2833 = vst [vmem:[#allocation3 + $0xf8] sm:$0xff] %v2801
      %s2834 = scalar_lea.vmem [#allocation2], 48
      %v2835 = vld [vmem:[%s2834] sm:$0xff]
      %v2836 = vld [vmem:[%s2834 + $0x8] sm:$0xff]
      %v2837 = vld [vmem:[%s2834 + $0x18] sm:$0xff]
      %v2838 = vld [vmem:[%s2834 + $0x20] sm:$0xff]
      %v2839 = vld [vmem:[%s2834 + $0x30] sm:$0xff]
      %v2840 = vld [vmem:[%s2834 + $0x38] sm:$0xff]
      %v2841 = vld [vmem:[%s2834 + $0x48] sm:$0xff]
      %v2842 = vld [vmem:[%s2834 + $0x50] sm:$0xff]
      %v2843 = vld [vmem:[%s2834 + $0x60] sm:$0xff]
      %v2844 = vld [vmem:[%s2834 + $0x68] sm:$0xff]
      %v2845 = vld [vmem:[%s2834 + $0x78] sm:$0xff]
      %v2846 = vld [vmem:[%s2834 + $0x80] sm:$0xff]
      %v2847 = vld [vmem:[%s2834 + $0x90] sm:$0xff]
      %v2848 = vld [vmem:[%s2834 + $0x98] sm:$0xff]
      %v2849 = vld [vmem:[%s2834 + $0xa8] sm:$0xff]
      %v2850 = vld [vmem:[%s2834 + $0xb0] sm:$0xff]
      %v2851 = vld [vmem:[%s2834 + $0xc0] sm:$0xff]
      %v2852 = vld [vmem:[%s2834 + $0xc8] sm:$0xff]
      %v2853 = vld [vmem:[%s2834 + $0xd8] sm:$0xff]
      %v2854 = vld [vmem:[%s2834 + $0xe0] sm:$0xff]
      %v2855 = vld [vmem:[%s2834 + $0xf0] sm:$0xff]
      %v2856 = vld [vmem:[%s2834 + $0xf8] sm:$0xff]
      %v2857 = vld [vmem:[%s2834 + $0x108] sm:$0xff]
      %v2858 = vld [vmem:[%s2834 + $0x110] sm:$0xff]
      %v2859 = vld [vmem:[%s2834 + $0x120] sm:$0xff]
      %v2860 = vld [vmem:[%s2834 + $0x128] sm:$0xff]
      %v2861 = vld [vmem:[%s2834 + $0x138] sm:$0xff]
      %v2862 = vld [vmem:[%s2834 + $0x140] sm:$0xff]
      %v2863 = vld [vmem:[%s2834 + $0x150] sm:$0xff]
      %v2864 = vld [vmem:[%s2834 + $0x158] sm:$0xff]
      %v2865 = vld [vmem:[%s2834 + $0x168] sm:$0xff]
      %v2866 = vld [vmem:[%s2834 + $0x170] sm:$0xff]
      %v2867 = vpack.c.bf16 %v2836, %v2835
      %v2868 = vpack.c.bf16 %v2838, %v2837
      %v2869 = vpack.c.bf16 %v2840, %v2839
      %v2870 = vpack.c.bf16 %v2842, %v2841
      %v2871 = vpack.c.bf16 %v2844, %v2843
      %v2872 = vpack.c.bf16 %v2846, %v2845
      %v2873 = vpack.c.bf16 %v2848, %v2847
      %v2874 = vpack.c.bf16 %v2850, %v2849
      %v2875 = vpack.c.bf16 %v2852, %v2851
      %v2876 = vpack.c.bf16 %v2854, %v2853
      %v2877 = vpack.c.bf16 %v2856, %v2855
      %v2878 = vpack.c.bf16 %v2858, %v2857
      %v2879 = vpack.c.bf16 %v2860, %v2859
      %v2880 = vpack.c.bf16 %v2862, %v2861
      %v2881 = vpack.c.bf16 %v2864, %v2863
      %v2882 = vpack.c.bf16 %v2866, %v2865
      %s2883 = scalar_lea.vmem %s3, 384
      %v2884 = vld [vmem:[%s2883] sm:$0xf]
      %v2885 = vld [vmem:[%s2883 + $0x4] sm:$0xf]
      %v2886 = vld [vmem:[%s2883 + $0x8] sm:$0xf]
      %v2887 = vld [vmem:[%s2883 + $0xc] sm:$0xf]
      %v2888 = vld [vmem:[%s2883 + $0x10] sm:$0xf]
      %v2889 = vld [vmem:[%s2883 + $0x14] sm:$0xf]
      %v2890 = vld [vmem:[%s2883 + $0x18] sm:$0xf]
      %v2891 = vld [vmem:[%s2883 + $0x1c] sm:$0xf]
      %v2892 = vld [vmem:[%s2883 + $0x20] sm:$0xf]
      %v2893 = vld [vmem:[%s2883 + $0x24] sm:$0xf]
      %v2894 = vld [vmem:[%s2883 + $0x28] sm:$0xf]
      %v2895 = vld [vmem:[%s2883 + $0x2c] sm:$0xf]
      %v2896 = vld [vmem:[%s2883 + $0x30] sm:$0xf]
      %v2897 = vld [vmem:[%s2883 + $0x34] sm:$0xf]
      %v2898 = vld [vmem:[%s2883 + $0x38] sm:$0xf]
      %v2899 = vld [vmem:[%s2883 + $0x3c] sm:$0xf]
      %v2916 = vunpack.c.l.b16 %v2884
      %v2917 = vunpack.c.l.b16 %v2885
      %v2918 = vunpack.c.l.b16 %v2886
      %v2919 = vunpack.c.l.b16 %v2887
      %v2920 = vunpack.c.l.b16 %v2888
      %v2921 = vunpack.c.l.b16 %v2889
      %v2922 = vunpack.c.l.b16 %v2890
      %v2923 = vunpack.c.l.b16 %v2891
      %v2924 = vunpack.c.l.b16 %v2892
      %v2925 = vunpack.c.l.b16 %v2893
      %v2926 = vunpack.c.l.b16 %v2894
      %v2927 = vunpack.c.l.b16 %v2895
      %v2928 = vunpack.c.l.b16 %v2896
      %v2929 = vunpack.c.l.b16 %v2897
      %v2930 = vunpack.c.l.b16 %v2898
      %v2931 = vunpack.c.l.b16 %v2899
      %v2932 = vpack.c.b16 %v2917, %v2916
      %v2933 = vpack.c.b16 %v2919, %v2918
      %v2934 = vpack.c.b16 %v2921, %v2920
      %v2935 = vpack.c.b16 %v2923, %v2922
      %v2936 = vpack.c.b16 %v2925, %v2924
      %v2937 = vpack.c.b16 %v2927, %v2926
      %v2938 = vpack.c.b16 %v2929, %v2928
      %v2939 = vpack.c.b16 %v2931, %v2930
      %2948 = vmatprep.subr.bf16.mxu0 0
      %2949 = vmatpush1.bf16.msra.mxu0 %v2932
      %2950 = vmatprep.subr.bf16.mxu0 0
      %2951 = vmatpush1.bf16.msra.mxu0 %v2933
      %2952 = vmatprep.subr.bf16.mxu0 0
      %2953 = vmatpush1.bf16.msra.mxu0 %v2934
      %2954 = vmatprep.subr.bf16.mxu0 0
      %2955 = vmatpush1.bf16.msra.mxu0 %v2935
      %2956 = vmatprep.subr.bf16.mxu0 0
      %2957 = vmatpush1.bf16.msra.mxu0 %v2936
      %2958 = vmatprep.subr.bf16.mxu0 0
      %2959 = vmatpush1.bf16.msra.mxu0 %v2937
      %2960 = vmatprep.subr.bf16.mxu0 0
      %2961 = vmatpush1.bf16.msra.mxu0 %v2938
      %2962 = vmatprep.subr.bf16.mxu0 0
      %2963 = vmatpush1.bf16.msra.mxu0 %v2939
      %2964 = vmatprep.subr.bf16.mxu0 0
      %2965 = vmatpush1.bf16.msra.mxu0 0
      %2966 = vmatprep.subr.bf16.mxu0 0
      %2967 = vmatpush1.bf16.msra.mxu0 0
      %2968 = vmatprep.subr.bf16.mxu0 0
      %2969 = vmatpush1.bf16.msra.mxu0 0
      %2970 = vmatprep.subr.bf16.mxu0 0
      %2971 = vmatpush1.bf16.msra.mxu0 0
      %2972 = vmatprep.subr.bf16.mxu0 0
      %2973 = vmatpush1.bf16.msra.mxu0 0
      %2974 = vmatprep.subr.bf16.mxu0 0
      %2975 = vmatpush1.bf16.msra.mxu0 0
      %2976 = vmatprep.subr.bf16.mxu0 0
      %2977 = vmatpush1.bf16.msra.mxu0 0
      %2978 = vmatprep.subr.bf16.mxu0 0
      %2979 = vmatpush1.bf16.msra.mxu0 0
      %2980 = vmatprep.mubr.bf16.mxu0 0
      %2981 = vmatmul.mubr.bf16.gmra.mrb[0].mxu0 %v2867
      %v2982 = vpop.f32.mrb[0].mxu0
      %v2983 = vadd.f32 0.0, %v2982
      %v2984 = vpop.f32.mrb[0].mxu0
      %v2985 = vpop.f32.mrb[0].mxu0
      %v2986 = vadd.f32 0.0, %v2985
      %v2987 = vpop.f32.mrb[0].mxu0
      %2988 = vmatprep.mubr.bf16.mxu0 0
      %2989 = vmatmul.mubr.bf16.gmra.mrb[0].mxu0 %v2868
      %v2990 = vpop.f32.mrb[0].mxu0
      %v2991 = vadd.f32 0.0, %v2990
      %v2992 = vpop.f32.mrb[0].mxu0
      %v2993 = vpop.f32.mrb[0].mxu0
      %v2994 = vadd.f32 0.0, %v2993
      %v2995 = vpop.f32.mrb[0].mxu0
      %2996 = vmatprep.mubr.bf16.mxu0 0
      %2997 = vmatmul.mubr.bf16.gmra.mrb[0].mxu0 %v2869
      %v2998 = vpop.f32.mrb[0].mxu0
      %v2999 = vadd.f32 0.0, %v2998
      %v3000 = vpop.f32.mrb[0].mxu0
      %v3001 = vpop.f32.mrb[0].mxu0
      %v3002 = vadd.f32 0.0, %v3001
      %v3003 = vpop.f32.mrb[0].mxu0
      %3004 = vmatprep.mubr.bf16.mxu0 0
      %3005 = vmatmul.mubr.bf16.gmra.mrb[0].mxu0 %v2870
      %v3006 = vpop.f32.mrb[0].mxu0
      %v3007 = vadd.f32 0.0, %v3006
      %v3008 = vpop.f32.mrb[0].mxu0
      %v3009 = vpop.f32.mrb[0].mxu0
      %v3010 = vadd.f32 0.0, %v3009
      %v3011 = vpop.f32.mrb[0].mxu0
      %3012 = vmatprep.mubr.bf16.mxu0 0
      %3013 = vmatmul.mubr.bf16.gmra.mrb[0].mxu0 %v2871
      %v3014 = vpop.f32.mrb[0].mxu0
      %v3015 = vadd.f32 0.0, %v3014
      %v3016 = vpop.f32.mrb[0].mxu0
      %v3017 = vpop.f32.mrb[0].mxu0
      %v3018 = vadd.f32 0.0, %v3017
      %v3019 = vpop.f32.mrb[0].mxu0
      %3020 = vmatprep.mubr.bf16.mxu0 0
      %3021 = vmatmul.mubr.bf16.gmra.mrb[0].mxu0 %v2872
      %v3022 = vpop.f32.mrb[0].mxu0
      %v3023 = vadd.f32 0.0, %v3022
      %v3024 = vpop.f32.mrb[0].mxu0
      %v3025 = vpop.f32.mrb[0].mxu0
      %v3026 = vadd.f32 0.0, %v3025
      %v3027 = vpop.f32.mrb[0].mxu0
      %3028 = vmatprep.mubr.bf16.mxu0 0
      %3029 = vmatmul.mubr.bf16.gmra.mrb[0].mxu0 %v2873
      %v3030 = vpop.f32.mrb[0].mxu0
      %v3031 = vadd.f32 0.0, %v3030
      %v3032 = vpop.f32.mrb[0].mxu0
      %v3033 = vpop.f32.mrb[0].mxu0
      %v3034 = vadd.f32 0.0, %v3033
      %v3035 = vpop.f32.mrb[0].mxu0
      %3036 = vmatprep.mubr.bf16.mxu0 0
      %3037 = vmatmul.mubr.bf16.gmra.mrb[0].mxu0 %v2874
      %v3038 = vpop.f32.mrb[0].mxu0
      %v3039 = vadd.f32 0.0, %v3038
      %v3040 = vpop.f32.mrb[0].mxu0
      %v3041 = vpop.f32.mrb[0].mxu0
      %v3042 = vadd.f32 0.0, %v3041
      %v3043 = vpop.f32.mrb[0].mxu0
      %3044 = vmatprep.mubr.bf16.mxu0 0
      %3045 = vmatmul.mubr.bf16.gmra.mrb[0].mxu0 %v2875
      %v3046 = vpop.f32.mrb[0].mxu0
      %v3047 = vadd.f32 0.0, %v3046
      %v3048 = vpop.f32.mrb[0].mxu0
      %v3049 = vpop.f32.mrb[0].mxu0
      %v3050 = vadd.f32 0.0, %v3049
      %v3051 = vpop.f32.mrb[0].mxu0
      %3052 = vmatprep.mubr.bf16.mxu0 0
      %3053 = vmatmul.mubr.bf16.gmra.mrb[0].mxu0 %v2876
      %v3054 = vpop.f32.mrb[0].mxu0
      %v3055 = vadd.f32 0.0, %v3054
      %v3056 = vpop.f32.mrb[0].mxu0
      %v3057 = vpop.f32.mrb[0].mxu0
      %v3058 = vadd.f32 0.0, %v3057
      %v3059 = vpop.f32.mrb[0].mxu0
      %3060 = vmatprep.mubr.bf16.mxu0 0
      %3061 = vmatmul.mubr.bf16.gmra.mrb[0].mxu0 %v2877
      %v3062 = vpop.f32.mrb[0].mxu0
      %v3063 = vadd.f32 0.0, %v3062
      %v3064 = vpop.f32.mrb[0].mxu0
      %v3065 = vpop.f32.mrb[0].mxu0
      %v3066 = vadd.f32 0.0, %v3065
      %v3067 = vpop.f32.mrb[0].mxu0
      %3068 = vmatprep.mubr.bf16.mxu0 0
      %3069 = vmatmul.mubr.bf16.gmra.mrb[0].mxu0 %v2878
      %v3070 = vpop.f32.mrb[0].mxu0
      %v3071 = vadd.f32 0.0, %v3070
      %v3072 = vpop.f32.mrb[0].mxu0
      %v3073 = vpop.f32.mrb[0].mxu0
      %v3074 = vadd.f32 0.0, %v3073
      %v3075 = vpop.f32.mrb[0].mxu0
      %3076 = vmatprep.mubr.bf16.mxu0 0
      %3077 = vmatmul.mubr.bf16.gmra.mrb[0].mxu0 %v2879
      %v3078 = vpop.f32.mrb[0].mxu0
      %v3079 = vadd.f32 0.0, %v3078
      %v3080 = vpop.f32.mrb[0].mxu0
      %v3081 = vpop.f32.mrb[0].mxu0
      %v3082 = vadd.f32 0.0, %v3081
      %v3083 = vpop.f32.mrb[0].mxu0
      %3084 = vmatprep.mubr.bf16.mxu0 0
      %3085 = vmatmul.mubr.bf16.gmra.mrb[0].mxu0 %v2880
      %v3086 = vpop.f32.mrb[0].mxu0
      %v3087 = vadd.f32 0.0, %v3086
      %v3088 = vpop.f32.mrb[0].mxu0
      %v3089 = vpop.f32.mrb[0].mxu0
      %v3090 = vadd.f32 0.0, %v3089
      %v3091 = vpop.f32.mrb[0].mxu0
      %3092 = vmatprep.mubr.bf16.mxu0 0
      %3093 = vmatmul.mubr.bf16.gmra.mrb[0].mxu0 %v2881
      %v3094 = vpop.f32.mrb[0].mxu0
      %v3095 = vadd.f32 0.0, %v3094
      %v3096 = vpop.f32.mrb[0].mxu0
      %v3097 = vpop.f32.mrb[0].mxu0
      %v3098 = vadd.f32 0.0, %v3097
      %v3099 = vpop.f32.mrb[0].mxu0
      %3100 = vmatprep.mubr.bf16.mxu0 0
      %3101 = vmatmul.mubr.bf16.gmra.mrb[0].mxu0 %v2882
      %v3102 = vpop.f32.mrb[0].mxu0
      %v3103 = vadd.f32 0.0, %v3102
      %v3104 = vpop.f32.mrb[0].mxu0
      %v3105 = vpop.f32.mrb[0].mxu0
      %v3106 = vadd.f32 0.0, %v3105
      %v3107 = vpop.f32.mrb[0].mxu0
      %3108 = vdwg.mxu0
      %v3109 = vld [vmem:[#allocation3] sm:$0xff]
      %v3110 = vld [vmem:[#allocation3 + $0x8] sm:$0xff]
      %v3111 = vld [vmem:[#allocation3 + $0x10] sm:$0xff]
      %v3112 = vld [vmem:[#allocation3 + $0x18] sm:$0xff]
      %v3113 = vld [vmem:[#allocation3 + $0x20] sm:$0xff]
      %v3114 = vld [vmem:[#allocation3 + $0x28] sm:$0xff]
      %v3115 = vld [vmem:[#allocation3 + $0x30] sm:$0xff]
      %v3116 = vld [vmem:[#allocation3 + $0x38] sm:$0xff]
      %v3117 = vld [vmem:[#allocation3 + $0x40] sm:$0xff]
      %v3118 = vld [vmem:[#allocation3 + $0x48] sm:$0xff]
      %v3119 = vld [vmem:[#allocation3 + $0x50] sm:$0xff]
      %v3120 = vld [vmem:[#allocation3 + $0x58] sm:$0xff]
      %v3121 = vld [vmem:[#allocation3 + $0x60] sm:$0xff]
      %v3122 = vld [vmem:[#allocation3 + $0x68] sm:$0xff]
      %v3123 = vld [vmem:[#allocation3 + $0x70] sm:$0xff]
      %v3124 = vld [vmem:[#allocation3 + $0x78] sm:$0xff]
      %v3125 = vld [vmem:[#allocation3 + $0x80] sm:$0xff]
      %v3126 = vld [vmem:[#allocation3 + $0x88] sm:$0xff]
      %v3127 = vld [vmem:[#allocation3 + $0x90] sm:$0xff]
      %v3128 = vld [vmem:[#allocation3 + $0x98] sm:$0xff]
      %v3129 = vld [vmem:[#allocation3 + $0xa0] sm:$0xff]
      %v3130 = vld [vmem:[#allocation3 + $0xa8] sm:$0xff]
      %v3131 = vld [vmem:[#allocation3 + $0xb0] sm:$0xff]
      %v3132 = vld [vmem:[#allocation3 + $0xb8] sm:$0xff]
      %v3133 = vld [vmem:[#allocation3 + $0xc0] sm:$0xff]
      %v3134 = vld [vmem:[#allocation3 + $0xc8] sm:$0xff]
      %v3135 = vld [vmem:[#allocation3 + $0xd0] sm:$0xff]
      %v3136 = vld [vmem:[#allocation3 + $0xd8] sm:$0xff]
      %v3137 = vld [vmem:[#allocation3 + $0xe0] sm:$0xff]
      %v3138 = vld [vmem:[#allocation3 + $0xe8] sm:$0xff]
      %v3139 = vld [vmem:[#allocation3 + $0xf0] sm:$0xff]
      %v3140 = vld [vmem:[#allocation3 + $0xf8] sm:$0xff]
      %v3141 = vadd.f32 %v3109, %v2983
      %v3142 = vadd.f32 %v3110, %v2986
      %v3143 = vadd.f32 %v3111, %v2991
      %v3144 = vadd.f32 %v3112, %v2994
      %v3145 = vadd.f32 %v3113, %v2999
      %v3146 = vadd.f32 %v3114, %v3002
      %v3147 = vadd.f32 %v3115, %v3007
      %v3148 = vadd.f32 %v3116, %v3010
      %v3149 = vadd.f32 %v3117, %v3015
      %v3150 = vadd.f32 %v3118, %v3018
      %v3151 = vadd.f32 %v3119, %v3023
      %v3152 = vadd.f32 %v3120, %v3026
      %v3153 = vadd.f32 %v3121, %v3031
      %v3154 = vadd.f32 %v3122, %v3034
      %v3155 = vadd.f32 %v3123, %v3039
      %v3156 = vadd.f32 %v3124, %v3042
      %v3157 = vadd.f32 %v3125, %v3047
      %v3158 = vadd.f32 %v3126, %v3050
      %v3159 = vadd.f32 %v3127, %v3055
      %v3160 = vadd.f32 %v3128, %v3058
      %v3161 = vadd.f32 %v3129, %v3063
      %v3162 = vadd.f32 %v3130, %v3066
      %v3163 = vadd.f32 %v3131, %v3071
      %v3164 = vadd.f32 %v3132, %v3074
      %v3165 = vadd.f32 %v3133, %v3079
      %v3166 = vadd.f32 %v3134, %v3082
      %v3167 = vadd.f32 %v3135, %v3087
      %v3168 = vadd.f32 %v3136, %v3090
      %v3169 = vadd.f32 %v3137, %v3095
      %v3170 = vadd.f32 %v3138, %v3098
      %v3171 = vadd.f32 %v3139, %v3103
      %v3172 = vadd.f32 %v3140, %v3106
      %3173 = vst [vmem:[#allocation3] sm:$0xff] %v3141
      %3174 = vst [vmem:[#allocation3 + $0x8] sm:$0xff] %v3142
      %3175 = vst [vmem:[#allocation3 + $0x10] sm:$0xff] %v3143
      %3176 = vst [vmem:[#allocation3 + $0x18] sm:$0xff] %v3144
      %3177 = vst [vmem:[#allocation3 + $0x20] sm:$0xff] %v3145
      %3178 = vst [vmem:[#allocation3 + $0x28] sm:$0xff] %v3146
      %3179 = vst [vmem:[#allocation3 + $0x30] sm:$0xff] %v3147
      %3180 = vst [vmem:[#allocation3 + $0x38] sm:$0xff] %v3148
      %3181 = vst [vmem:[#allocation3 + $0x40] sm:$0xff] %v3149
      %3182 = vst [vmem:[#allocation3 + $0x48] sm:$0xff] %v3150
      %3183 = vst [vmem:[#allocation3 + $0x50] sm:$0xff] %v3151
      %3184 = vst [vmem:[#allocation3 + $0x58] sm:$0xff] %v3152
      %3185 = vst [vmem:[#allocation3 + $0x60] sm:$0xff] %v3153
      %3186 = vst [vmem:[#allocation3 + $0x68] sm:$0xff] %v3154
      %3187 = vst [vmem:[#allocation3 + $0x70] sm:$0xff] %v3155
      %3188 = vst [vmem:[#allocation3 + $0x78] sm:$0xff] %v3156
      %3189 = vst [vmem:[#allocation3 + $0x80] sm:$0xff] %v3157
      %3190 = vst [vmem:[#allocation3 + $0x88] sm:$0xff] %v3158
      %3191 = vst [vmem:[#allocation3 + $0x90] sm:$0xff] %v3159
      %3192 = vst [vmem:[#allocation3 + $0x98] sm:$0xff] %v3160
      %3193 = vst [vmem:[#allocation3 + $0xa0] sm:$0xff] %v3161
      %3194 = vst [vmem:[#allocation3 + $0xa8] sm:$0xff] %v3162
      %3195 = vst [vmem:[#allocation3 + $0xb0] sm:$0xff] %v3163
      %3196 = vst [vmem:[#allocation3 + $0xb8] sm:$0xff] %v3164
      %3197 = vst [vmem:[#allocation3 + $0xc0] sm:$0xff] %v3165
      %3198 = vst [vmem:[#allocation3 + $0xc8] sm:$0xff] %v3166
      %3199 = vst [vmem:[#allocation3 + $0xd0] sm:$0xff] %v3167
      %3200 = vst [vmem:[#allocation3 + $0xd8] sm:$0xff] %v3168
      %3201 = vst [vmem:[#allocation3 + $0xe0] sm:$0xff] %v3169
      %3202 = vst [vmem:[#allocation3 + $0xe8] sm:$0xff] %v3170
      %3203 = vst [vmem:[#allocation3 + $0xf0] sm:$0xff] %v3171
      %3204 = vst [vmem:[#allocation3 + $0xf8] sm:$0xff] %v3172
      %v3205 = vld [vmem:[%s2834 + $0x1] sm:$0xff]
      %v3206 = vld [vmem:[%s2834 + $0x9] sm:$0xff]
      %v3207 = vld [vmem:[%s2834 + $0x19] sm:$0xff]
      %v3208 = vld [vmem:[%s2834 + $0x21] sm:$0xff]
      %v3209 = vld [vmem:[%s2834 + $0x31] sm:$0xff]
      %v3210 = vld [vmem:[%s2834 + $0x39] sm:$0xff]
      %v3211 = vld [vmem:[%s2834 + $0x49] sm:$0xff]
      %v3212 = vld [vmem:[%s2834 + $0x51] sm:$0xff]
      %v3213 = vld [vmem:[%s2834 + $0x61] sm:$0xff]
      %v3214 = vld [vmem:[%s2834 + $0x69] sm:$0xff]
      %v3215 = vld [vmem:[%s2834 + $0x79] sm:$0xff]
      %v3216 = vld [vmem:[%s2834 + $0x81] sm:$0xff]
      %v3217 = vld [vmem:[%s2834 + $0x91] sm:$0xff]
      %v3218 = vld [vmem:[%s2834 + $0x99] sm:$0xff]
      %v3219 = vld [vmem:[%s2834 + $0xa9] sm:$0xff]
      %v3220 = vld [vmem:[%s2834 + $0xb1] sm:$0xff]
      %v3221 = vld [vmem:[%s2834 + $0xc1] sm:$0xff]
      %v3222 = vld [vmem:[%s2834 + $0xc9] sm:$0xff]
      %v3223 = vld [vmem:[%s2834 + $0xd9] sm:$0xff]
      %v3224 = vld [vmem:[%s2834 + $0xe1] sm:$0xff]
      %v3225 = vld [vmem:[%s2834 + $0xf1] sm:$0xff]
      %v3226 = vld [vmem:[%s2834 + $0xf9] sm:$0xff]
      %v3227 = vld [vmem:[%s2834 + $0x109] sm:$0xff]
      %v3228 = vld [vmem:[%s2834 + $0x111] sm:$0xff]
      %v3229 = vld [vmem:[%s2834 + $0x121] sm:$0xff]
      %v3230 = vld [vmem:[%s2834 + $0x129] sm:$0xff]
      %v3231 = vld [vmem:[%s2834 + $0x139] sm:$0xff]
      %v3232 = vld [vmem:[%s2834 + $0x141] sm:$0xff]
      %v3233 = vld [vmem:[%s2834 + $0x151] sm:$0xff]
      %v3234 = vld [vmem:[%s2834 + $0x159] sm:$0xff]
      %v3235 = vld [vmem:[%s2834 + $0x169] sm:$0xff]
      %v3236 = vld [vmem:[%s2834 + $0x171] sm:$0xff]
      %v3237 = vpack.c.bf16 %v3206, %v3205
      %v3238 = vpack.c.bf16 %v3208, %v3207
      %v3239 = vpack.c.bf16 %v3210, %v3209
      %v3240 = vpack.c.bf16 %v3212, %v3211
      %v3241 = vpack.c.bf16 %v3214, %v3213
      %v3242 = vpack.c.bf16 %v3216, %v3215
      %v3243 = vpack.c.bf16 %v3218, %v3217
      %v3244 = vpack.c.bf16 %v3220, %v3219
      %v3245 = vpack.c.bf16 %v3222, %v3221
      %v3246 = vpack.c.bf16 %v3224, %v3223
      %v3247 = vpack.c.bf16 %v3226, %v3225
      %v3248 = vpack.c.bf16 %v3228, %v3227
      %v3249 = vpack.c.bf16 %v3230, %v3229
      %v3250 = vpack.c.bf16 %v3232, %v3231
      %v3251 = vpack.c.bf16 %v3234, %v3233
      %v3252 = vpack.c.bf16 %v3236, %v3235
      %s3253 = scalar_lea.vmem %s3, 448
      %v3254 = vld [vmem:[%s3253] sm:$0xf]
      %v3255 = vld [vmem:[%s3253 + $0x4] sm:$0xf]
      %v3256 = vld [vmem:[%s3253 + $0x8] sm:$0xf]
      %v3257 = vld [vmem:[%s3253 + $0xc] sm:$0xf]
      %v3258 = vld [vmem:[%s3253 + $0x10] sm:$0xf]
      %v3259 = vld [vmem:[%s3253 + $0x14] sm:$0xf]
      %v3260 = vld [vmem:[%s3253 + $0x18] sm:$0xf]
      %v3261 = vld [vmem:[%s3253 + $0x1c] sm:$0xf]
      %v3262 = vld [vmem:[%s3253 + $0x20] sm:$0xf]
      %v3263 = vld [vmem:[%s3253 + $0x24] sm:$0xf]
      %v3264 = vld [vmem:[%s3253 + $0x28] sm:$0xf]
      %v3265 = vld [vmem:[%s3253 + $0x2c] sm:$0xf]
      %v3266 = vld [vmem:[%s3253 + $0x30] sm:$0xf]
      %v3267 = vld [vmem:[%s3253 + $0x34] sm:$0xf]
      %v3268 = vld [vmem:[%s3253 + $0x38] sm:$0xf]
      %v3269 = vld [vmem:[%s3253 + $0x3c] sm:$0xf]
      %v3286 = vunpack.c.l.b16 %v3254
      %v3287 = vunpack.c.l.b16 %v3255
      %v3288 = vunpack.c.l.b16 %v3256
      %v3289 = vunpack.c.l.b16 %v3257
      %v3290 = vunpack.c.l.b16 %v3258
      %v3291 = vunpack.c.l.b16 %v3259
      %v3292 = vunpack.c.l.b16 %v3260
      %v3293 = vunpack.c.l.b16 %v3261
      %v3294 = vunpack.c.l.b16 %v3262
      %v3295 = vunpack.c.l.b16 %v3263
      %v3296 = vunpack.c.l.b16 %v3264
      %v3297 = vunpack.c.l.b16 %v3265
      %v3298 = vunpack.c.l.b16 %v3266
      %v3299 = vunpack.c.l.b16 %v3267
      %v3300 = vunpack.c.l.b16 %v3268
      %v3301 = vunpack.c.l.b16 %v3269
      %v3302 = vpack.c.b16 %v3287, %v3286
      %v3303 = vpack.c.b16 %v3289, %v3288
      %v3304 = vpack.c.b16 %v3291, %v3290
      %v3305 = vpack.c.b16 %v3293, %v3292
      %v3306 = vpack.c.b16 %v3295, %v3294
      %v3307 = vpack.c.b16 %v3297, %v3296
      %v3308 = vpack.c.b16 %v3299, %v3298
      %v3309 = vpack.c.b16 %v3301, %v3300
      %3318 = vmatprep.subr.bf16.mxu0 0
      %3319 = vmatpush1.bf16.msra.mxu0 %v3302
      %3320 = vmatprep.subr.bf16.mxu0 0
      %3321 = vmatpush1.bf16.msra.mxu0 %v3303
      %3322 = vmatprep.subr.bf16.mxu0 0
      %3323 = vmatpush1.bf16.msra.mxu0 %v3304
      %3324 = vmatprep.subr.bf16.mxu0 0
      %3325 = vmatpush1.bf16.msra.mxu0 %v3305
      %3326 = vmatprep.subr.bf16.mxu0 0
      %3327 = vmatpush1.bf16.msra.mxu0 %v3306
      %3328 = vmatprep.subr.bf16.mxu0 0
      %3329 = vmatpush1.bf16.msra.mxu0 %v3307
      %3330 = vmatprep.subr.bf16.mxu0 0
      %3331 = vmatpush1.bf16.msra.mxu0 %v3308
      %3332 = vmatprep.subr.bf16.mxu0 0
      %3333 = vmatpush1.bf16.msra.mxu0 %v3309
      %3334 = vmatprep.subr.bf16.mxu0 0
      %3335 = vmatpush1.bf16.msra.mxu0 0
      %3336 = vmatprep.subr.bf16.mxu0 0
      %3337 = vmatpush1.bf16.msra.mxu0 0
      %3338 = vmatprep.subr.bf16.mxu0 0
      %3339 = vmatpush1.bf16.msra.mxu0 0
      %3340 = vmatprep.subr.bf16.mxu0 0
      %3341 = vmatpush1.bf16.msra.mxu0 0
      %3342 = vmatprep.subr.bf16.mxu0 0
      %3343 = vmatpush1.bf16.msra.mxu0 0
      %3344 = vmatprep.subr.bf16.mxu0 0
      %3345 = vmatpush1.bf16.msra.mxu0 0
      %3346 = vmatprep.subr.bf16.mxu0 0
      %3347 = vmatpush1.bf16.msra.mxu0 0
      %3348 = vmatprep.subr.bf16.mxu0 0
      %3349 = vmatpush1.bf16.msra.mxu0 0
      %3350 = vmatprep.mubr.bf16.mxu0 0
      %3351 = vmatmul.mubr.bf16.gmra.mrb[0].mxu0 %v3237
      %v3352 = vpop.f32.mrb[0].mxu0
      %v3353 = vadd.f32 0.0, %v3352
      %v3354 = vpop.f32.mrb[0].mxu0
      %v3355 = vpop.f32.mrb[0].mxu0
      %v3356 = vadd.f32 0.0, %v3355
      %v3357 = vpop.f32.mrb[0].mxu0
      %3358 = vmatprep.mubr.bf16.mxu0 0
      %3359 = vmatmul.mubr.bf16.gmra.mrb[0].mxu0 %v3238
      %v3360 = vpop.f32.mrb[0].mxu0
      %v3361 = vadd.f32 0.0, %v3360
      %v3362 = vpop.f32.mrb[0].mxu0
      %v3363 = vpop.f32.mrb[0].mxu0
      %v3364 = vadd.f32 0.0, %v3363
      %v3365 = vpop.f32.mrb[0].mxu0
      %3366 = vmatprep.mubr.bf16.mxu0 0
      %3367 = vmatmul.mubr.bf16.gmra.mrb[0].mxu0 %v3239
      %v3368 = vpop.f32.mrb[0].mxu0
      %v3369 = vadd.f32 0.0, %v3368
      %v3370 = vpop.f32.mrb[0].mxu0
      %v3371 = vpop.f32.mrb[0].mxu0
      %v3372 = vadd.f32 0.0, %v3371
      %v3373 = vpop.f32.mrb[0].mxu0
      %3374 = vmatprep.mubr.bf16.mxu0 0
      %3375 = vmatmul.mubr.bf16.gmra.mrb[0].mxu0 %v3240
      %v3376 = vpop.f32.mrb[0].mxu0
      %v3377 = vadd.f32 0.0, %v3376
      %v3378 = vpop.f32.mrb[0].mxu0
      %v3379 = vpop.f32.mrb[0].mxu0
      %v3380 = vadd.f32 0.0, %v3379
      %v3381 = vpop.f32.mrb[0].mxu0
      %3382 = vmatprep.mubr.bf16.mxu0 0
      %3383 = vmatmul.mubr.bf16.gmra.mrb[0].mxu0 %v3241
      %v3384 = vpop.f32.mrb[0].mxu0
      %v3385 = vadd.f32 0.0, %v3384
      %v3386 = vpop.f32.mrb[0].mxu0
      %v3387 = vpop.f32.mrb[0].mxu0
      %v3388 = vadd.f32 0.0, %v3387
      %v3389 = vpop.f32.mrb[0].mxu0
      %3390 = vmatprep.mubr.bf16.mxu0 0
      %3391 = vmatmul.mubr.bf16.gmra.mrb[0].mxu0 %v3242
      %v3392 = vpop.f32.mrb[0].mxu0
      %v3393 = vadd.f32 0.0, %v3392
      %v3394 = vpop.f32.mrb[0].mxu0
      %v3395 = vpop.f32.mrb[0].mxu0
      %v3396 = vadd.f32 0.0, %v3395
      %v3397 = vpop.f32.mrb[0].mxu0
      %3398 = vmatprep.mubr.bf16.mxu0 0
      %3399 = vmatmul.mubr.bf16.gmra.mrb[0].mxu0 %v3243
      %v3400 = vpop.f32.mrb[0].mxu0
      %v3401 = vadd.f32 0.0, %v3400
      %v3402 = vpop.f32.mrb[0].mxu0
      %v3403 = vpop.f32.mrb[0].mxu0
      %v3404 = vadd.f32 0.0, %v3403
      %v3405 = vpop.f32.mrb[0].mxu0
      %3406 = vmatprep.mubr.bf16.mxu0 0
      %3407 = vmatmul.mubr.bf16.gmra.mrb[0].mxu0 %v3244
      %v3408 = vpop.f32.mrb[0].mxu0
      %v3409 = vadd.f32 0.0, %v3408
      %v3410 = vpop.f32.mrb[0].mxu0
      %v3411 = vpop.f32.mrb[0].mxu0
      %v3412 = vadd.f32 0.0, %v3411
      %v3413 = vpop.f32.mrb[0].mxu0
      %3414 = vmatprep.mubr.bf16.mxu0 0
      %3415 = vmatmul.mubr.bf16.gmra.mrb[0].mxu0 %v3245
      %v3416 = vpop.f32.mrb[0].mxu0
      %v3417 = vadd.f32 0.0, %v3416
      %v3418 = vpop.f32.mrb[0].mxu0
      %v3419 = vpop.f32.mrb[0].mxu0
      %v3420 = vadd.f32 0.0, %v3419
      %v3421 = vpop.f32.mrb[0].mxu0
      %3422 = vmatprep.mubr.bf16.mxu0 0
      %3423 = vmatmul.mubr.bf16.gmra.mrb[0].mxu0 %v3246
      %v3424 = vpop.f32.mrb[0].mxu0
      %v3425 = vadd.f32 0.0, %v3424
      %v3426 = vpop.f32.mrb[0].mxu0
      %v3427 = vpop.f32.mrb[0].mxu0
      %v3428 = vadd.f32 0.0, %v3427
      %v3429 = vpop.f32.mrb[0].mxu0
      %3430 = vmatprep.mubr.bf16.mxu0 0
      %3431 = vmatmul.mubr.bf16.gmra.mrb[0].mxu0 %v3247
      %v3432 = vpop.f32.mrb[0].mxu0
      %v3433 = vadd.f32 0.0, %v3432
      %v3434 = vpop.f32.mrb[0].mxu0
      %v3435 = vpop.f32.mrb[0].mxu0
      %v3436 = vadd.f32 0.0, %v3435
      %v3437 = vpop.f32.mrb[0].mxu0
      %3438 = vmatprep.mubr.bf16.mxu0 0
      %3439 = vmatmul.mubr.bf16.gmra.mrb[0].mxu0 %v3248
      %v3440 = vpop.f32.mrb[0].mxu0
      %v3441 = vadd.f32 0.0, %v3440
      %v3442 = vpop.f32.mrb[0].mxu0
      %v3443 = vpop.f32.mrb[0].mxu0
      %v3444 = vadd.f32 0.0, %v3443
      %v3445 = vpop.f32.mrb[0].mxu0
      %3446 = vmatprep.mubr.bf16.mxu0 0
      %3447 = vmatmul.mubr.bf16.gmra.mrb[0].mxu0 %v3249
      %v3448 = vpop.f32.mrb[0].mxu0
      %v3449 = vadd.f32 0.0, %v3448
      %v3450 = vpop.f32.mrb[0].mxu0
      %v3451 = vpop.f32.mrb[0].mxu0
      %v3452 = vadd.f32 0.0, %v3451
      %v3453 = vpop.f32.mrb[0].mxu0
      %3454 = vmatprep.mubr.bf16.mxu0 0
      %3455 = vmatmul.mubr.bf16.gmra.mrb[0].mxu0 %v3250
      %v3456 = vpop.f32.mrb[0].mxu0
      %v3457 = vadd.f32 0.0, %v3456
      %v3458 = vpop.f32.mrb[0].mxu0
      %v3459 = vpop.f32.mrb[0].mxu0
      %v3460 = vadd.f32 0.0, %v3459
      %v3461 = vpop.f32.mrb[0].mxu0
      %3462 = vmatprep.mubr.bf16.mxu0 0
      %3463 = vmatmul.mubr.bf16.gmra.mrb[0].mxu0 %v3251
      %v3464 = vpop.f32.mrb[0].mxu0
      %v3465 = vadd.f32 0.0, %v3464
      %v3466 = vpop.f32.mrb[0].mxu0
      %v3467 = vpop.f32.mrb[0].mxu0
      %v3468 = vadd.f32 0.0, %v3467
      %v3469 = vpop.f32.mrb[0].mxu0
      %3470 = vmatprep.mubr.bf16.mxu0 0
      %3471 = vmatmul.mubr.bf16.gmra.mrb[0].mxu0 %v3252
      %v3472 = vpop.f32.mrb[0].mxu0
      %v3473 = vadd.f32 0.0, %v3472
      %v3474 = vpop.f32.mrb[0].mxu0
      %v3475 = vpop.f32.mrb[0].mxu0
      %v3476 = vadd.f32 0.0, %v3475
      %v3477 = vpop.f32.mrb[0].mxu0
      %3478 = vdwg.mxu0
      %v3479 = vld [vmem:[#allocation3] sm:$0xff]
      %v3480 = vld [vmem:[#allocation3 + $0x8] sm:$0xff]
      %v3481 = vld [vmem:[#allocation3 + $0x10] sm:$0xff]
      %v3482 = vld [vmem:[#allocation3 + $0x18] sm:$0xff]
      %v3483 = vld [vmem:[#allocation3 + $0x20] sm:$0xff]
      %v3484 = vld [vmem:[#allocation3 + $0x28] sm:$0xff]
      %v3485 = vld [vmem:[#allocation3 + $0x30] sm:$0xff]
      %v3486 = vld [vmem:[#allocation3 + $0x38] sm:$0xff]
      %v3487 = vld [vmem:[#allocation3 + $0x40] sm:$0xff]
      %v3488 = vld [vmem:[#allocation3 + $0x48] sm:$0xff]
      %v3489 = vld [vmem:[#allocation3 + $0x50] sm:$0xff]
      %v3490 = vld [vmem:[#allocation3 + $0x58] sm:$0xff]
      %v3491 = vld [vmem:[#allocation3 + $0x60] sm:$0xff]
      %v3492 = vld [vmem:[#allocation3 + $0x68] sm:$0xff]
      %v3493 = vld [vmem:[#allocation3 + $0x70] sm:$0xff]
      %v3494 = vld [vmem:[#allocation3 + $0x78] sm:$0xff]
      %v3495 = vld [vmem:[#allocation3 + $0x80] sm:$0xff]
      %v3496 = vld [vmem:[#allocation3 + $0x88] sm:$0xff]
      %v3497 = vld [vmem:[#allocation3 + $0x90] sm:$0xff]
      %v3498 = vld [vmem:[#allocation3 + $0x98] sm:$0xff]
      %v3499 = vld [vmem:[#allocation3 + $0xa0] sm:$0xff]
      %v3500 = vld [vmem:[#allocation3 + $0xa8] sm:$0xff]
      %v3501 = vld [vmem:[#allocation3 + $0xb0] sm:$0xff]
      %v3502 = vld [vmem:[#allocation3 + $0xb8] sm:$0xff]
      %v3503 = vld [vmem:[#allocation3 + $0xc0] sm:$0xff]
      %v3504 = vld [vmem:[#allocation3 + $0xc8] sm:$0xff]
      %v3505 = vld [vmem:[#allocation3 + $0xd0] sm:$0xff]
      %v3506 = vld [vmem:[#allocation3 + $0xd8] sm:$0xff]
      %v3507 = vld [vmem:[#allocation3 + $0xe0] sm:$0xff]
      %v3508 = vld [vmem:[#allocation3 + $0xe8] sm:$0xff]
      %v3509 = vld [vmem:[#allocation3 + $0xf0] sm:$0xff]
      %v3510 = vld [vmem:[#allocation3 + $0xf8] sm:$0xff]
      %v3511 = vadd.f32 %v3479, %v3353
      %v3512 = vadd.f32 %v3480, %v3356
      %v3513 = vadd.f32 %v3481, %v3361
      %v3514 = vadd.f32 %v3482, %v3364
      %v3515 = vadd.f32 %v3483, %v3369
      %v3516 = vadd.f32 %v3484, %v3372
      %v3517 = vadd.f32 %v3485, %v3377
      %v3518 = vadd.f32 %v3486, %v3380
      %v3519 = vadd.f32 %v3487, %v3385
      %v3520 = vadd.f32 %v3488, %v3388
      %v3521 = vadd.f32 %v3489, %v3393
      %v3522 = vadd.f32 %v3490, %v3396
      %v3523 = vadd.f32 %v3491, %v3401
      %v3524 = vadd.f32 %v3492, %v3404
      %v3525 = vadd.f32 %v3493, %v3409
      %v3526 = vadd.f32 %v3494, %v3412
      %v3527 = vadd.f32 %v3495, %v3417
      %v3528 = vadd.f32 %v3496, %v3420
      %v3529 = vadd.f32 %v3497, %v3425
      %v3530 = vadd.f32 %v3498, %v3428
      %v3531 = vadd.f32 %v3499, %v3433
      %v3532 = vadd.f32 %v3500, %v3436
      %v3533 = vadd.f32 %v3501, %v3441
      %v3534 = vadd.f32 %v3502, %v3444
      %v3535 = vadd.f32 %v3503, %v3449
      %v3536 = vadd.f32 %v3504, %v3452
      %v3537 = vadd.f32 %v3505, %v3457
      %v3538 = vadd.f32 %v3506, %v3460
      %v3539 = vadd.f32 %v3507, %v3465
      %v3540 = vadd.f32 %v3508, %v3468
      %v3541 = vadd.f32 %v3509, %v3473
      %v3542 = vadd.f32 %v3510, %v3476
      %3543 = vst [vmem:[#allocation3] sm:$0xff] %v3511
      %3544 = vst [vmem:[#allocation3 + $0x8] sm:$0xff] %v3512
      %3545 = vst [vmem:[#allocation3 + $0x10] sm:$0xff] %v3513
      %3546 = vst [vmem:[#allocation3 + $0x18] sm:$0xff] %v3514
      %3547 = vst [vmem:[#allocation3 + $0x20] sm:$0xff] %v3515
      %3548 = vst [vmem:[#allocation3 + $0x28] sm:$0xff] %v3516
      %3549 = vst [vmem:[#allocation3 + $0x30] sm:$0xff] %v3517
      %3550 = vst [vmem:[#allocation3 + $0x38] sm:$0xff] %v3518
      %3551 = vst [vmem:[#allocation3 + $0x40] sm:$0xff] %v3519
      %3552 = vst [vmem:[#allocation3 + $0x48] sm:$0xff] %v3520
      %3553 = vst [vmem:[#allocation3 + $0x50] sm:$0xff] %v3521
      %3554 = vst [vmem:[#allocation3 + $0x58] sm:$0xff] %v3522
      %3555 = vst [vmem:[#allocation3 + $0x60] sm:$0xff] %v3523
      %3556 = vst [vmem:[#allocation3 + $0x68] sm:$0xff] %v3524
      %3557 = vst [vmem:[#allocation3 + $0x70] sm:$0xff] %v3525
      %3558 = vst [vmem:[#allocation3 + $0x78] sm:$0xff] %v3526
      %3559 = vst [vmem:[#allocation3 + $0x80] sm:$0xff] %v3527
      %3560 = vst [vmem:[#allocation3 + $0x88] sm:$0xff] %v3528
      %3561 = vst [vmem:[#allocation3 + $0x90] sm:$0xff] %v3529
      %3562 = vst [vmem:[#allocation3 + $0x98] sm:$0xff] %v3530
      %3563 = vst [vmem:[#allocation3 + $0xa0] sm:$0xff] %v3531
      %3564 = vst [vmem:[#allocation3 + $0xa8] sm:$0xff] %v3532
      %3565 = vst [vmem:[#allocation3 + $0xb0] sm:$0xff] %v3533
      %3566 = vst [vmem:[#allocation3 + $0xb8] sm:$0xff] %v3534
      %3567 = vst [vmem:[#allocation3 + $0xc0] sm:$0xff] %v3535
      %3568 = vst [vmem:[#allocation3 + $0xc8] sm:$0xff] %v3536
      %3569 = vst [vmem:[#allocation3 + $0xd0] sm:$0xff] %v3537
      %3570 = vst [vmem:[#allocation3 + $0xd8] sm:$0xff] %v3538
      %3571 = vst [vmem:[#allocation3 + $0xe0] sm:$0xff] %v3539
      %3572 = vst [vmem:[#allocation3 + $0xe8] sm:$0xff] %v3540
      %3573 = vst [vmem:[#allocation3 + $0xf0] sm:$0xff] %v3541
      %3574 = vst [vmem:[#allocation3 + $0xf8] sm:$0xff] %v3542
      %v3575 = vld [vmem:[%s2834 + $0x2] sm:$0xff]
      %v3576 = vld [vmem:[%s2834 + $0xa] sm:$0xff]
      %v3577 = vld [vmem:[%s2834 + $0x1a] sm:$0xff]
      %v3578 = vld [vmem:[%s2834 + $0x22] sm:$0xff]
      %v3579 = vld [vmem:[%s2834 + $0x32] sm:$0xff]
      %v3580 = vld [vmem:[%s2834 + $0x3a] sm:$0xff]
      %v3581 = vld [vmem:[%s2834 + $0x4a] sm:$0xff]
      %v3582 = vld [vmem:[%s2834 + $0x52] sm:$0xff]
      %v3583 = vld [vmem:[%s2834 + $0x62] sm:$0xff]
      %v3584 = vld [vmem:[%s2834 + $0x6a] sm:$0xff]
      %v3585 = vld [vmem:[%s2834 + $0x7a] sm:$0xff]
      %v3586 = vld [vmem:[%s2834 + $0x82] sm:$0xff]
      %v3587 = vld [vmem:[%s2834 + $0x92] sm:$0xff]
      %v3588 = vld [vmem:[%s2834 + $0x9a] sm:$0xff]
      %v3589 = vld [vmem:[%s2834 + $0xaa] sm:$0xff]
      %v3590 = vld [vmem:[%s2834 + $0xb2] sm:$0xff]
      %v3591 = vld [vmem:[%s2834 + $0xc2] sm:$0xff]
      %v3592 = vld [vmem:[%s2834 + $0xca] sm:$0xff]
      %v3593 = vld [vmem:[%s2834 + $0xda] sm:$0xff]
      %v3594 = vld [vmem:[%s2834 + $0xe2] sm:$0xff]
      %v3595 = vld [vmem:[%s2834 + $0xf2] sm:$0xff]
      %v3596 = vld [vmem:[%s2834 + $0xfa] sm:$0xff]
      %v3597 = vld [vmem:[%s2834 + $0x10a] sm:$0xff]
      %v3598 = vld [vmem:[%s2834 + $0x112] sm:$0xff]
      %v3599 = vld [vmem:[%s2834 + $0x122] sm:$0xff]
      %v3600 = vld [vmem:[%s2834 + $0x12a] sm:$0xff]
      %v3601 = vld [vmem:[%s2834 + $0x13a] sm:$0xff]
      %v3602 = vld [vmem:[%s2834 + $0x142] sm:$0xff]
      %v3603 = vld [vmem:[%s2834 + $0x152] sm:$0xff]
      %v3604 = vld [vmem:[%s2834 + $0x15a] sm:$0xff]
      %v3605 = vld [vmem:[%s2834 + $0x16a] sm:$0xff]
      %v3606 = vld [vmem:[%s2834 + $0x172] sm:$0xff]
      %v3607 = vpack.c.bf16 %v3576, %v3575
      %v3608 = vpack.c.bf16 %v3578, %v3577
      %v3609 = vpack.c.bf16 %v3580, %v3579
      %v3610 = vpack.c.bf16 %v3582, %v3581
      %v3611 = vpack.c.bf16 %v3584, %v3583
      %v3612 = vpack.c.bf16 %v3586, %v3585
      %v3613 = vpack.c.bf16 %v3588, %v3587
      %v3614 = vpack.c.bf16 %v3590, %v3589
      %v3615 = vpack.c.bf16 %v3592, %v3591
      %v3616 = vpack.c.bf16 %v3594, %v3593
      %v3617 = vpack.c.bf16 %v3596, %v3595
      %v3618 = vpack.c.bf16 %v3598, %v3597
      %v3619 = vpack.c.bf16 %v3600, %v3599
      %v3620 = vpack.c.bf16 %v3602, %v3601
      %v3621 = vpack.c.bf16 %v3604, %v3603
      %v3622 = vpack.c.bf16 %v3606, %v3605
      %s3623 = scalar_lea.vmem %s3, 512
      %v3624 = vld [vmem:[%s3623] sm:$0xf]
      %v3625 = vld [vmem:[%s3623 + $0x4] sm:$0xf]
      %v3626 = vld [vmem:[%s3623 + $0x8] sm:$0xf]
      %v3627 = vld [vmem:[%s3623 + $0xc] sm:$0xf]
      %v3628 = vld [vmem:[%s3623 + $0x10] sm:$0xf]
      %v3629 = vld [vmem:[%s3623 + $0x14] sm:$0xf]
      %v3630 = vld [vmem:[%s3623 + $0x18] sm:$0xf]
      %v3631 = vld [vmem:[%s3623 + $0x1c] sm:$0xf]
      %v3632 = vld [vmem:[%s3623 + $0x20] sm:$0xf]
      %v3633 = vld [vmem:[%s3623 + $0x24] sm:$0xf]
      %v3634 = vld [vmem:[%s3623 + $0x28] sm:$0xf]
      %v3635 = vld [vmem:[%s3623 + $0x2c] sm:$0xf]
      %v3636 = vld [vmem:[%s3623 + $0x30] sm:$0xf]
      %v3637 = vld [vmem:[%s3623 + $0x34] sm:$0xf]
      %v3638 = vld [vmem:[%s3623 + $0x38] sm:$0xf]
      %v3639 = vld [vmem:[%s3623 + $0x3c] sm:$0xf]
      %v3656 = vunpack.c.l.b16 %v3624
      %v3657 = vunpack.c.l.b16 %v3625
      %v3658 = vunpack.c.l.b16 %v3626
      %v3659 = vunpack.c.l.b16 %v3627
      %v3660 = vunpack.c.l.b16 %v3628
      %v3661 = vunpack.c.l.b16 %v3629
      %v3662 = vunpack.c.l.b16 %v3630
      %v3663 = vunpack.c.l.b16 %v3631
      %v3664 = vunpack.c.l.b16 %v3632
      %v3665 = vunpack.c.l.b16 %v3633
      %v3666 = vunpack.c.l.b16 %v3634
      %v3667 = vunpack.c.l.b16 %v3635
      %v3668 = vunpack.c.l.b16 %v3636
      %v3669 = vunpack.c.l.b16 %v3637
      %v3670 = vunpack.c.l.b16 %v3638
      %v3671 = vunpack.c.l.b16 %v3639
      %v3672 = vpack.c.b16 %v3657, %v3656
      %v3673 = vpack.c.b16 %v3659, %v3658
      %v3674 = vpack.c.b16 %v3661, %v3660
      %v3675 = vpack.c.b16 %v3663, %v3662
      %v3676 = vpack.c.b16 %v3665, %v3664
      %v3677 = vpack.c.b16 %v3667, %v3666
      %v3678 = vpack.c.b16 %v3669, %v3668
      %v3679 = vpack.c.b16 %v3671, %v3670
      %3688 = vmatprep.subr.bf16.mxu0 0
      %3689 = vmatpush1.bf16.msra.mxu0 %v3672
      %3690 = vmatprep.subr.bf16.mxu0 0
      %3691 = vmatpush1.bf16.msra.mxu0 %v3673
      %3692 = vmatprep.subr.bf16.mxu0 0
      %3693 = vmatpush1.bf16.msra.mxu0 %v3674
      %3694 = vmatprep.subr.bf16.mxu0 0
      %3695 = vmatpush1.bf16.msra.mxu0 %v3675
      %3696 = vmatprep.subr.bf16.mxu0 0
      %3697 = vmatpush1.bf16.msra.mxu0 %v3676
      %3698 = vmatprep.subr.bf16.mxu0 0
      %3699 = vmatpush1.bf16.msra.mxu0 %v3677
      %3700 = vmatprep.subr.bf16.mxu0 0
      %3701 = vmatpush1.bf16.msra.mxu0 %v3678
      %3702 = vmatprep.subr.bf16.mxu0 0
      %3703 = vmatpush1.bf16.msra.mxu0 %v3679
      %3704 = vmatprep.subr.bf16.mxu0 0
      %3705 = vmatpush1.bf16.msra.mxu0 0
      %3706 = vmatprep.subr.bf16.mxu0 0
      %3707 = vmatpush1.bf16.msra.mxu0 0
      %3708 = vmatprep.subr.bf16.mxu0 0
      %3709 = vmatpush1.bf16.msra.mxu0 0
      %3710 = vmatprep.subr.bf16.mxu0 0
      %3711 = vmatpush1.bf16.msra.mxu0 0
      %3712 = vmatprep.subr.bf16.mxu0 0
      %3713 = vmatpush1.bf16.msra.mxu0 0
      %3714 = vmatprep.subr.bf16.mxu0 0
      %3715 = vmatpush1.bf16.msra.mxu0 0
      %3716 = vmatprep.subr.bf16.mxu0 0
      %3717 = vmatpush1.bf16.msra.mxu0 0
      %3718 = vmatprep.subr.bf16.mxu0 0
      %3719 = vmatpush1.bf16.msra.mxu0 0
      %3720 = vmatprep.mubr.bf16.mxu0 0
      %3721 = vmatmul.mubr.bf16.gmra.mrb[0].mxu0 %v3607
      %v3722 = vpop.f32.mrb[0].mxu0
      %v3723 = vadd.f32 0.0, %v3722
      %v3724 = vpop.f32.mrb[0].mxu0
      %v3725 = vpop.f32.mrb[0].mxu0
      %v3726 = vadd.f32 0.0, %v3725
      %v3727 = vpop.f32.mrb[0].mxu0
      %3728 = vmatprep.mubr.bf16.mxu0 0
      %3729 = vmatmul.mubr.bf16.gmra.mrb[0].mxu0 %v3608
      %v3730 = vpop.f32.mrb[0].mxu0
      %v3731 = vadd.f32 0.0, %v3730
      %v3732 = vpop.f32.mrb[0].mxu0
      %v3733 = vpop.f32.mrb[0].mxu0
      %v3734 = vadd.f32 0.0, %v3733
      %v3735 = vpop.f32.mrb[0].mxu0
      %3736 = vmatprep.mubr.bf16.mxu0 0
      %3737 = vmatmul.mubr.bf16.gmra.mrb[0].mxu0 %v3609
      %v3738 = vpop.f32.mrb[0].mxu0
      %v3739 = vadd.f32 0.0, %v3738
      %v3740 = vpop.f32.mrb[0].mxu0
      %v3741 = vpop.f32.mrb[0].mxu0
      %v3742 = vadd.f32 0.0, %v3741
      %v3743 = vpop.f32.mrb[0].mxu0
      %3744 = vmatprep.mubr.bf16.mxu0 0
      %3745 = vmatmul.mubr.bf16.gmra.mrb[0].mxu0 %v3610
      %v3746 = vpop.f32.mrb[0].mxu0
      %v3747 = vadd.f32 0.0, %v3746
      %v3748 = vpop.f32.mrb[0].mxu0
      %v3749 = vpop.f32.mrb[0].mxu0
      %v3750 = vadd.f32 0.0, %v3749
      %v3751 = vpop.f32.mrb[0].mxu0
      %3752 = vmatprep.mubr.bf16.mxu0 0
      %3753 = vmatmul.mubr.bf16.gmra.mrb[0].mxu0 %v3611
      %v3754 = vpop.f32.mrb[0].mxu0
      %v3755 = vadd.f32 0.0, %v3754
      %v3756 = vpop.f32.mrb[0].mxu0
      %v3757 = vpop.f32.mrb[0].mxu0
      %v3758 = vadd.f32 0.0, %v3757
      %v3759 = vpop.f32.mrb[0].mxu0
      %3760 = vmatprep.mubr.bf16.mxu0 0
      %3761 = vmatmul.mubr.bf16.gmra.mrb[0].mxu0 %v3612
      %v3762 = vpop.f32.mrb[0].mxu0
      %v3763 = vadd.f32 0.0, %v3762
      %v3764 = vpop.f32.mrb[0].mxu0
      %v3765 = vpop.f32.mrb[0].mxu0
      %v3766 = vadd.f32 0.0, %v3765
      %v3767 = vpop.f32.mrb[0].mxu0
      %3768 = vmatprep.mubr.bf16.mxu0 0
      %3769 = vmatmul.mubr.bf16.gmra.mrb[0].mxu0 %v3613
      %v3770 = vpop.f32.mrb[0].mxu0
      %v3771 = vadd.f32 0.0, %v3770
      %v3772 = vpop.f32.mrb[0].mxu0
      %v3773 = vpop.f32.mrb[0].mxu0
      %v3774 = vadd.f32 0.0, %v3773
      %v3775 = vpop.f32.mrb[0].mxu0
      %3776 = vmatprep.mubr.bf16.mxu0 0
      %3777 = vmatmul.mubr.bf16.gmra.mrb[0].mxu0 %v3614
      %v3778 = vpop.f32.mrb[0].mxu0
      %v3779 = vadd.f32 0.0, %v3778
      %v3780 = vpop.f32.mrb[0].mxu0
      %v3781 = vpop.f32.mrb[0].mxu0
      %v3782 = vadd.f32 0.0, %v3781
      %v3783 = vpop.f32.mrb[0].mxu0
      %3784 = vmatprep.mubr.bf16.mxu0 0
      %3785 = vmatmul.mubr.bf16.gmra.mrb[0].mxu0 %v3615
      %v3786 = vpop.f32.mrb[0].mxu0
      %v3787 = vadd.f32 0.0, %v3786
      %v3788 = vpop.f32.mrb[0].mxu0
      %v3789 = vpop.f32.mrb[0].mxu0
      %v3790 = vadd.f32 0.0, %v3789
      %v3791 = vpop.f32.mrb[0].mxu0
      %3792 = vmatprep.mubr.bf16.mxu0 0
      %3793 = vmatmul.mubr.bf16.gmra.mrb[0].mxu0 %v3616
      %v3794 = vpop.f32.mrb[0].mxu0
      %v3795 = vadd.f32 0.0, %v3794
      %v3796 = vpop.f32.mrb[0].mxu0
      %v3797 = vpop.f32.mrb[0].mxu0
      %v3798 = vadd.f32 0.0, %v3797
      %v3799 = vpop.f32.mrb[0].mxu0
      %3800 = vmatprep.mubr.bf16.mxu0 0
      %3801 = vmatmul.mubr.bf16.gmra.mrb[0].mxu0 %v3617
      %v3802 = vpop.f32.mrb[0].mxu0
      %v3803 = vadd.f32 0.0, %v3802
      %v3804 = vpop.f32.mrb[0].mxu0
      %v3805 = vpop.f32.mrb[0].mxu0
      %v3806 = vadd.f32 0.0, %v3805
      %v3807 = vpop.f32.mrb[0].mxu0
      %3808 = vmatprep.mubr.bf16.mxu0 0
      %3809 = vmatmul.mubr.bf16.gmra.mrb[0].mxu0 %v3618
      %v3810 = vpop.f32.mrb[0].mxu0
      %v3811 = vadd.f32 0.0, %v3810
      %v3812 = vpop.f32.mrb[0].mxu0
      %v3813 = vpop.f32.mrb[0].mxu0
      %v3814 = vadd.f32 0.0, %v3813
      %v3815 = vpop.f32.mrb[0].mxu0
      %3816 = vmatprep.mubr.bf16.mxu0 0
      %3817 = vmatmul.mubr.bf16.gmra.mrb[0].mxu0 %v3619
      %v3818 = vpop.f32.mrb[0].mxu0
      %v3819 = vadd.f32 0.0, %v3818
      %v3820 = vpop.f32.mrb[0].mxu0
      %v3821 = vpop.f32.mrb[0].mxu0
      %v3822 = vadd.f32 0.0, %v3821
      %v3823 = vpop.f32.mrb[0].mxu0
      %3824 = vmatprep.mubr.bf16.mxu0 0
      %3825 = vmatmul.mubr.bf16.gmra.mrb[0].mxu0 %v3620
      %v3826 = vpop.f32.mrb[0].mxu0
      %v3827 = vadd.f32 0.0, %v3826
      %v3828 = vpop.f32.mrb[0].mxu0
      %v3829 = vpop.f32.mrb[0].mxu0
      %v3830 = vadd.f32 0.0, %v3829
      %v3831 = vpop.f32.mrb[0].mxu0
      %3832 = vmatprep.mubr.bf16.mxu0 0
      %3833 = vmatmul.mubr.bf16.gmra.mrb[0].mxu0 %v3621
      %v3834 = vpop.f32.mrb[0].mxu0
      %v3835 = vadd.f32 0.0, %v3834
      %v3836 = vpop.f32.mrb[0].mxu0
      %v3837 = vpop.f32.mrb[0].mxu0
      %v3838 = vadd.f32 0.0, %v3837
      %v3839 = vpop.f32.mrb[0].mxu0
      %3840 = vmatprep.mubr.bf16.mxu0 0
      %3841 = vmatmul.mubr.bf16.gmra.mrb[0].mxu0 %v3622
      %v3842 = vpop.f32.mrb[0].mxu0
      %v3843 = vadd.f32 0.0, %v3842
      %v3844 = vpop.f32.mrb[0].mxu0
      %v3845 = vpop.f32.mrb[0].mxu0
      %v3846 = vadd.f32 0.0, %v3845
      %v3847 = vpop.f32.mrb[0].mxu0
      %3848 = vdwg.mxu0
      %v3849 = vld [vmem:[#allocation3] sm:$0xff]
      %v3850 = vld [vmem:[#allocation3 + $0x8] sm:$0xff]
      %v3851 = vld [vmem:[#allocation3 + $0x10] sm:$0xff]
      %v3852 = vld [vmem:[#allocation3 + $0x18] sm:$0xff]
      %v3853 = vld [vmem:[#allocation3 + $0x20] sm:$0xff]
      %v3854 = vld [vmem:[#allocation3 + $0x28] sm:$0xff]
      %v3855 = vld [vmem:[#allocation3 + $0x30] sm:$0xff]
      %v3856 = vld [vmem:[#allocation3 + $0x38] sm:$0xff]
      %v3857 = vld [vmem:[#allocation3 + $0x40] sm:$0xff]
      %v3858 = vld [vmem:[#allocation3 + $0x48] sm:$0xff]
      %v3859 = vld [vmem:[#allocation3 + $0x50] sm:$0xff]
      %v3860 = vld [vmem:[#allocation3 + $0x58] sm:$0xff]
      %v3861 = vld [vmem:[#allocation3 + $0x60] sm:$0xff]
      %v3862 = vld [vmem:[#allocation3 + $0x68] sm:$0xff]
      %v3863 = vld [vmem:[#allocation3 + $0x70] sm:$0xff]
      %v3864 = vld [vmem:[#allocation3 + $0x78] sm:$0xff]
      %v3865 = vld [vmem:[#allocation3 + $0x80] sm:$0xff]
      %v3866 = vld [vmem:[#allocation3 + $0x88] sm:$0xff]
      %v3867 = vld [vmem:[#allocation3 + $0x90] sm:$0xff]
      %v3868 = vld [vmem:[#allocation3 + $0x98] sm:$0xff]
      %v3869 = vld [vmem:[#allocation3 + $0xa0] sm:$0xff]
      %v3870 = vld [vmem:[#allocation3 + $0xa8] sm:$0xff]
      %v3871 = vld [vmem:[#allocation3 + $0xb0] sm:$0xff]
      %v3872 = vld [vmem:[#allocation3 + $0xb8] sm:$0xff]
      %v3873 = vld [vmem:[#allocation3 + $0xc0] sm:$0xff]
      %v3874 = vld [vmem:[#allocation3 + $0xc8] sm:$0xff]
      %v3875 = vld [vmem:[#allocation3 + $0xd0] sm:$0xff]
      %v3876 = vld [vmem:[#allocation3 + $0xd8] sm:$0xff]
      %v3877 = vld [vmem:[#allocation3 + $0xe0] sm:$0xff]
      %v3878 = vld [vmem:[#allocation3 + $0xe8] sm:$0xff]
      %v3879 = vld [vmem:[#allocation3 + $0xf0] sm:$0xff]
      %v3880 = vld [vmem:[#allocation3 + $0xf8] sm:$0xff]
      %v3881 = vadd.f32 %v3849, %v3723
      %v3882 = vadd.f32 %v3850, %v3726
      %v3883 = vadd.f32 %v3851, %v3731
      %v3884 = vadd.f32 %v3852, %v3734
      %v3885 = vadd.f32 %v3853, %v3739
      %v3886 = vadd.f32 %v3854, %v3742
      %v3887 = vadd.f32 %v3855, %v3747
      %v3888 = vadd.f32 %v3856, %v3750
      %v3889 = vadd.f32 %v3857, %v3755
      %v3890 = vadd.f32 %v3858, %v3758
      %v3891 = vadd.f32 %v3859, %v3763
      %v3892 = vadd.f32 %v3860, %v3766
      %v3893 = vadd.f32 %v3861, %v3771
      %v3894 = vadd.f32 %v3862, %v3774
      %v3895 = vadd.f32 %v3863, %v3779
      %v3896 = vadd.f32 %v3864, %v3782
      %v3897 = vadd.f32 %v3865, %v3787
      %v3898 = vadd.f32 %v3866, %v3790
      %v3899 = vadd.f32 %v3867, %v3795
      %v3900 = vadd.f32 %v3868, %v3798
      %v3901 = vadd.f32 %v3869, %v3803
      %v3902 = vadd.f32 %v3870, %v3806
      %v3903 = vadd.f32 %v3871, %v3811
      %v3904 = vadd.f32 %v3872, %v3814
      %v3905 = vadd.f32 %v3873, %v3819
      %v3906 = vadd.f32 %v3874, %v3822
      %v3907 = vadd.f32 %v3875, %v3827
      %v3908 = vadd.f32 %v3876, %v3830
      %v3909 = vadd.f32 %v3877, %v3835
      %v3910 = vadd.f32 %v3878, %v3838
      %v3911 = vadd.f32 %v3879, %v3843
      %v3912 = vadd.f32 %v3880, %v3846
      %3913 = vst [vmem:[#allocation3] sm:$0xff] %v3881
      %3914 = vst [vmem:[#allocation3 + $0x8] sm:$0xff] %v3882
      %3915 = vst [vmem:[#allocation3 + $0x10] sm:$0xff] %v3883
      %3916 = vst [vmem:[#allocation3 + $0x18] sm:$0xff] %v3884
      %3917 = vst [vmem:[#allocation3 + $0x20] sm:$0xff] %v3885
      %3918 = vst [vmem:[#allocation3 + $0x28] sm:$0xff] %v3886
      %3919 = vst [vmem:[#allocation3 + $0x30] sm:$0xff] %v3887
      %3920 = vst [vmem:[#allocation3 + $0x38] sm:$0xff] %v3888
      %3921 = vst [vmem:[#allocation3 + $0x40] sm:$0xff] %v3889
      %3922 = vst [vmem:[#allocation3 + $0x48] sm:$0xff] %v3890
      %3923 = vst [vmem:[#allocation3 + $0x50] sm:$0xff] %v3891
      %3924 = vst [vmem:[#allocation3 + $0x58] sm:$0xff] %v3892
      %3925 = vst [vmem:[#allocation3 + $0x60] sm:$0xff] %v3893
      %3926 = vst [vmem:[#allocation3 + $0x68] sm:$0xff] %v3894
      %3927 = vst [vmem:[#allocation3 + $0x70] sm:$0xff] %v3895
      %3928 = vst [vmem:[#allocation3 + $0x78] sm:$0xff] %v3896
      %3929 = vst [vmem:[#allocation3 + $0x80] sm:$0xff] %v3897
      %3930 = vst [vmem:[#allocation3 + $0x88] sm:$0xff] %v3898
      %3931 = vst [vmem:[#allocation3 + $0x90] sm:$0xff] %v3899
      %3932 = vst [vmem:[#allocation3 + $0x98] sm:$0xff] %v3900
      %3933 = vst [vmem:[#allocation3 + $0xa0] sm:$0xff] %v3901
      %3934 = vst [vmem:[#allocation3 + $0xa8] sm:$0xff] %v3902
      %3935 = vst [vmem:[#allocation3 + $0xb0] sm:$0xff] %v3903
      %3936 = vst [vmem:[#allocation3 + $0xb8] sm:$0xff] %v3904
      %3937 = vst [vmem:[#allocation3 + $0xc0] sm:$0xff] %v3905
      %3938 = vst [vmem:[#allocation3 + $0xc8] sm:$0xff] %v3906
      %3939 = vst [vmem:[#allocation3 + $0xd0] sm:$0xff] %v3907
      %3940 = vst [vmem:[#allocation3 + $0xd8] sm:$0xff] %v3908
      %3941 = vst [vmem:[#allocation3 + $0xe0] sm:$0xff] %v3909
      %3942 = vst [vmem:[#allocation3 + $0xe8] sm:$0xff] %v3910
      %3943 = vst [vmem:[#allocation3 + $0xf0] sm:$0xff] %v3911
      %3944 = vst [vmem:[#allocation3 + $0xf8] sm:$0xff] %v3912
      %v3945 = vld [vmem:[#allocation3] sm:$0xff]
      %v3946 = vld [vmem:[#allocation3 + $0x8] sm:$0xff]
      %v3947 = vld [vmem:[#allocation3 + $0x10] sm:$0xff]
      %v3948 = vld [vmem:[#allocation3 + $0x18] sm:$0xff]
      %v3949 = vld [vmem:[#allocation3 + $0x20] sm:$0xff]
      %v3950 = vld [vmem:[#allocation3 + $0x28] sm:$0xff]
      %v3951 = vld [vmem:[#allocation3 + $0x30] sm:$0xff]
      %v3952 = vld [vmem:[#allocation3 + $0x38] sm:$0xff]
      %v3953 = vld [vmem:[#allocation3 + $0x40] sm:$0xff]
      %v3954 = vld [vmem:[#allocation3 + $0x48] sm:$0xff]
      %v3955 = vld [vmem:[#allocation3 + $0x50] sm:$0xff]
      %v3956 = vld [vmem:[#allocation3 + $0x58] sm:$0xff]
      %v3957 = vld [vmem:[#allocation3 + $0x60] sm:$0xff]
      %v3958 = vld [vmem:[#allocation3 + $0x68] sm:$0xff]
      %v3959 = vld [vmem:[#allocation3 + $0x70] sm:$0xff]
      %v3960 = vld [vmem:[#allocation3 + $0x78] sm:$0xff]
      %v3961 = vld [vmem:[#allocation3 + $0x80] sm:$0xff]
      %v3962 = vld [vmem:[#allocation3 + $0x88] sm:$0xff]
      %v3963 = vld [vmem:[#allocation3 + $0x90] sm:$0xff]
      %v3964 = vld [vmem:[#allocation3 + $0x98] sm:$0xff]
      %v3965 = vld [vmem:[#allocation3 + $0xa0] sm:$0xff]
      %v3966 = vld [vmem:[#allocation3 + $0xa8] sm:$0xff]
      %v3967 = vld [vmem:[#allocation3 + $0xb0] sm:$0xff]
      %v3968 = vld [vmem:[#allocation3 + $0xb8] sm:$0xff]
      %v3969 = vld [vmem:[#allocation3 + $0xc0] sm:$0xff]
      %v3970 = vld [vmem:[#allocation3 + $0xc8] sm:$0xff]
      %v3971 = vld [vmem:[#allocation3 + $0xd0] sm:$0xff]
      %v3972 = vld [vmem:[#allocation3 + $0xd8] sm:$0xff]
      %v3973 = vld [vmem:[#allocation3 + $0xe0] sm:$0xff]
      %v3974 = vld [vmem:[#allocation3 + $0xe8] sm:$0xff]
      %v3975 = vld [vmem:[#allocation3 + $0xf0] sm:$0xff]
      %v3976 = vld [vmem:[#allocation3 + $0xf8] sm:$0xff]
      %v3977 = vld [vmem:[%s4] sm:$0x1]
      %v3979 = vlaneseq
      %v3980 = vshrl.u32 %v3979, 7
      %v3981 = vsub.s32 0, %v3980
      %v3982 = vrot.slane %v3977, %v3981
      %v3984 = vadd.f32 %v3945, %v3982
      %v3985 = vadd.f32 %v3946, %v3982
      %v3986 = vadd.f32 %v3947, %v3982
      %v3987 = vadd.f32 %v3948, %v3982
      %v3988 = vadd.f32 %v3949, %v3982
      %v3989 = vadd.f32 %v3950, %v3982
      %v3990 = vadd.f32 %v3951, %v3982
      %v3991 = vadd.f32 %v3952, %v3982
      %v3992 = vadd.f32 %v3953, %v3982
      %v3993 = vadd.f32 %v3954, %v3982
      %v3994 = vadd.f32 %v3955, %v3982
      %v3995 = vadd.f32 %v3956, %v3982
      %v3996 = vadd.f32 %v3957, %v3982
      %v3997 = vadd.f32 %v3958, %v3982
      %v3998 = vadd.f32 %v3959, %v3982
      %v3999 = vadd.f32 %v3960, %v3982
      %v4000 = vadd.f32 %v3961, %v3982
      %v4001 = vadd.f32 %v3962, %v3982
      %v4002 = vadd.f32 %v3963, %v3982
      %v4003 = vadd.f32 %v3964, %v3982
      %v4004 = vadd.f32 %v3965, %v3982
      %v4005 = vadd.f32 %v3966, %v3982
      %v4006 = vadd.f32 %v3967, %v3982
      %v4007 = vadd.f32 %v3968, %v3982
      %v4008 = vadd.f32 %v3969, %v3982
      %v4009 = vadd.f32 %v3970, %v3982
      %v4010 = vadd.f32 %v3971, %v3982
      %v4011 = vadd.f32 %v3972, %v3982
      %v4012 = vadd.f32 %v3973, %v3982
      %v4013 = vadd.f32 %v3974, %v3982
      %v4014 = vadd.f32 %v3975, %v3982
      %v4015 = vadd.f32 %v3976, %v3982
      %v4016 = vmax.f32 %v3984, 0.0
      %v4017 = vmax.f32 %v3985, 0.0
      %v4018 = vmax.f32 %v3986, 0.0
      %v4019 = vmax.f32 %v3987, 0.0
      %v4020 = vmax.f32 %v3988, 0.0
      %v4021 = vmax.f32 %v3989, 0.0
      %v4022 = vmax.f32 %v3990, 0.0
      %v4023 = vmax.f32 %v3991, 0.0
      %v4024 = vmax.f32 %v3992, 0.0
      %v4025 = vmax.f32 %v3993, 0.0
      %v4026 = vmax.f32 %v3994, 0.0
      %v4027 = vmax.f32 %v3995, 0.0
      %v4028 = vmax.f32 %v3996, 0.0
      %v4029 = vmax.f32 %v3997, 0.0
      %v4030 = vmax.f32 %v3998, 0.0
      %v4031 = vmax.f32 %v3999, 0.0
      %v4032 = vmax.f32 %v4000, 0.0
      %v4033 = vmax.f32 %v4001, 0.0
      %v4034 = vmax.f32 %v4002, 0.0
      %v4035 = vmax.f32 %v4003, 0.0
      %v4036 = vmax.f32 %v4004, 0.0
      %v4037 = vmax.f32 %v4005, 0.0
      %v4038 = vmax.f32 %v4006, 0.0
      %v4039 = vmax.f32 %v4007, 0.0
      %v4040 = vmax.f32 %v4008, 0.0
      %v4041 = vmax.f32 %v4009, 0.0
      %v4042 = vmax.f32 %v4010, 0.0
      %v4043 = vmax.f32 %v4011, 0.0
      %v4044 = vmax.f32 %v4012, 0.0
      %v4045 = vmax.f32 %v4013, 0.0
      %v4046 = vmax.f32 %v4014, 0.0
      %v4047 = vmax.f32 %v4015, 0.0
      %v4048 = vpack.c.bf16 %v4017, %v4016
      %v4049 = vpack.c.bf16 %v4019, %v4018
      %v4050 = vpack.c.bf16 %v4021, %v4020
      %v4051 = vpack.c.bf16 %v4023, %v4022
      %v4052 = vpack.c.bf16 %v4025, %v4024
      %v4053 = vpack.c.bf16 %v4027, %v4026
      %v4054 = vpack.c.bf16 %v4029, %v4028
      %v4055 = vpack.c.bf16 %v4031, %v4030
      %v4056 = vpack.c.bf16 %v4033, %v4032
      %v4057 = vpack.c.bf16 %v4035, %v4034
      %v4058 = vpack.c.bf16 %v4037, %v4036
      %v4059 = vpack.c.bf16 %v4039, %v4038
      %v4060 = vpack.c.bf16 %v4041, %v4040
      %v4061 = vpack.c.bf16 %v4043, %v4042
      %v4062 = vpack.c.bf16 %v4045, %v4044
      %v4063 = vpack.c.bf16 %v4047, %v4046
      %v4064 = vld [vmem:[%s5] sm:$0xf]
      %v4065 = vld [vmem:[%s5 + $0x4] sm:$0xf]
      %v4066 = vld [vmem:[%s5 + $0x8] sm:$0xf]
      %v4067 = vld [vmem:[%s5 + $0xc] sm:$0xf]
      %v4068 = vld [vmem:[%s5 + $0x10] sm:$0xf]
      %v4069 = vld [vmem:[%s5 + $0x14] sm:$0xf]
      %v4070 = vld [vmem:[%s5 + $0x18] sm:$0xf]
      %v4071 = vld [vmem:[%s5 + $0x1c] sm:$0xf]
      %v4072 = vld [vmem:[%s5 + $0x20] sm:$0xf]
      %v4073 = vld [vmem:[%s5 + $0x24] sm:$0xf]
      %v4074 = vld [vmem:[%s5 + $0x28] sm:$0xf]
      %v4075 = vld [vmem:[%s5 + $0x2c] sm:$0xf]
      %v4076 = vld [vmem:[%s5 + $0x30] sm:$0xf]
      %v4077 = vld [vmem:[%s5 + $0x34] sm:$0xf]
      %v4078 = vld [vmem:[%s5 + $0x38] sm:$0xf]
      %v4079 = vld [vmem:[%s5 + $0x3c] sm:$0xf]
      %v4080 = vld [vmem:[%s6] sm:$0x1]
      %v4082 = vlaneseq
      %v4083 = vshrl.u32 %v4082, 7
      %v4084 = vsub.s32 0, %v4083
      %v4085 = vrot.slane %v4080, %v4084
      %v4103 = vunpack.c.l.b16 %v4064
      %v4104 = vunpack.c.l.b16 %v4065
      %v4105 = vunpack.c.l.b16 %v4066
      %v4106 = vunpack.c.l.b16 %v4067
      %v4107 = vunpack.c.l.b16 %v4068
      %v4108 = vunpack.c.l.b16 %v4069
      %v4109 = vunpack.c.l.b16 %v4070
      %v4110 = vunpack.c.l.b16 %v4071
      %v4111 = vunpack.c.l.b16 %v4072
      %v4112 = vunpack.c.l.b16 %v4073
      %v4113 = vunpack.c.l.b16 %v4074
      %v4114 = vunpack.c.l.b16 %v4075
      %v4115 = vunpack.c.l.b16 %v4076
      %v4116 = vunpack.c.l.b16 %v4077
      %v4117 = vunpack.c.l.b16 %v4078
      %v4118 = vunpack.c.l.b16 %v4079
      %v4119 = vpack.c.b16 %v4104, %v4103
      %v4120 = vpack.c.b16 %v4106, %v4105
      %v4121 = vpack.c.b16 %v4108, %v4107
      %v4122 = vpack.c.b16 %v4110, %v4109
      %v4123 = vpack.c.b16 %v4112, %v4111
      %v4124 = vpack.c.b16 %v4114, %v4113
      %v4125 = vpack.c.b16 %v4116, %v4115
      %v4126 = vpack.c.b16 %v4118, %v4117
      %4135 = vmatprep.subr.bf16.mxu0 0
      %4136 = vmatpush1.bf16.msra.mxu0 %v4119
      %4137 = vmatprep.subr.bf16.mxu0 0
      %4138 = vmatpush1.bf16.msra.mxu0 %v4120
      %4139 = vmatprep.subr.bf16.mxu0 0
      %4140 = vmatpush1.bf16.msra.mxu0 %v4121
      %4141 = vmatprep.subr.bf16.mxu0 0
      %4142 = vmatpush1.bf16.msra.mxu0 %v4122
      %4143 = vmatprep.subr.bf16.mxu0 0
      %4144 = vmatpush1.bf16.msra.mxu0 %v4123
      %4145 = vmatprep.subr.bf16.mxu0 0
      %4146 = vmatpush1.bf16.msra.mxu0 %v4124
      %4147 = vmatprep.subr.bf16.mxu0 0
      %4148 = vmatpush1.bf16.msra.mxu0 %v4125
      %4149 = vmatprep.subr.bf16.mxu0 0
      %4150 = vmatpush1.bf16.msra.mxu0 %v4126
      %4151 = vmatprep.subr.bf16.mxu0 0
      %4152 = vmatpush1.bf16.msra.mxu0 0
      %4153 = vmatprep.subr.bf16.mxu0 0
      %4154 = vmatpush1.bf16.msra.mxu0 0
      %4155 = vmatprep.subr.bf16.mxu0 0
      %4156 = vmatpush1.bf16.msra.mxu0 0
      %4157 = vmatprep.subr.bf16.mxu0 0
      %4158 = vmatpush1.bf16.msra.mxu0 0
      %4159 = vmatprep.subr.bf16.mxu0 0
      %4160 = vmatpush1.bf16.msra.mxu0 0
      %4161 = vmatprep.subr.bf16.mxu0 0
      %4162 = vmatpush1.bf16.msra.mxu0 0
      %4163 = vmatprep.subr.bf16.mxu0 0
      %4164 = vmatpush1.bf16.msra.mxu0 0
      %4165 = vmatprep.subr.bf16.mxu0 0
      %4166 = vmatpush1.bf16.msra.mxu0 0
      %4167 = vmatprep.mubr.bf16.mxu0 0
      %4168 = vmatmul.mubr.bf16.gmra.mrb[0].mxu0 %v4048
      %v4169 = vpop.f32.mrb[0].mxu0
      %v4170 = vadd.f32 %v4085, %v4169
      %v4171 = vpop.f32.mrb[0].mxu0
      %v4172 = vpop.f32.mrb[0].mxu0
      %v4173 = vadd.f32 %v4085, %v4172
      %v4174 = vpop.f32.mrb[0].mxu0
      %4175 = vmatprep.mubr.bf16.mxu0 0
      %4176 = vmatmul.mubr.bf16.gmra.mrb[0].mxu0 %v4049
      %v4177 = vpop.f32.mrb[0].mxu0
      %v4178 = vadd.f32 %v4085, %v4177
      %v4179 = vpop.f32.mrb[0].mxu0
      %v4180 = vpop.f32.mrb[0].mxu0
      %v4181 = vadd.f32 %v4085, %v4180
      %v4182 = vpop.f32.mrb[0].mxu0
      %4183 = vmatprep.mubr.bf16.mxu0 0
      %4184 = vmatmul.mubr.bf16.gmra.mrb[0].mxu0 %v4050
      %v4185 = vpop.f32.mrb[0].mxu0
      %v4186 = vadd.f32 %v4085, %v4185
      %v4187 = vpop.f32.mrb[0].mxu0
      %v4188 = vpop.f32.mrb[0].mxu0
      %v4189 = vadd.f32 %v4085, %v4188
      %v4190 = vpop.f32.mrb[0].mxu0
      %4191 = vmatprep.mubr.bf16.mxu0 0
      %4192 = vmatmul.mubr.bf16.gmra.mrb[0].mxu0 %v4051
      %v4193 = vpop.f32.mrb[0].mxu0
      %v4194 = vadd.f32 %v4085, %v4193
      %v4195 = vpop.f32.mrb[0].mxu0
      %v4196 = vpop.f32.mrb[0].mxu0
      %v4197 = vadd.f32 %v4085, %v4196
      %v4198 = vpop.f32.mrb[0].mxu0
      %4199 = vmatprep.mubr.bf16.mxu0 0
      %4200 = vmatmul.mubr.bf16.gmra.mrb[0].mxu0 %v4052
      %v4201 = vpop.f32.mrb[0].mxu0
      %v4202 = vadd.f32 %v4085, %v4201
      %v4203 = vpop.f32.mrb[0].mxu0
      %v4204 = vpop.f32.mrb[0].mxu0
      %v4205 = vadd.f32 %v4085, %v4204
      %v4206 = vpop.f32.mrb[0].mxu0
      %4207 = vmatprep.mubr.bf16.mxu0 0
      %4208 = vmatmul.mubr.bf16.gmra.mrb[0].mxu0 %v4053
      %v4209 = vpop.f32.mrb[0].mxu0
      %v4210 = vadd.f32 %v4085, %v4209
      %v4211 = vpop.f32.mrb[0].mxu0
      %v4212 = vpop.f32.mrb[0].mxu0
      %v4213 = vadd.f32 %v4085, %v4212
      %v4214 = vpop.f32.mrb[0].mxu0
      %4215 = vmatprep.mubr.bf16.mxu0 0
      %4216 = vmatmul.mubr.bf16.gmra.mrb[0].mxu0 %v4054
      %v4217 = vpop.f32.mrb[0].mxu0
      %v4218 = vadd.f32 %v4085, %v4217
      %v4219 = vpop.f32.mrb[0].mxu0
      %v4220 = vpop.f32.mrb[0].mxu0
      %v4221 = vadd.f32 %v4085, %v4220
      %v4222 = vpop.f32.mrb[0].mxu0
      %4223 = vmatprep.mubr.bf16.mxu0 0
      %4224 = vmatmul.mubr.bf16.gmra.mrb[0].mxu0 %v4055
      %v4225 = vpop.f32.mrb[0].mxu0
      %v4226 = vadd.f32 %v4085, %v4225
      %v4227 = vpop.f32.mrb[0].mxu0
      %v4228 = vpop.f32.mrb[0].mxu0
      %v4229 = vadd.f32 %v4085, %v4228
      %v4230 = vpop.f32.mrb[0].mxu0
      %4231 = vmatprep.mubr.bf16.mxu0 0
      %4232 = vmatmul.mubr.bf16.gmra.mrb[0].mxu0 %v4056
      %v4233 = vpop.f32.mrb[0].mxu0
      %v4234 = vadd.f32 %v4085, %v4233
      %v4235 = vpop.f32.mrb[0].mxu0
      %v4236 = vpop.f32.mrb[0].mxu0
      %v4237 = vadd.f32 %v4085, %v4236
      %v4238 = vpop.f32.mrb[0].mxu0
      %4239 = vmatprep.mubr.bf16.mxu0 0
      %4240 = vmatmul.mubr.bf16.gmra.mrb[0].mxu0 %v4057
      %v4241 = vpop.f32.mrb[0].mxu0
      %v4242 = vadd.f32 %v4085, %v4241
      %v4243 = vpop.f32.mrb[0].mxu0
      %v4244 = vpop.f32.mrb[0].mxu0
      %v4245 = vadd.f32 %v4085, %v4244
      %v4246 = vpop.f32.mrb[0].mxu0
      %4247 = vmatprep.mubr.bf16.mxu0 0
      %4248 = vmatmul.mubr.bf16.gmra.mrb[0].mxu0 %v4058
      %v4249 = vpop.f32.mrb[0].mxu0
      %v4250 = vadd.f32 %v4085, %v4249
      %v4251 = vpop.f32.mrb[0].mxu0
      %v4252 = vpop.f32.mrb[0].mxu0
      %v4253 = vadd.f32 %v4085, %v4252
      %v4254 = vpop.f32.mrb[0].mxu0
      %4255 = vmatprep.mubr.bf16.mxu0 0
      %4256 = vmatmul.mubr.bf16.gmra.mrb[0].mxu0 %v4059
      %v4257 = vpop.f32.mrb[0].mxu0
      %v4258 = vadd.f32 %v4085, %v4257
      %v4259 = vpop.f32.mrb[0].mxu0
      %v4260 = vpop.f32.mrb[0].mxu0
      %v4261 = vadd.f32 %v4085, %v4260
      %v4262 = vpop.f32.mrb[0].mxu0
      %4263 = vmatprep.mubr.bf16.mxu0 0
      %4264 = vmatmul.mubr.bf16.gmra.mrb[0].mxu0 %v4060
      %v4265 = vpop.f32.mrb[0].mxu0
      %v4266 = vadd.f32 %v4085, %v4265
      %v4267 = vpop.f32.mrb[0].mxu0
      %v4268 = vpop.f32.mrb[0].mxu0
      %v4269 = vadd.f32 %v4085, %v4268
      %v4270 = vpop.f32.mrb[0].mxu0
      %4271 = vmatprep.mubr.bf16.mxu0 0
      %4272 = vmatmul.mubr.bf16.gmra.mrb[0].mxu0 %v4061
      %v4273 = vpop.f32.mrb[0].mxu0
      %v4274 = vadd.f32 %v4085, %v4273
      %v4275 = vpop.f32.mrb[0].mxu0
      %v4276 = vpop.f32.mrb[0].mxu0
      %v4277 = vadd.f32 %v4085, %v4276
      %v4278 = vpop.f32.mrb[0].mxu0
      %4279 = vmatprep.mubr.bf16.mxu0 0
      %4280 = vmatmul.mubr.bf16.gmra.mrb[0].mxu0 %v4062
      %v4281 = vpop.f32.mrb[0].mxu0
      %v4282 = vadd.f32 %v4085, %v4281
      %v4283 = vpop.f32.mrb[0].mxu0
      %v4284 = vpop.f32.mrb[0].mxu0
      %v4285 = vadd.f32 %v4085, %v4284
      %v4286 = vpop.f32.mrb[0].mxu0
      %4287 = vmatprep.mubr.bf16.mxu0 0
      %4288 = vmatmul.mubr.bf16.gmra.mrb[0].mxu0 %v4063
      %v4289 = vpop.f32.mrb[0].mxu0
      %v4290 = vadd.f32 %v4085, %v4289
      %v4291 = vpop.f32.mrb[0].mxu0
      %v4292 = vpop.f32.mrb[0].mxu0
      %v4293 = vadd.f32 %v4085, %v4292
      %v4294 = vpop.f32.mrb[0].mxu0
      %4295 = vdwg.mxu0
      %v4296 = vld [vmem:[%s273] sm:$0xff]
      %v4297 = vld [vmem:[%s273 + $0x8] sm:$0xff]
      %v4298 = vld [vmem:[%s273 + $0x10] sm:$0xff]
      %v4299 = vld [vmem:[%s273 + $0x18] sm:$0xff]
      %v4300 = vld [vmem:[%s273 + $0x20] sm:$0xff]
      %v4301 = vld [vmem:[%s273 + $0x28] sm:$0xff]
      %v4302 = vld [vmem:[%s273 + $0x30] sm:$0xff]
      %v4303 = vld [vmem:[%s273 + $0x38] sm:$0xff]
      %v4304 = vld [vmem:[%s273 + $0x40] sm:$0xff]
      %v4305 = vld [vmem:[%s273 + $0x48] sm:$0xff]
      %v4306 = vld [vmem:[%s273 + $0x50] sm:$0xff]
      %v4307 = vld [vmem:[%s273 + $0x58] sm:$0xff]
      %v4308 = vld [vmem:[%s273 + $0x60] sm:$0xff]
      %v4309 = vld [vmem:[%s273 + $0x68] sm:$0xff]
      %v4310 = vld [vmem:[%s273 + $0x70] sm:$0xff]
      %v4311 = vld [vmem:[%s273 + $0x78] sm:$0xff]
      %v4312 = vld [vmem:[%s273 + $0x80] sm:$0xff]
      %v4313 = vld [vmem:[%s273 + $0x88] sm:$0xff]
      %v4314 = vld [vmem:[%s273 + $0x90] sm:$0xff]
      %v4315 = vld [vmem:[%s273 + $0x98] sm:$0xff]
      %v4316 = vld [vmem:[%s273 + $0xa0] sm:$0xff]
      %v4317 = vld [vmem:[%s273 + $0xa8] sm:$0xff]
      %v4318 = vld [vmem:[%s273 + $0xb0] sm:$0xff]
      %v4319 = vld [vmem:[%s273 + $0xb8] sm:$0xff]
      %v4320 = vld [vmem:[%s273 + $0xc0] sm:$0xff]
      %v4321 = vld [vmem:[%s273 + $0xc8] sm:$0xff]
      %v4322 = vld [vmem:[%s273 + $0xd0] sm:$0xff]
      %v4323 = vld [vmem:[%s273 + $0xd8] sm:$0xff]
      %v4324 = vld [vmem:[%s273 + $0xe0] sm:$0xff]
      %v4325 = vld [vmem:[%s273 + $0xe8] sm:$0xff]
      %v4326 = vld [vmem:[%s273 + $0xf0] sm:$0xff]
      %v4327 = vld [vmem:[%s273 + $0xf8] sm:$0xff]
      %v4328 = vadd.f32 %v4170, %v4296
      %v4329 = vadd.f32 %v4173, %v4297
      %v4330 = vadd.f32 %v4178, %v4298
      %v4331 = vadd.f32 %v4181, %v4299
      %v4332 = vadd.f32 %v4186, %v4300
      %v4333 = vadd.f32 %v4189, %v4301
      %v4334 = vadd.f32 %v4194, %v4302
      %v4335 = vadd.f32 %v4197, %v4303
      %v4336 = vadd.f32 %v4202, %v4304
      %v4337 = vadd.f32 %v4205, %v4305
      %v4338 = vadd.f32 %v4210, %v4306
      %v4339 = vadd.f32 %v4213, %v4307
      %v4340 = vadd.f32 %v4218, %v4308
      %v4341 = vadd.f32 %v4221, %v4309
      %v4342 = vadd.f32 %v4226, %v4310
      %v4343 = vadd.f32 %v4229, %v4311
      %v4344 = vadd.f32 %v4234, %v4312
      %v4345 = vadd.f32 %v4237, %v4313
      %v4346 = vadd.f32 %v4242, %v4314
      %v4347 = vadd.f32 %v4245, %v4315
      %v4348 = vadd.f32 %v4250, %v4316
      %v4349 = vadd.f32 %v4253, %v4317
      %v4350 = vadd.f32 %v4258, %v4318
      %v4351 = vadd.f32 %v4261, %v4319
      %v4352 = vadd.f32 %v4266, %v4320
      %v4353 = vadd.f32 %v4269, %v4321
      %v4354 = vadd.f32 %v4274, %v4322
      %v4355 = vadd.f32 %v4277, %v4323
      %v4356 = vadd.f32 %v4282, %v4324
      %v4357 = vadd.f32 %v4285, %v4325
      %v4358 = vadd.f32 %v4290, %v4326
      %v4359 = vadd.f32 %v4293, %v4327
      %v4360 = vmax.f32 %v4328, 0.0
      %v4361 = vmax.f32 %v4329, 0.0
      %v4362 = vmax.f32 %v4330, 0.0
      %v4363 = vmax.f32 %v4331, 0.0
      %v4364 = vmax.f32 %v4332, 0.0
      %v4365 = vmax.f32 %v4333, 0.0
      %v4366 = vmax.f32 %v4334, 0.0
      %v4367 = vmax.f32 %v4335, 0.0
      %v4368 = vmax.f32 %v4336, 0.0
      %v4369 = vmax.f32 %v4337, 0.0
      %v4370 = vmax.f32 %v4338, 0.0
      %v4371 = vmax.f32 %v4339, 0.0
      %v4372 = vmax.f32 %v4340, 0.0
      %v4373 = vmax.f32 %v4341, 0.0
      %v4374 = vmax.f32 %v4342, 0.0
      %v4375 = vmax.f32 %v4343, 0.0
      %v4376 = vmax.f32 %v4344, 0.0
      %v4377 = vmax.f32 %v4345, 0.0
      %v4378 = vmax.f32 %v4346, 0.0
      %v4379 = vmax.f32 %v4347, 0.0
      %v4380 = vmax.f32 %v4348, 0.0
      %v4381 = vmax.f32 %v4349, 0.0
      %v4382 = vmax.f32 %v4350, 0.0
      %v4383 = vmax.f32 %v4351, 0.0
      %v4384 = vmax.f32 %v4352, 0.0
      %v4385 = vmax.f32 %v4353, 0.0
      %v4386 = vmax.f32 %v4354, 0.0
      %v4387 = vmax.f32 %v4355, 0.0
      %v4388 = vmax.f32 %v4356, 0.0
      %v4389 = vmax.f32 %v4357, 0.0
      %v4390 = vmax.f32 %v4358, 0.0
      %v4391 = vmax.f32 %v4359, 0.0
      %4392 = vst [vmem:[%s278] sm:$0xff] %v4360
      %4393 = vst [vmem:[%s278 + $0x8] sm:$0xff] %v4361
      %4394 = vst [vmem:[%s278 + $0x10] sm:$0xff] %v4362
      %4395 = vst [vmem:[%s278 + $0x18] sm:$0xff] %v4363
      %4396 = vst [vmem:[%s278 + $0x20] sm:$0xff] %v4364
      %4397 = vst [vmem:[%s278 + $0x28] sm:$0xff] %v4365
      %4398 = vst [vmem:[%s278 + $0x30] sm:$0xff] %v4366
      %4399 = vst [vmem:[%s278 + $0x38] sm:$0xff] %v4367
      %4400 = vst [vmem:[%s278 + $0x40] sm:$0xff] %v4368
      %4401 = vst [vmem:[%s278 + $0x48] sm:$0xff] %v4369
      %4402 = vst [vmem:[%s278 + $0x50] sm:$0xff] %v4370
      %4403 = vst [vmem:[%s278 + $0x58] sm:$0xff] %v4371
      %4404 = vst [vmem:[%s278 + $0x60] sm:$0xff] %v4372
      %4405 = vst [vmem:[%s278 + $0x68] sm:$0xff] %v4373
      %4406 = vst [vmem:[%s278 + $0x70] sm:$0xff] %v4374
      %4407 = vst [vmem:[%s278 + $0x78] sm:$0xff] %v4375
      %4408 = vst [vmem:[%s278 + $0x80] sm:$0xff] %v4376
      %4409 = vst [vmem:[%s278 + $0x88] sm:$0xff] %v4377
      %4410 = vst [vmem:[%s278 + $0x90] sm:$0xff] %v4378
      %4411 = vst [vmem:[%s278 + $0x98] sm:$0xff] %v4379
      %4412 = vst [vmem:[%s278 + $0xa0] sm:$0xff] %v4380
      %4413 = vst [vmem:[%s278 + $0xa8] sm:$0xff] %v4381
      %4414 = vst [vmem:[%s278 + $0xb0] sm:$0xff] %v4382
      %4415 = vst [vmem:[%s278 + $0xb8] sm:$0xff] %v4383
      %4416 = vst [vmem:[%s278 + $0xc0] sm:$0xff] %v4384
      %4417 = vst [vmem:[%s278 + $0xc8] sm:$0xff] %v4385
      %4418 = vst [vmem:[%s278 + $0xd0] sm:$0xff] %v4386
      %4419 = vst [vmem:[%s278 + $0xd8] sm:$0xff] %v4387
      %4420 = vst [vmem:[%s278 + $0xe0] sm:$0xff] %v4388
      %4421 = vst [vmem:[%s278 + $0xe8] sm:$0xff] %v4389
      %4422 = vst [vmem:[%s278 + $0xf0] sm:$0xff] %v4390
      %4423 = vst [vmem:[%s278 + $0xf8] sm:$0xff] %v4391
      %p4424 = scmp.lt.s32.totalorder %s18, 1
      %s4425 = scalar_select %p4424, %s18, 1
      %s4426 = smul.addr %s4425, 32
      %s4427 = smul.addr %s4426, 8
      %s4428 = scalar_lea.vmem %s7, %s4427
      // Predicated region
      $region49: #{bottleneck_forward.1} parent=47 // pred_check
        %p4429 = pneg %p188
      $region50: #{bottleneck_forward.1} parent=47 // pred_check_branch
        %4431 = sbr.rel (%p4429) target = $region52
      $region51: #{bottleneck_forward.1} parent=47 // pred_region
        _
      $region52: #{bottleneck_forward.1} parent=47 // pred_fallthru
        _
    $region48: #{bottleneck_forward.1} parent=5 // pred_fallthru
      _
    %p4432 = scmp.le.s32.totalorder 2, %s13
    // Predicated region
    $region53: #{bottleneck_forward.1} parent=5 // pred_check
      %p4433 = pneg %p4432
    $region54: #{bottleneck_forward.1} parent=5 // pred_check_branch
      %4435 = sbr.rel (%p4433) target = $region56
    $region55: #{bottleneck_forward.1} parent=5 // pred_region
      %s4436 = ssub.s32 %s13, 2
      // Predicated region
      $region57: #{bottleneck_forward.1} parent=55 // pred_check
        %p4437 = pneg %p194
      $region58: #{bottleneck_forward.1} parent=55 // pred_check_branch
        %4439 = sbr.rel (%p4437) target = $region60
      $region59: #{bottleneck_forward.1} parent=55 // pred_region
        %p4440 = scmp.lt.s32.totalorder %s19, 1
        %s4441 = scalar_select %p4440, %s19, 1
        %s4442 = smul.addr %s4441, 32
        %s4443 = smul.addr %s4442, 8
        %s4444 = scalar_lea.vmem %s7, %s4443
      $region60: #{bottleneck_forward.1} parent=55 // pred_fallthru
        _
    $region56: #{bottleneck_forward.1} parent=5 // pred_fallthru
      _
  $region6: #{bottleneck_forward.1} parent=0 // loop_footer
    %s17 = sadd.s32 1, %s13
  $region7: #{bottleneck_forward.1} parent=0 // loop_footer_branch
    %12 = sbr.rel target = $region3
  $region8: #{bottleneck_forward.1} parent=0 // loop_exit
    _

</llo_original>
